<compile_context>
chip_gen: v7x
topology: tpu7x:2x2x1
jax: 0.10.0
libtpu: 0.0.40
codegen_flags: <defaults>
</compile_context>

<pallas_src>
import functools

import numpy as np
import jax
import jax.numpy as jnp
from jax.experimental import pallas as pl
from jax.experimental.pallas import tpu as pltpu

CH_ALIGN = 8   # channels padded to a multiple of this (NOT 128 — see review)


def _round_up(x, m):
    return (x + m - 1) // m * m


def _vmem_limit_bytes():
    """3/4 of physical VMEM, capped: ~96 MiB on v5e/v6e, ~48 MiB on v7x."""
    try:
        cap = pltpu.get_tpu_info().vmem_capacity_bytes
    except Exception:
        cap = 128 * 1024 * 1024
    return max(32 * 1024 * 1024, min(3 * cap // 4, 96 * 1024 * 1024))


# ----------------------------------------------------------------------------
# Pallas kernel: implicit-GEMM conv + folded-BN shift
#                (+ fused 1x1 projection shortcut OR identity residual + ReLU)
# ----------------------------------------------------------------------------
def _conv_bn_kernel(ph_ref, w_ref, shift_ref, *rest, ksize, stride, th, wo,
                    relu, shortcut):
    """One (batch, output-row-tile) grid step.

    ph_ref    : (P, Hq, Wq, Ci)   phase-decomposed padded input (bf16, resident)
    w_ref     : (ks, ks, Ci, Co)  BN-scale-folded weights   (bf16, resident)
    shift_ref : (1, Co)           folded BN shift + conv bias (f32)
    shortcut == "conv": sc_ref (1,th,wo,Cs) bf16, ws_ref (Cs,Co) bf16,
                        ssh_ref (1,Co) f32   -- fused 1x1 stride-2 projection
    shortcut == "add" : res_ref (1,th,wo,Co)                -- identity residual
    o_ref     : (1, th, wo, Co)
    """
    if shortcut == "conv":
        sc_ref, ws_ref, ssh_ref, o_ref = rest
    elif shortcut == "add":
        res_ref, o_ref = rest
    else:
        (o_ref,) = rest

    ci = ph_ref.shape[-1]
    co = o_ref.shape[-1]
    m = th * wo
    r0 = pl.program_id(1) * th            # first output row of this tile

    # Implicit-GEMM conv: one small (M, Ci)@(Ci, Co) bf16 MXU matmul per tap,
    # accumulated in f32 as a single dependent chain (v7x MRB in-place
    # accumulate; with Ci padded only to 8 this does fewer total MACs than a
    # K-padded-to-128 single GEMM and needs no unaligned lane concat).
    acc = jnp.zeros((m, co), jnp.float32)
    for kh in range(ksize):               # static, fully unrolled taps
        for kw in range(ksize):
            p = (kh % stride) * stride + (kw % stride)
            a = ph_ref[p, pl.ds(r0 + kh // stride, th),
                       pl.ds(kw // stride, wo), :]          # (th, wo, Ci) bf16
            acc = acc + jnp.dot(a.reshape(m, ci), w_ref[kh, kw],
                                preferred_element_type=jnp.float32)

    z = acc + shift_ref[...]              # f32 epilogue (folded BN shift)
    if shortcut == "conv":
        # Fused 1x1 stride-2 projection shortcut (+ its folded BN shift).
        sc = sc_ref[...].reshape(m, sc_ref.shape[-1])
        z = z + jnp.dot(sc, ws_ref[...], preferred_element_type=jnp.float32)
        z = z + ssh_ref[...]
    elif shortcut == "add":
        z = z + res_ref[...].reshape(m, co).astype(jnp.float32)
    if relu:
        z = jnp.maximum(z, 0.0)
    o_ref[...] = z.reshape(1, th, wo, co).astype(o_ref.dtype)


def conv2d_bn(x, w, shift, *, ksize, stride, padding, relu, residual=None,
              shortcut=None, out_dtype=jnp.float32, m_target=256,
              true_cin=None, true_cout=None, sc_true_cin=None):
    """Conv(ksize, stride, padding) + folded BN, optionally fused with either
    an identity residual add or a 1x1 stride-2 projection shortcut, + ReLU.

    x        : (N, H, W, Ci)  NHWC bf16 (channels padded to CH_ALIGN)
    w        : (ks, ks, Ci, Co) bf16, BN scale folded in
    shift    : (1, Co) f32
    residual : optional (N, Ho, Wo, Co) identity-shortcut tensor (fused add)
    shortcut : optional (sc_in, ws, s_shift) for the fused 1x1 stride-2 conv
    """
    assert residual is None or shortcut is None
    N, H, W, ci = x.shape
    co = w.shape[-1]
    s = stride
    ho = (H + 2 * padding - ksize) // s + 1
    wo = (W + 2 * padding - ksize) // s + 1
    off = (ksize - 1) // s                     # max tap offset inside a phase

    # Output-row tiling: target M = th*wo ~ m_target per MXU pass; rebalance
    # so non-divisible heights cost at most (ntiles - 1) padded rows instead
    # of degrading to th = 1.
    th = max(1, min(ho, m_target // max(wo, 1)))
    ntiles = pl.cdiv(ho, th)
    th = pl.cdiv(ho, ntiles)
    ho_pad = ntiles * th

    # Spatial zero-pad, then space-to-phase repack (traffic-neutral — each
    # input element appears exactly once, unlike im2col's 9x blowup).
    hp = _round_up(max(H + 2 * padding, (ho_pad + off) * s), s)
    wp = _round_up(max(W + 2 * padding, (wo + off) * s), s)
    xp = jnp.pad(x, ((0, 0), (padding, hp - H - padding),
                     (padding, wp - W - padding), (0, 0)))
    hq, wq = hp // s, wp // s
    P = s * s
    if s == 1:
        ph = xp                         # P == 1: repack is the identity
        # TODO(synk): handle the halo in-kernel (masked edge taps) to also
        #             drop this zero-pad pass for the stride-1 conv.
    else:
        ph = xp.reshape(N, hq, s, wq, s, ci)
        ph = jnp.transpose(ph, (0, 2, 4, 1, 3, 5)).reshape(N * P, hq, wq, ci)

    def pad_rows(t):
        if t.shape[1] == ho_pad:
            return t
        return jnp.pad(t, ((0, 0), (0, ho_pad - t.shape[1]), (0, 0), (0, 0)))

    in_specs = [
        # Whole phase image per batch element; constant block index along the
        # row-tile axis -> stays resident in VMEM (no per-tile re-DMA).  With
        # channels padded only to 8 the resident image is 16x smaller than the
        # previous 128-padded version, so it fits comfortably even in v7x's
        # 64 MiB VMEM.
        # TODO(synk): for very large images on v7x, cap residency via
        #             pipeline_mode=pl.Buffered(1) or per-kh halo tiling.
        pl.BlockSpec((P, hq, wq, ci), lambda n, r: (n, 0, 0, 0)),
        pl.BlockSpec((ksize, ksize, ci, co), lambda n, r: (0, 0, 0, 0)),
        pl.BlockSpec((1, co), lambda n, r: (0, 0)),
    ]
    inputs = [ph, w, shift]
    mode = "none"
    if shortcut is not None:
        sc_in, ws, ssh = shortcut
        assert sc_in.shape[:3] == (N, ho, wo) and ws.shape == (sc_in.shape[-1], co)
        cs = sc_in.shape[-1]
        sc_in = pad_rows(sc_in)
        in_specs += [pl.BlockSpec((1, th, wo, cs), lambda n, r: (n, r, 0, 0)),
                     pl.BlockSpec((cs, co), lambda n, r: (0, 0)),
                     pl.BlockSpec((1, co), lambda n, r: (0, 0))]
        inputs += [sc_in, ws, ssh]
        mode = "conv"
    elif residual is not None:
        assert residual.shape == (N, ho, wo, co)
        residual = pad_rows(residual)
        in_specs.append(pl.BlockSpec((1, th, wo, co), lambda n, r: (n, r, 0, 0)))
        inputs.append(residual)
        mode = "add"

    kernel = functools.partial(_conv_bn_kernel, ksize=ksize, stride=s, th=th,
                               wo=wo, relu=relu, shortcut=mode)

    # Scheduler hint from TRUE (unpadded) channel counts and real byte sizes.
    tci = true_cin if true_cin is not None else ci
    tco = true_cout if true_cout is not None else co
    flops = 2 * N * ho * wo * ksize * ksize * tci * tco
    if mode == "conv":
        tsc = sc_true_cin if sc_true_cin is not None else inputs[3].shape[-1]
        flops += 2 * N * ho * wo * tsc * tco
    bytes_accessed = N * ho_pad * wo * co * np.dtype(out_dtype).itemsize
    bytes_accessed += sum(int(a.size) * np.dtype(a.dtype).itemsize for a in inputs)

    out = pl.pallas_call(
        kernel,
        out_shape=jax.ShapeDtypeStruct((N, ho_pad, wo, co), out_dtype),
        grid=(N, ntiles),
        in_specs=in_specs,
        out_specs=pl.BlockSpec((1, th, wo, co), lambda n, r: (n, r, 0, 0)),
        compiler_params=pltpu.CompilerParams(
            dimension_semantics=("parallel", "parallel"),
            vmem_limit_bytes=_vmem_limit_bytes()),
        cost_estimate=pl.CostEstimate(flops=int(flops), transcendentals=0,
                                      bytes_accessed=int(bytes_accessed)),
    )(*inputs)
    return out[:, :ho] if ho_pad != ho else out


# ----------------------------------------------------------------------------
# Parameter folding (plain JAX, one-time cost outside the hot loop)
# ----------------------------------------------------------------------------
def fold_conv_bn(w, b, gamma, beta, mean, var, ci_p, co_p, eps=1e-5):
    """Fold conv bias + eval-mode BN into weights (bf16) and a shift (f32)."""
    scale = gamma / jnp.sqrt(var + eps)                  # f32
    wf = (w * scale).astype(jnp.float32)                 # fold scale in f32
    shift = ((b - mean) * scale + beta).astype(jnp.float32)
    kh, kw, ci, co = w.shape
    wf = jnp.pad(wf, ((0, 0), (0, 0), (0, ci_p - ci), (0, co_p - co)))
    shift = jnp.pad(shift, (0, co_p - co)).reshape(1, co_p)
    return wf.astype(jnp.bfloat16), shift                # cast AFTER folding


def residual_block_forward(params, x_nchw, stride, shortcut_flag):
    x = jnp.transpose(x_nchw, (0, 2, 3, 1)).astype(jnp.float32)     # NHWC
    N, H, W, cin = x.shape
    cout = params["w1"].shape[-1]
    ci_p = _round_up(cin, CH_ALIGN)      # small channel padding (no 128 blowup)
    co_p = _round_up(cout, CH_ALIGN)

    xb = jnp.pad(x, ((0, 0), (0, 0), (0, 0), (0, ci_p - cin))).astype(jnp.bfloat16)

    # conv1 (3x3, stride[0], pad 1) + BN1 + ReLU -> bf16 intermediate
    w1, sh1 = fold_conv_bn(params["w1"], params["b1"], params["bn1_g"],
                           params["bn1_b"], params["bn1_m"], params["bn1_v"],
                           ci_p, co_p)
    y1 = conv2d_bn(xb, w1, sh1, ksize=3, stride=stride[0], padding=1,
                   relu=True, out_dtype=jnp.bfloat16,
                   true_cin=cin, true_cout=cout)

    # Shortcut path — fused into the conv2 kernel (no separate pallas_call,
    # no HBM round trip of the residual tensor).
    residual = None
    shortcut = None
    if shortcut_flag:
        # PyTorch module hardcodes a 1x1 stride-2 conv (+BN) for the shortcut:
        # out[i, j] = Ws . x[2i, 2j].
        ws, shs = fold_conv_bn(params["ws"], params["bs"], params["bns_g"],
                               params["bns_b"], params["bns_m"],
                               params["bns_v"], ci_p, co_p)
        # TODO(synk): reuse a phase plane of conv1's stride-2 repack instead
        #             of this (tiny) XLA-side strided subsample.
        sc_in = xb[:, ::2, ::2, :]
        shortcut = (sc_in, ws.reshape(ci_p, co_p), shs)
    else:
        assert cin == cout and tuple(stride) == (1, 1), \
            "identity shortcut requires Cin == Cout and stride (1, 1)"
        residual = xb

    # Dropout(p=0.3): identity in eval mode.
    # conv2 (3x3, stride[1], pad 1) + BN2, FUSED with shortcut + final ReLU.
    w2, sh2 = fold_conv_bn(params["w2"], params["b2"], params["bn2_g"],
                           params["bn2_b"], params["bn2_m"], params["bn2_v"],
                           co_p, co_p)
    out = conv2d_bn(y1, w2, sh2, ksize=3, stride=stride[1], padding=1,
                    relu=True, residual=residual, shortcut=shortcut,
                    out_dtype=jnp.float32, true_cin=cout, true_cout=cout,
                    sc_true_cin=cin)

    out = out[..., :cout]                                # drop channel padding
    return jnp.transpose(out, (0, 3, 1, 2))              # back to NCHW


# ----------------------------------------------------------------------------
# Deterministic parameter init (same shapes as the PyTorch module)
# ----------------------------------------------------------------------------
def init_params(key, cin, cout, shortcut_flag):
    ks = jax.random.split(key, 20)

    def u(k, shape, bound=1.0):
        return jax.random.uniform(k, shape, jnp.float32, -bound, bound)

    p = {}
    b = 1.0 / float(3 * 3 * cin) ** 0.5
    p["w1"], p["b1"] = u(ks[0], (3, 3, cin, cout), b), u(ks[1], (cout,), b)
    b = 1.0 / float(3 * 3 * cout) ** 0.5
    p["w2"], p["b2"] = u(ks[2], (3, 3, cout, cout), b), u(ks[3], (cout,), b)

    p["bn1_g"] = 1.0 + 0.1 * u(ks[4], (cout,))
    p["bn1_b"] = 0.1 * u(ks[5], (cout,))
    p["bn1_m"] = 0.1 * u(ks[6], (cout,))
    p["bn1_v"] = 1.0 + 0.1 * jnp.abs(u(ks[7], (cout,)))

    p["bn2_g"] = 1.0 + 0.1 * u(ks[8], (cout,))
    p["bn2_b"] = 0.1 * u(ks[9], (cout,))
    p["bn2_m"] = 0.1 * u(ks[10], (cout,))
    p["bn2_v"] = 1.0 + 0.1 * jnp.abs(u(ks[11], (cout,)))

    if shortcut_flag:
        assert cout == 2 * cin          # module only works in this regime
        b = 1.0 / float(1 * 1 * cin) ** 0.5
        p["ws"], p["bs"] = u(ks[12], (1, 1, cin, cout), b), u(ks[13], (cout,), b)
        p["bns_g"] = 1.0 + 0.1 * u(ks[14], (cout,))
        p["bns_b"] = 0.1 * u(ks[15], (cout,))
        p["bns_m"] = 0.1 * u(ks[16], (cout,))
        p["bns_v"] = 1.0 + 0.1 * jnp.abs(u(ks[17], (cout,)))
    return p


# ----------------------------------------------------------------------------
# Pure-JAX f32 reference (for correctness check)
# ----------------------------------------------------------------------------
def ref_forward(params, x, stride, shortcut_flag, eps=1e-5):
    def conv(x, w, b, s, pad):
        y = jax.lax.conv_general_dilated(
            x, w, (s, s), [(pad, pad), (pad, pad)],
            dimension_numbers=("NCHW", "HWIO", "NCHW"))
        return y + b.reshape(1, -1, 1, 1)

    def bn(x, g, bt, m, v):
        g, bt, m, v = (a.reshape(1, -1, 1, 1) for a in (g, bt, m, v))
        return g * (x - m) / jnp.sqrt(v + eps) + bt

    y = conv(x, params["w1"], params["b1"], stride[0], 1)
    y = jnp.maximum(bn(y, params["bn1_g"], params["bn1_b"],
                       params["bn1_m"], params["bn1_v"]), 0.0)
    y = conv(y, params["w2"], params["b2"], stride[1], 1)
    y = bn(y, params["bn2_g"], params["bn2_b"], params["bn2_m"], params["bn2_v"])
    if shortcut_flag:
        s = conv(x, params["ws"], params["bs"], 2, 0)
        s = bn(s, params["bns_g"], params["bns_b"], params["bns_m"], params["bns_v"])
    else:
        s = x
    return jnp.maximum(y + s, 0.0)


if __name__ == "__main__":
    key = jax.random.PRNGKey(0)
    kx, kp = jax.random.split(key)

    N, Cin, H, W = 2, 4, 16, 16
    Cout = 8                     # = 2 * Cin (required by the shortcut BN)
    stride = (2, 1)
    shortcut_flag = True

    x = jax.random.normal(kx, (N, Cin, H, W), jnp.float32)
    params = init_params(kp, Cin, Cout, shortcut_flag)

    fwd = jax.jit(lambda p, xx: residual_block_forward(p, xx, stride,
                                                       shortcut_flag))
    out = jax.block_until_ready(fwd(params, x))

    assert out.shape == (N, Cout, H // 2, W // 2), out.shape
    ref = ref_forward(params, x, stride, shortcut_flag)
    max_err = float(jnp.max(jnp.abs(out - ref)))
    # bf16 operands with f32 accumulation: allow bf16-level error vs f32 ref.
    assert jnp.allclose(out, ref, atol=5e-2, rtol=5e-2), max_err

    print("KERNEL_OK")
</pallas_src>

<mosaic_0001>
module attributes {stable_mosaic.version = 11 : i64} {
  func.func @_conv_bn_kernel(%arg0: i32, %arg1: i32, %arg2: memref<4x9x9x8xbf16, #tpu.memory_space<vmem>>, %arg3: memref<3x3x8x8xbf16, #tpu.memory_space<vmem>>, %arg4: memref<1x8xf32, #tpu.memory_space<vmem>>, %arg5: memref<1x8x8x8xbf16, #tpu.memory_space<vmem>>) attributes {dimension_semantics = [#tpu.dimension_semantics<parallel>, #tpu.dimension_semantics<parallel>], iteration_bounds = array<i64: 2, 1>, scalar_prefetch = 0 : i64, scratch_operands = 0 : i64, tpu.core_type = #tpu.core_type<tc>, window_params = [{transform_indices = @transform_0, window_bounds = array<i64: 4, 9, 9, 8>}, {pipeline_mode = #tpu.pipeline_mode<synchronous>, transform_indices = @transform_1, window_bounds = array<i64: 3, 3, 8, 8>}, {pipeline_mode = #tpu.pipeline_mode<synchronous>, transform_indices = @transform_2, window_bounds = array<i64: 1, 8>}, {transform_indices = @transform_3, window_bounds = array<i64: 1, 8, 8, 8>}]} {
    %c8_i32 = arith.constant 8 : i32
    %0 = arith.muli %arg1, %c8_i32 : i32
    %cst = arith.constant 0.000000e+00 : f32
    %1 = vector.broadcast %cst : f32 to vector<64x8xf32>
    %c0_i32 = arith.constant 0 : i32
    %2 = arith.addi %0, %c0_i32 : i32
    %c0 = arith.constant 0 : index
    %3 = arith.index_cast %2 : i32 to index
    %c0_0 = arith.constant 0 : index
    %c0_1 = arith.constant 0 : index
    %4 = vector.load %arg2[%c0, %3, %c0_0, %c0_1] : memref<4x9x9x8xbf16, #tpu.memory_space<vmem>>, vector<1x8x8x8xbf16>
    %5 = vector.shape_cast %4 : vector<1x8x8x8xbf16> to vector<8x8x8xbf16>
    %6 = vector.shape_cast %5 : vector<8x8x8xbf16> to vector<64x8xbf16>
    %c0_2 = arith.constant 0 : index
    %c0_3 = arith.constant 0 : index
    %c0_4 = arith.constant 0 : index
    %c0_5 = arith.constant 0 : index
    %7 = vector.load %arg3[%c0_2, %c0_3, %c0_4, %c0_5] : memref<3x3x8x8xbf16, #tpu.memory_space<vmem>>, vector<1x1x8x8xbf16>
    %8 = vector.shape_cast %7 : vector<1x1x8x8xbf16> to vector<8x8xbf16>
    %cst_6 = arith.constant dense<0.000000e+00> : vector<64x8xf32>
    %9 = tpu.matmul %6, %8, %cst_6 {dimension_numbers = #tpu.dot_dimension_numbers<[1], [0], [0], [1], [0, 0, 1, 1], [], []>} : vector<64x8xbf16>, vector<8x8xbf16>, vector<64x8xf32> -> vector<64x8xf32>
    %10 = arith.addf %1, %9 : vector<64x8xf32>
    %c0_i32_7 = arith.constant 0 : i32
    %11 = arith.addi %0, %c0_i32_7 : i32
    %c1 = arith.constant 1 : index
    %12 = arith.index_cast %11 : i32 to index
    %c0_8 = arith.constant 0 : index
    %c0_9 = arith.constant 0 : index
    %13 = vector.load %arg2[%c1, %12, %c0_8, %c0_9] : memref<4x9x9x8xbf16, #tpu.memory_space<vmem>>, vector<1x8x8x8xbf16>
    %14 = vector.shape_cast %13 : vector<1x8x8x8xbf16> to vector<8x8x8xbf16>
    %15 = vector.shape_cast %14 : vector<8x8x8xbf16> to vector<64x8xbf16>
    %c0_10 = arith.constant 0 : index
    %c1_11 = arith.constant 1 : index
    %c0_12 = arith.constant 0 : index
    %c0_13 = arith.constant 0 : index
    %16 = vector.load %arg3[%c0_10, %c1_11, %c0_12, %c0_13] : memref<3x3x8x8xbf16, #tpu.memory_space<vmem>>, vector<1x1x8x8xbf16>
    %17 = vector.shape_cast %16 : vector<1x1x8x8xbf16> to vector<8x8xbf16>
    %cst_14 = arith.constant dense<0.000000e+00> : vector<64x8xf32>
    %18 = tpu.matmul %15, %17, %cst_14 {dimension_numbers = #tpu.dot_dimension_numbers<[1], [0], [0], [1], [0, 0, 1, 1], [], []>} : vector<64x8xbf16>, vector<8x8xbf16>, vector<64x8xf32> -> vector<64x8xf32>
    %19 = arith.addf %10, %18 : vector<64x8xf32>
    %c0_i32_15 = arith.constant 0 : i32
    %20 = arith.addi %0, %c0_i32_15 : i32
    %c0_16 = arith.constant 0 : index
    %21 = arith.index_cast %20 : i32 to index
    %c1_17 = arith.constant 1 : index
    %c0_18 = arith.constant 0 : index
    %22 = vector.load %arg2[%c0_16, %21, %c1_17, %c0_18] : memref<4x9x9x8xbf16, #tpu.memory_space<vmem>>, vector<1x8x8x8xbf16>
    %23 = vector.shape_cast %22 : vector<1x8x8x8xbf16> to vector<8x8x8xbf16>
    %24 = vector.shape_cast %23 : vector<8x8x8xbf16> to vector<64x8xbf16>
    %c0_19 = arith.constant 0 : index
    %c2 = arith.constant 2 : index
    %c0_20 = arith.constant 0 : index
    %c0_21 = arith.constant 0 : index
    %25 = vector.load %arg3[%c0_19, %c2, %c0_20, %c0_21] : memref<3x3x8x8xbf16, #tpu.memory_space<vmem>>, vector<1x1x8x8xbf16>
    %26 = vector.shape_cast %25 : vector<1x1x8x8xbf16> to vector<8x8xbf16>
    %cst_22 = arith.constant dense<0.000000e+00> : vector<64x8xf32>
    %27 = tpu.matmul %24, %26, %cst_22 {dimension_numbers = #tpu.dot_dimension_numbers<[1], [0], [0], [1], [0, 0, 1, 1], [], []>} : vector<64x8xbf16>, vector<8x8xbf16>, vector<64x8xf32> -> vector<64x8xf32>
    %28 = arith.addf %19, %27 : vector<64x8xf32>
    %c0_i32_23 = arith.constant 0 : i32
    %29 = arith.addi %0, %c0_i32_23 : i32
    %c2_24 = arith.constant 2 : index
    %30 = arith.index_cast %29 : i32 to index
    %c0_25 = arith.constant 0 : index
    %c0_26 = arith.constant 0 : index
    %31 = vector.load %arg2[%c2_24, %30, %c0_25, %c0_26] : memref<4x9x9x8xbf16, #tpu.memory_space<vmem>>, vector<1x8x8x8xbf16>
    %32 = vector.shape_cast %31 : vector<1x8x8x8xbf16> to vector<8x8x8xbf16>
    %33 = vector.shape_cast %32 : vector<8x8x8xbf16> to vector<64x8xbf16>
    %c1_27 = arith.constant 1 : index
    %c0_28 = arith.constant 0 : index
    %c0_29 = arith.constant 0 : index
    %c0_30 = arith.constant 0 : index
    %34 = vector.load %arg3[%c1_27, %c0_28, %c0_29, %c0_30] : memref<3x3x8x8xbf16, #tpu.memory_space<vmem>>, vector<1x1x8x8xbf16>
    %35 = vector.shape_cast %34 : vector<1x1x8x8xbf16> to vector<8x8xbf16>
    %cst_31 = arith.constant dense<0.000000e+00> : vector<64x8xf32>
    %36 = tpu.matmul %33, %35, %cst_31 {dimension_numbers = #tpu.dot_dimension_numbers<[1], [0], [0], [1], [0, 0, 1, 1], [], []>} : vector<64x8xbf16>, vector<8x8xbf16>, vector<64x8xf32> -> vector<64x8xf32>
    %37 = arith.addf %28, %36 : vector<64x8xf32>
    %c0_i32_32 = arith.constant 0 : i32
    %38 = arith.addi %0, %c0_i32_32 : i32
    %c3 = arith.constant 3 : index
    %39 = arith.index_cast %38 : i32 to index
    %c0_33 = arith.constant 0 : index
    %c0_34 = arith.constant 0 : index
    %40 = vector.load %arg2[%c3, %39, %c0_33, %c0_34] : memref<4x9x9x8xbf16, #tpu.memory_space<vmem>>, vector<1x8x8x8xbf16>
    %41 = vector.shape_cast %40 : vector<1x8x8x8xbf16> to vector<8x8x8xbf16>
    %42 = vector.shape_cast %41 : vector<8x8x8xbf16> to vector<64x8xbf16>
    %c1_35 = arith.constant 1 : index
    %c1_36 = arith.constant 1 : index
    %c0_37 = arith.constant 0 : index
    %c0_38 = arith.constant 0 : index
    %43 = vector.load %arg3[%c1_35, %c1_36, %c0_37, %c0_38] : memref<3x3x8x8xbf16, #tpu.memory_space<vmem>>, vector<1x1x8x8xbf16>
    %44 = vector.shape_cast %43 : vector<1x1x8x8xbf16> to vector<8x8xbf16>
    %cst_39 = arith.constant dense<0.000000e+00> : vector<64x8xf32>
    %45 = tpu.matmul %42, %44, %cst_39 {dimension_numbers = #tpu.dot_dimension_numbers<[1], [0], [0], [1], [0, 0, 1, 1], [], []>} : vector<64x8xbf16>, vector<8x8xbf16>, vector<64x8xf32> -> vector<64x8xf32>
    %46 = arith.addf %37, %45 : vector<64x8xf32>
    %c0_i32_40 = arith.constant 0 : i32
    %47 = arith.addi %0, %c0_i32_40 : i32
    %c2_41 = arith.constant 2 : index
    %48 = arith.index_cast %47 : i32 to index
    %c1_42 = arith.constant 1 : index
    %c0_43 = arith.constant 0 : index
    %49 = vector.load %arg2[%c2_41, %48, %c1_42, %c0_43] : memref<4x9x9x8xbf16, #tpu.memory_space<vmem>>, vector<1x8x8x8xbf16>
    %50 = vector.shape_cast %49 : vector<1x8x8x8xbf16> to vector<8x8x8xbf16>
    %51 = vector.shape_cast %50 : vector<8x8x8xbf16> to vector<64x8xbf16>
    %c1_44 = arith.constant 1 : index
    %c2_45 = arith.constant 2 : index
    %c0_46 = arith.constant 0 : index
    %c0_47 = arith.constant 0 : index
    %52 = vector.load %arg3[%c1_44, %c2_45, %c0_46, %c0_47] : memref<3x3x8x8xbf16, #tpu.memory_space<vmem>>, vector<1x1x8x8xbf16>
    %53 = vector.shape_cast %52 : vector<1x1x8x8xbf16> to vector<8x8xbf16>
    %cst_48 = arith.constant dense<0.000000e+00> : vector<64x8xf32>
    %54 = tpu.matmul %51, %53, %cst_48 {dimension_numbers = #tpu.dot_dimension_numbers<[1], [0], [0], [1], [0, 0, 1, 1], [], []>} : vector<64x8xbf16>, vector<8x8xbf16>, vector<64x8xf32> -> vector<64x8xf32>
    %55 = arith.addf %46, %54 : vector<64x8xf32>
    %c1_i32 = arith.constant 1 : i32
    %56 = arith.addi %0, %c1_i32 : i32
    %c0_49 = arith.constant 0 : index
    %57 = arith.index_cast %56 : i32 to index
    %c0_50 = arith.constant 0 : index
    %c0_51 = arith.constant 0 : index
    %58 = vector.load %arg2[%c0_49, %57, %c0_50, %c0_51] : memref<4x9x9x8xbf16, #tpu.memory_space<vmem>>, vector<1x8x8x8xbf16>
    %59 = vector.shape_cast %58 : vector<1x8x8x8xbf16> to vector<8x8x8xbf16>
    %60 = vector.shape_cast %59 : vector<8x8x8xbf16> to vector<64x8xbf16>
    %c2_52 = arith.constant 2 : index
    %c0_53 = arith.constant 0 : index
    %c0_54 = arith.constant 0 : index
    %c0_55 = arith.constant 0 : index
    %61 = vector.load %arg3[%c2_52, %c0_53, %c0_54, %c0_55] : memref<3x3x8x8xbf16, #tpu.memory_space<vmem>>, vector<1x1x8x8xbf16>
    %62 = vector.shape_cast %61 : vector<1x1x8x8xbf16> to vector<8x8xbf16>
    %cst_56 = arith.constant dense<0.000000e+00> : vector<64x8xf32>
    %63 = tpu.matmul %60, %62, %cst_56 {dimension_numbers = #tpu.dot_dimension_numbers<[1], [0], [0], [1], [0, 0, 1, 1], [], []>} : vector<64x8xbf16>, vector<8x8xbf16>, vector<64x8xf32> -> vector<64x8xf32>
    %64 = arith.addf %55, %63 : vector<64x8xf32>
    %c1_i32_57 = arith.constant 1 : i32
    %65 = arith.addi %0, %c1_i32_57 : i32
    %c1_58 = arith.constant 1 : index
    %66 = arith.index_cast %65 : i32 to index
    %c0_59 = arith.constant 0 : index
    %c0_60 = arith.constant 0 : index
    %67 = vector.load %arg2[%c1_58, %66, %c0_59, %c0_60] : memref<4x9x9x8xbf16, #tpu.memory_space<vmem>>, vector<1x8x8x8xbf16>
    %68 = vector.shape_cast %67 : vector<1x8x8x8xbf16> to vector<8x8x8xbf16>
    %69 = vector.shape_cast %68 : vector<8x8x8xbf16> to vector<64x8xbf16>
    %c2_61 = arith.constant 2 : index
    %c1_62 = arith.constant 1 : index
    %c0_63 = arith.constant 0 : index
    %c0_64 = arith.constant 0 : index
    %70 = vector.load %arg3[%c2_61, %c1_62, %c0_63, %c0_64] : memref<3x3x8x8xbf16, #tpu.memory_space<vmem>>, vector<1x1x8x8xbf16>
    %71 = vector.shape_cast %70 : vector<1x1x8x8xbf16> to vector<8x8xbf16>
    %cst_65 = arith.constant dense<0.000000e+00> : vector<64x8xf32>
    %72 = tpu.matmul %69, %71, %cst_65 {dimension_numbers = #tpu.dot_dimension_numbers<[1], [0], [0], [1], [0, 0, 1, 1], [], []>} : vector<64x8xbf16>, vector<8x8xbf16>, vector<64x8xf32> -> vector<64x8xf32>
    %73 = arith.addf %64, %72 : vector<64x8xf32>
    %c1_i32_66 = arith.constant 1 : i32
    %74 = arith.addi %0, %c1_i32_66 : i32
    %c0_67 = arith.constant 0 : index
    %75 = arith.index_cast %74 : i32 to index
    %c1_68 = arith.constant 1 : index
    %c0_69 = arith.constant 0 : index
    %76 = vector.load %arg2[%c0_67, %75, %c1_68, %c0_69] : memref<4x9x9x8xbf16, #tpu.memory_space<vmem>>, vector<1x8x8x8xbf16>
    %77 = vector.shape_cast %76 : vector<1x8x8x8xbf16> to vector<8x8x8xbf16>
    %78 = vector.shape_cast %77 : vector<8x8x8xbf16> to vector<64x8xbf16>
    %c2_70 = arith.constant 2 : index
    %c2_71 = arith.constant 2 : index
    %c0_72 = arith.constant 0 : index
    %c0_73 = arith.constant 0 : index
    %79 = vector.load %arg3[%c2_70, %c2_71, %c0_72, %c0_73] : memref<3x3x8x8xbf16, #tpu.memory_space<vmem>>, vector<1x1x8x8xbf16>
    %80 = vector.shape_cast %79 : vector<1x1x8x8xbf16> to vector<8x8xbf16>
    %cst_74 = arith.constant dense<0.000000e+00> : vector<64x8xf32>
    %81 = tpu.matmul %78, %80, %cst_74 {dimension_numbers = #tpu.dot_dimension_numbers<[1], [0], [0], [1], [0, 0, 1, 1], [], []>} : vector<64x8xbf16>, vector<8x8xbf16>, vector<64x8xf32> -> vector<64x8xf32>
    %82 = arith.addf %73, %81 : vector<64x8xf32>
    %c0_75 = arith.constant 0 : index
    %c0_76 = arith.constant 0 : index
    %83 = vector.load %arg4[%c0_75, %c0_76] : memref<1x8xf32, #tpu.memory_space<vmem>>, vector<1x8xf32>
    %84 = vector.broadcast %83 : vector<1x8xf32> to vector<64x8xf32>
    %85 = arith.addf %82, %84 : vector<64x8xf32>
    %cst_77 = arith.constant 0.000000e+00 : f32
    %86 = vector.broadcast %cst_77 : f32 to vector<64x8xf32>
    %87 = arith.maximumf %85, %86 : vector<64x8xf32>
    %88 = vector.shape_cast %87 : vector<64x8xf32> to vector<1x8x8x8xf32>
    %89 = arith.truncf %88 : vector<1x8x8x8xf32> to vector<1x8x8x8xbf16>
    %c0_78 = arith.constant 0 : index
    %c0_79 = arith.constant 0 : index
    %c0_80 = arith.constant 0 : index
    %c0_81 = arith.constant 0 : index
    %90 = vector.load %arg5[%c0_78, %c0_79, %c0_80, %c0_81] : memref<1x8x8x8xbf16, #tpu.memory_space<vmem>>, vector<1x8x8x8xbf16>
    tpu.vector_store %arg5[%c0_78, %c0_79, %c0_80, %c0_81], %89 {strides = array<i32>} : memref<1x8x8x8xbf16, #tpu.memory_space<vmem>>, vector<1x8x8x8xbf16>,
    return
  }
  func.func @transform_0(%arg0: i32, %arg1: i32) -> (i32, i32, i32, i32) {
    %c0_i32 = arith.constant 0 : i32
    %c0_i32_0 = arith.constant 0 : i32
    %c0_i32_1 = arith.constant 0 : i32
    %c0_i32_2 = arith.constant 0 : i32
    return %arg0, %c0_i32, %c0_i32_0, %c0_i32_1 : i32, i32, i32, i32
  }
  func.func @transform_1(%arg0: i32, %arg1: i32) -> (i32, i32, i32, i32) {
    %c0_i32 = arith.constant 0 : i32
    %c0_i32_0 = arith.constant 0 : i32
    %c0_i32_1 = arith.constant 0 : i32
    %c0_i32_2 = arith.constant 0 : i32
    %c0_i32_3 = arith.constant 0 : i32
    return %c0_i32, %c0_i32_0, %c0_i32_1, %c0_i32_2 : i32, i32, i32, i32
  }
  func.func @transform_2(%arg0: i32, %arg1: i32) -> (i32, i32) {
    %c0_i32 = arith.constant 0 : i32
    %c0_i32_0 = arith.constant 0 : i32
    %c0_i32_1 = arith.constant 0 : i32
    return %c0_i32, %c0_i32_0 : i32, i32
  }
  func.func @transform_3(%arg0: i32, %arg1: i32) -> (i32, i32, i32, i32) {
    %c0_i32 = arith.constant 0 : i32
    %c0_i32_0 = arith.constant 0 : i32
    %c0_i32_1 = arith.constant 0 : i32
    return %arg0, %arg1, %c0_i32, %c0_i32_0 : i32, i32, i32, i32
  }
}

module attributes {stable_mosaic.version = 11 : i64} {
  func.func @_conv_bn_kernel(%arg0: i32, %arg1: i32, %arg2: memref<1x10x10x8xbf16, #tpu.memory_space<vmem>>, %arg3: memref<3x3x8x8xbf16, #tpu.memory_space<vmem>>, %arg4: memref<1x8xf32, #tpu.memory_space<vmem>>, %arg5: memref<1x8x8x8xbf16, #tpu.memory_space<vmem>>, %arg6: memref<8x8xbf16, #tpu.memory_space<vmem>>, %arg7: memref<1x8xf32, #tpu.memory_space<vmem>>, %arg8: memref<1x8x8x8xf32, #tpu.memory_space<vmem>>) attributes {dimension_semantics = [#tpu.dimension_semantics<parallel>, #tpu.dimension_semantics<parallel>], iteration_bounds = array<i64: 2, 1>, scalar_prefetch = 0 : i64, scratch_operands = 0 : i64, tpu.core_type = #tpu.core_type<tc>, window_params = [{transform_indices = @transform_0, window_bounds = array<i64: 1, 10, 10, 8>}, {pipeline_mode = #tpu.pipeline_mode<synchronous>, transform_indices = @transform_1, window_bounds = array<i64: 3, 3, 8, 8>}, {pipeline_mode = #tpu.pipeline_mode<synchronous>, transform_indices = @transform_2, window_bounds = array<i64: 1, 8>}, {transform_indices = @transform_3, window_bounds = array<i64: 1, 8, 8, 8>}, {pipeline_mode = #tpu.pipeline_mode<synchronous>, transform_indices = @transform_4, window_bounds = array<i64: 8, 8>}, {pipeline_mode = #tpu.pipeline_mode<synchronous>, transform_indices = @transform_5, window_bounds = array<i64: 1, 8>}, {transform_indices = @transform_6, window_bounds = array<i64: 1, 8, 8, 8>}]} {
    %c8_i32 = arith.constant 8 : i32
    %0 = arith.muli %arg1, %c8_i32 : i32
    %cst = arith.constant 0.000000e+00 : f32
    %1 = vector.broadcast %cst : f32 to vector<64x8xf32>
    %c0_i32 = arith.constant 0 : i32
    %2 = arith.addi %0, %c0_i32 : i32
    %c0 = arith.constant 0 : index
    %3 = arith.index_cast %2 : i32 to index
    %c0_0 = arith.constant 0 : index
    %c0_1 = arith.constant 0 : index
    %4 = vector.load %arg2[%c0, %3, %c0_0, %c0_1] : memref<1x10x10x8xbf16, #tpu.memory_space<vmem>>, vector<1x8x8x8xbf16>
    %5 = vector.shape_cast %4 : vector<1x8x8x8xbf16> to vector<8x8x8xbf16>
    %6 = vector.shape_cast %5 : vector<8x8x8xbf16> to vector<64x8xbf16>
    %c0_2 = arith.constant 0 : index
    %c0_3 = arith.constant 0 : index
    %c0_4 = arith.constant 0 : index
    %c0_5 = arith.constant 0 : index
    %7 = vector.load %arg3[%c0_2, %c0_3, %c0_4, %c0_5] : memref<3x3x8x8xbf16, #tpu.memory_space<vmem>>, vector<1x1x8x8xbf16>
    %8 = vector.shape_cast %7 : vector<1x1x8x8xbf16> to vector<8x8xbf16>
    %cst_6 = arith.constant dense<0.000000e+00> : vector<64x8xf32>
    %9 = tpu.matmul %6, %8, %cst_6 {dimension_numbers = #tpu.dot_dimension_numbers<[1], [0], [0], [1], [0, 0, 1, 1], [], []>} : vector<64x8xbf16>, vector<8x8xbf16>, vector<64x8xf32> -> vector<64x8xf32>
    %10 = arith.addf %1, %9 : vector<64x8xf32>
    %c0_i32_7 = arith.constant 0 : i32
    %11 = arith.addi %0, %c0_i32_7 : i32
    %c0_8 = arith.constant 0 : index
    %12 = arith.index_cast %11 : i32 to index
    %c1 = arith.constant 1 : index
    %c0_9 = arith.constant 0 : index
    %13 = vector.load %arg2[%c0_8, %12, %c1, %c0_9] : memref<1x10x10x8xbf16, #tpu.memory_space<vmem>>, vector<1x8x8x8xbf16>
    %14 = vector.shape_cast %13 : vector<1x8x8x8xbf16> to vector<8x8x8xbf16>
    %15 = vector.shape_cast %14 : vector<8x8x8xbf16> to vector<64x8xbf16>
    %c0_10 = arith.constant 0 : index
    %c1_11 = arith.constant 1 : index
    %c0_12 = arith.constant 0 : index
    %c0_13 = arith.constant 0 : index
    %16 = vector.load %arg3[%c0_10, %c1_11, %c0_12, %c0_13] : memref<3x3x8x8xbf16, #tpu.memory_space<vmem>>, vector<1x1x8x8xbf16>
    %17 = vector.shape_cast %16 : vector<1x1x8x8xbf16> to vector<8x8xbf16>
    %cst_14 = arith.constant dense<0.000000e+00> : vector<64x8xf32>
    %18 = tpu.matmul %15, %17, %cst_14 {dimension_numbers = #tpu.dot_dimension_numbers<[1], [0], [0], [1], [0, 0, 1, 1], [], []>} : vector<64x8xbf16>, vector<8x8xbf16>, vector<64x8xf32> -> vector<64x8xf32>
    %19 = arith.addf %10, %18 : vector<64x8xf32>
    %c0_i32_15 = arith.constant 0 : i32
    %20 = arith.addi %0, %c0_i32_15 : i32
    %c0_16 = arith.constant 0 : index
    %21 = arith.index_cast %20 : i32 to index
    %c2 = arith.constant 2 : index
    %c0_17 = arith.constant 0 : index
    %22 = vector.load %arg2[%c0_16, %21, %c2, %c0_17] : memref<1x10x10x8xbf16, #tpu.memory_space<vmem>>, vector<1x8x8x8xbf16>
    %23 = vector.shape_cast %22 : vector<1x8x8x8xbf16> to vector<8x8x8xbf16>
    %24 = vector.shape_cast %23 : vector<8x8x8xbf16> to vector<64x8xbf16>
    %c0_18 = arith.constant 0 : index
    %c2_19 = arith.constant 2 : index
    %c0_20 = arith.constant 0 : index
    %c0_21 = arith.constant 0 : index
    %25 = vector.load %arg3[%c0_18, %c2_19, %c0_20, %c0_21] : memref<3x3x8x8xbf16, #tpu.memory_space<vmem>>, vector<1x1x8x8xbf16>
    %26 = vector.shape_cast %25 : vector<1x1x8x8xbf16> to vector<8x8xbf16>
    %cst_22 = arith.constant dense<0.000000e+00> : vector<64x8xf32>
    %27 = tpu.matmul %24, %26, %cst_22 {dimension_numbers = #tpu.dot_dimension_numbers<[1], [0], [0], [1], [0, 0, 1, 1], [], []>} : vector<64x8xbf16>, vector<8x8xbf16>, vector<64x8xf32> -> vector<64x8xf32>
    %28 = arith.addf %19, %27 : vector<64x8xf32>
    %c1_i32 = arith.constant 1 : i32
    %29 = arith.addi %0, %c1_i32 : i32
    %c0_23 = arith.constant 0 : index
    %30 = arith.index_cast %29 : i32 to index
    %c0_24 = arith.constant 0 : index
    %c0_25 = arith.constant 0 : index
    %31 = vector.load %arg2[%c0_23, %30, %c0_24, %c0_25] : memref<1x10x10x8xbf16, #tpu.memory_space<vmem>>, vector<1x8x8x8xbf16>
    %32 = vector.shape_cast %31 : vector<1x8x8x8xbf16> to vector<8x8x8xbf16>
    %33 = vector.shape_cast %32 : vector<8x8x8xbf16> to vector<64x8xbf16>
    %c1_26 = arith.constant 1 : index
    %c0_27 = arith.constant 0 : index
    %c0_28 = arith.constant 0 : index
    %c0_29 = arith.constant 0 : index
    %34 = vector.load %arg3[%c1_26, %c0_27, %c0_28, %c0_29] : memref<3x3x8x8xbf16, #tpu.memory_space<vmem>>, vector<1x1x8x8xbf16>
    %35 = vector.shape_cast %34 : vector<1x1x8x8xbf16> to vector<8x8xbf16>
    %cst_30 = arith.constant dense<0.000000e+00> : vector<64x8xf32>
    %36 = tpu.matmul %33, %35, %cst_30 {dimension_numbers = #tpu.dot_dimension_numbers<[1], [0], [0], [1], [0, 0, 1, 1], [], []>} : vector<64x8xbf16>, vector<8x8xbf16>, vector<64x8xf32> -> vector<64x8xf32>
    %37 = arith.addf %28, %36 : vector<64x8xf32>
    %c1_i32_31 = arith.constant 1 : i32
    %38 = arith.addi %0, %c1_i32_31 : i32
    %c0_32 = arith.constant 0 : index
    %39 = arith.index_cast %38 : i32 to index
    %c1_33 = arith.constant 1 : index
    %c0_34 = arith.constant 0 : index
    %40 = vector.load %arg2[%c0_32, %39, %c1_33, %c0_34] : memref<1x10x10x8xbf16, #tpu.memory_space<vmem>>, vector<1x8x8x8xbf16>
    %41 = vector.shape_cast %40 : vector<1x8x8x8xbf16> to vector<8x8x8xbf16>
    %42 = vector.shape_cast %41 : vector<8x8x8xbf16> to vector<64x8xbf16>
    %c1_35 = arith.constant 1 : index
    %c1_36 = arith.constant 1 : index
    %c0_37 = arith.constant 0 : index
    %c0_38 = arith.constant 0 : index
    %43 = vector.load %arg3[%c1_35, %c1_36, %c0_37, %c0_38] : memref<3x3x8x8xbf16, #tpu.memory_space<vmem>>, vector<1x1x8x8xbf16>
    %44 = vector.shape_cast %43 : vector<1x1x8x8xbf16> to vector<8x8xbf16>
    %cst_39 = arith.constant dense<0.000000e+00> : vector<64x8xf32>
    %45 = tpu.matmul %42, %44, %cst_39 {dimension_numbers = #tpu.dot_dimension_numbers<[1], [0], [0], [1], [0, 0, 1, 1], [], []>} : vector<64x8xbf16>, vector<8x8xbf16>, vector<64x8xf32> -> vector<64x8xf32>
    %46 = arith.addf %37, %45 : vector<64x8xf32>
    %c1_i32_40 = arith.constant 1 : i32
    %47 = arith.addi %0, %c1_i32_40 : i32
    %c0_41 = arith.constant 0 : index
    %48 = arith.index_cast %47 : i32 to index
    %c2_42 = arith.constant 2 : index
    %c0_43 = arith.constant 0 : index
    %49 = vector.load %arg2[%c0_41, %48, %c2_42, %c0_43] : memref<1x10x10x8xbf16, #tpu.memory_space<vmem>>, vector<1x8x8x8xbf16>
    %50 = vector.shape_cast %49 : vector<1x8x8x8xbf16> to vector<8x8x8xbf16>
    %51 = vector.shape_cast %50 : vector<8x8x8xbf16> to vector<64x8xbf16>
    %c1_44 = arith.constant 1 : index
    %c2_45 = arith.constant 2 : index
    %c0_46 = arith.constant 0 : index
    %c0_47 = arith.constant 0 : index
    %52 = vector.load %arg3[%c1_44, %c2_45, %c0_46, %c0_47] : memref<3x3x8x8xbf16, #tpu.memory_space<vmem>>, vector<1x1x8x8xbf16>
    %53 = vector.shape_cast %52 : vector<1x1x8x8xbf16> to vector<8x8xbf16>
    %cst_48 = arith.constant dense<0.000000e+00> : vector<64x8xf32>
    %54 = tpu.matmul %51, %53, %cst_48 {dimension_numbers = #tpu.dot_dimension_numbers<[1], [0], [0], [1], [0, 0, 1, 1], [], []>} : vector<64x8xbf16>, vector<8x8xbf16>, vector<64x8xf32> -> vector<64x8xf32>
    %55 = arith.addf %46, %54 : vector<64x8xf32>
    %c2_i32 = arith.constant 2 : i32
    %56 = arith.addi %0, %c2_i32 : i32
    %c0_49 = arith.constant 0 : index
    %57 = arith.index_cast %56 : i32 to index
    %c0_50 = arith.constant 0 : index
    %c0_51 = arith.constant 0 : index
    %58 = vector.load %arg2[%c0_49, %57, %c0_50, %c0_51] : memref<1x10x10x8xbf16, #tpu.memory_space<vmem>>, vector<1x8x8x8xbf16>
    %59 = vector.shape_cast %58 : vector<1x8x8x8xbf16> to vector<8x8x8xbf16>
    %60 = vector.shape_cast %59 : vector<8x8x8xbf16> to vector<64x8xbf16>
    %c2_52 = arith.constant 2 : index
    %c0_53 = arith.constant 0 : index
    %c0_54 = arith.constant 0 : index
    %c0_55 = arith.constant 0 : index
    %61 = vector.load %arg3[%c2_52, %c0_53, %c0_54, %c0_55] : memref<3x3x8x8xbf16, #tpu.memory_space<vmem>>, vector<1x1x8x8xbf16>
    %62 = vector.shape_cast %61 : vector<1x1x8x8xbf16> to vector<8x8xbf16>
    %cst_56 = arith.constant dense<0.000000e+00> : vector<64x8xf32>
    %63 = tpu.matmul %60, %62, %cst_56 {dimension_numbers = #tpu.dot_dimension_numbers<[1], [0], [0], [1], [0, 0, 1, 1], [], []>} : vector<64x8xbf16>, vector<8x8xbf16>, vector<64x8xf32> -> vector<64x8xf32>
    %64 = arith.addf %55, %63 : vector<64x8xf32>
    %c2_i32_57 = arith.constant 2 : i32
    %65 = arith.addi %0, %c2_i32_57 : i32
    %c0_58 = arith.constant 0 : index
    %66 = arith.index_cast %65 : i32 to index
    %c1_59 = arith.constant 1 : index
    %c0_60 = arith.constant 0 : index
    %67 = vector.load %arg2[%c0_58, %66, %c1_59, %c0_60] : memref<1x10x10x8xbf16, #tpu.memory_space<vmem>>, vector<1x8x8x8xbf16>
    %68 = vector.shape_cast %67 : vector<1x8x8x8xbf16> to vector<8x8x8xbf16>
    %69 = vector.shape_cast %68 : vector<8x8x8xbf16> to vector<64x8xbf16>
    %c2_61 = arith.constant 2 : index
    %c1_62 = arith.constant 1 : index
    %c0_63 = arith.constant 0 : index
    %c0_64 = arith.constant 0 : index
    %70 = vector.load %arg3[%c2_61, %c1_62, %c0_63, %c0_64] : memref<3x3x8x8xbf16, #tpu.memory_space<vmem>>, vector<1x1x8x8xbf16>
    %71 = vector.shape_cast %70 : vector<1x1x8x8xbf16> to vector<8x8xbf16>
    %cst_65 = arith.constant dense<0.000000e+00> : vector<64x8xf32>
    %72 = tpu.matmul %69, %71, %cst_65 {dimension_numbers = #tpu.dot_dimension_numbers<[1], [0], [0], [1], [0, 0, 1, 1], [], []>} : vector<64x8xbf16>, vector<8x8xbf16>, vector<64x8xf32> -> vector<64x8xf32>
    %73 = arith.addf %64, %72 : vector<64x8xf32>
    %c2_i32_66 = arith.constant 2 : i32
    %74 = arith.addi %0, %c2_i32_66 : i32
    %c0_67 = arith.constant 0 : index
    %75 = arith.index_cast %74 : i32 to index
    %c2_68 = arith.constant 2 : index
    %c0_69 = arith.constant 0 : index
    %76 = vector.load %arg2[%c0_67, %75, %c2_68, %c0_69] : memref<1x10x10x8xbf16, #tpu.memory_space<vmem>>, vector<1x8x8x8xbf16>
    %77 = vector.shape_cast %76 : vector<1x8x8x8xbf16> to vector<8x8x8xbf16>
    %78 = vector.shape_cast %77 : vector<8x8x8xbf16> to vector<64x8xbf16>
    %c2_70 = arith.constant 2 : index
    %c2_71 = arith.constant 2 : index
    %c0_72 = arith.constant 0 : index
    %c0_73 = arith.constant 0 : index
    %79 = vector.load %arg3[%c2_70, %c2_71, %c0_72, %c0_73] : memref<3x3x8x8xbf16, #tpu.memory_space<vmem>>, vector<1x1x8x8xbf16>
    %80 = vector.shape_cast %79 : vector<1x1x8x8xbf16> to vector<8x8xbf16>
    %cst_74 = arith.constant dense<0.000000e+00> : vector<64x8xf32>
    %81 = tpu.matmul %78, %80, %cst_74 {dimension_numbers = #tpu.dot_dimension_numbers<[1], [0], [0], [1], [0, 0, 1, 1], [], []>} : vector<64x8xbf16>, vector<8x8xbf16>, vector<64x8xf32> -> vector<64x8xf32>
    %82 = arith.addf %73, %81 : vector<64x8xf32>
    %c0_75 = arith.constant 0 : index
    %c0_76 = arith.constant 0 : index
    %83 = vector.load %arg4[%c0_75, %c0_76] : memref<1x8xf32, #tpu.memory_space<vmem>>, vector<1x8xf32>
    %84 = vector.broadcast %83 : vector<1x8xf32> to vector<64x8xf32>
    %85 = arith.addf %82, %84 : vector<64x8xf32>
    %c0_77 = arith.constant 0 : index
    %c0_78 = arith.constant 0 : index
    %c0_79 = arith.constant 0 : index
    %c0_80 = arith.constant 0 : index
    %86 = vector.load %arg5[%c0_77, %c0_78, %c0_79, %c0_80] : memref<1x8x8x8xbf16, #tpu.memory_space<vmem>>, vector<1x8x8x8xbf16>
    %87 = vector.shape_cast %86 : vector<1x8x8x8xbf16> to vector<64x8xbf16>
    %c0_81 = arith.constant 0 : index
    %c0_82 = arith.constant 0 : index
    %88 = vector.load %arg6[%c0_81, %c0_82] : memref<8x8xbf16, #tpu.memory_space<vmem>>, vector<8x8xbf16>
    %cst_83 = arith.constant dense<0.000000e+00> : vector<64x8xf32>
    %89 = tpu.matmul %87, %88, %cst_83 {dimension_numbers = #tpu.dot_dimension_numbers<[1], [0], [0], [1], [0, 0, 1, 1], [], []>} : vector<64x8xbf16>, vector<8x8xbf16>, vector<64x8xf32> -> vector<64x8xf32>
    %90 = arith.addf %85, %89 : vector<64x8xf32>
    %c0_84 = arith.constant 0 : index
    %c0_85 = arith.constant 0 : index
    %91 = vector.load %arg7[%c0_84, %c0_85] : memref<1x8xf32, #tpu.memory_space<vmem>>, vector<1x8xf32>
    %92 = vector.broadcast %91 : vector<1x8xf32> to vector<64x8xf32>
    %93 = arith.addf %90, %92 : vector<64x8xf32>
    %cst_86 = arith.constant 0.000000e+00 : f32
    %94 = vector.broadcast %cst_86 : f32 to vector<64x8xf32>
    %95 = arith.maximumf %93, %94 : vector<64x8xf32>
    %96 = vector.shape_cast %95 : vector<64x8xf32> to vector<1x8x8x8xf32>
    %c0_87 = arith.constant 0 : index
    %c0_88 = arith.constant 0 : index
    %c0_89 = arith.constant 0 : index
    %c0_90 = arith.constant 0 : index
    %97 = vector.load %arg8[%c0_87, %c0_88, %c0_89, %c0_90] : memref<1x8x8x8xf32, #tpu.memory_space<vmem>>, vector<1x8x8x8xf32>
    tpu.vector_store %arg8[%c0_87, %c0_88, %c0_89, %c0_90], %96 {strides = array<i32>} : memref<1x8x8x8xf32, #tpu.memory_space<vmem>>, vector<1x8x8x8xf32>,
    return
  }
  func.func @transform_0(%arg0: i32, %arg1: i32) -> (i32, i32, i32, i32) {
    %c0_i32 = arith.constant 0 : i32
    %c0_i32_0 = arith.constant 0 : i32
    %c0_i32_1 = arith.constant 0 : i32
    %c0_i32_2 = arith.constant 0 : i32
    return %arg0, %c0_i32, %c0_i32_0, %c0_i32_1 : i32, i32, i32, i32
  }
  func.func @transform_1(%arg0: i32, %arg1: i32) -> (i32, i32, i32, i32) {
    %c0_i32 = arith.constant 0 : i32
    %c0_i32_0 = arith.constant 0 : i32
    %c0_i32_1 = arith.constant 0 : i32
    %c0_i32_2 = arith.constant 0 : i32
    %c0_i32_3 = arith.constant 0 : i32
    return %c0_i32, %c0_i32_0, %c0_i32_1, %c0_i32_2 : i32, i32, i32, i32
  }
  func.func @transform_2(%arg0: i32, %arg1: i32) -> (i32, i32) {
    %c0_i32 = arith.constant 0 : i32
    %c0_i32_0 = arith.constant 0 : i32
    %c0_i32_1 = arith.constant 0 : i32
    return %c0_i32, %c0_i32_0 : i32, i32
  }
  func.func @transform_3(%arg0: i32, %arg1: i32) -> (i32, i32, i32, i32) {
    %c0_i32 = arith.constant 0 : i32
    %c0_i32_0 = arith.constant 0 : i32
    %c0_i32_1 = arith.constant 0 : i32
    return %arg0, %arg1, %c0_i32, %c0_i32_0 : i32, i32, i32, i32
  }
  func.func @transform_4(%arg0: i32, %arg1: i32) -> (i32, i32) {
    %c0_i32 = arith.constant 0 : i32
    %c0_i32_0 = arith.constant 0 : i32
    %c0_i32_1 = arith.constant 0 : i32
    return %c0_i32, %c0_i32_0 : i32, i32
  }
  func.func @transform_5(%arg0: i32, %arg1: i32) -> (i32, i32) {
    %c0_i32 = arith.constant 0 : i32
    %c0_i32_0 = arith.constant 0 : i32
    %c0_i32_1 = arith.constant 0 : i32
    return %c0_i32, %c0_i32_0 : i32, i32
  }
  func.func @transform_6(%arg0: i32, %arg1: i32) -> (i32, i32, i32, i32) {
    %c0_i32 = arith.constant 0 : i32
    %c0_i32_0 = arith.constant 0 : i32
    %c0_i32_1 = arith.constant 0 : i32
    return %arg0, %arg1, %c0_i32, %c0_i32_0 : i32, i32, i32, i32
  }
}

</mosaic_0001>

<llo_original>
// kernel: _lambda_.2
$region0: #{_lambda_.2}
  #allocation0 [shape = 'u32[]', space=smem, size = 0x4, offset = 0x4, fixed_abs, tag = 'smem constant byte address 0x4 - core index']
  #allocation1 [shape = 'u32[144,128]{1,0:T(1,128)}', space=vmem, size = 0x12000, scoped, tag = 'internal scratch']
  %s0 = inlined_call_operand.hbm [shape: bf16[8,9,9,8], index: 0, kind: input, shape index: {}]
  %s1 = inlined_call_operand.hbm [shape: bf16[3,3,8,8], index: 1, kind: input, shape index: {}]
  %s2 = inlined_call_operand.hbm [shape: f32[1,8], index: 2, kind: input, shape index: {}]
  %s3 = inlined_call_operand.hbm [shape: bf16[2,8,8,8], index: 3, kind: output, shape index: {}]
  %s4 = sld [smem:[#allocation0]]
  $region57: #{_lambda_.2} parent=0
    _
  %s6 = ssub.s32 1, %s4
  %s7 = scalar_select 0, %s6, %s4
  $region1: #{_lambda_.2} parent=0
    #allocation2 [shape = 'u8[294912]{0}', space=vmem, size = 0x48000, scoped, tag = 'input window, operand 0']
    #allocation3 [shape = 's32[2]{0}', space=sflag, size = 0x8, scoped, tag = 'scoped memory for _lambda_.2']
    #allocation4 [shape = 's32[2]{0}', space=sflag, size = 0x8, scoped, tag = 'scoped memory for _lambda_.2']
    #allocation5 [shape = 'u8[18432]{0}', space=vmem, size = 0x4800, scoped, tag = 'input window, operand 1, single buffered']
    #allocation6 [shape = 's32[1]{0}', space=sflag, size = 0x4, scoped, tag = 'scoped memory for _lambda_.2']
    #allocation7 [shape = 'u8[512]{0}', space=vmem, size = 0x400, scoped, tag = 'input window, operand 2, single buffered']
    #allocation8 [shape = 'u8[32768]{0}', space=vmem, size = 0x8000, scoped, tag = 'output window, operand 0']
    %8 = vsyncpa [#allocation3], 0
    %s9 = scalar_lea.sflag [#allocation3], 1
    %10 = vsyncpa %s9, 0
    %11 = vsyncpa [#allocation6], 0
    %12 = vsyncpa [#allocation4], 0
    %s13 = scalar_lea.sflag [#allocation4], 1
    %14 = vsyncpa %s13, 0
    loop: start=0, step=1, limit=4
    $region2: #{_lambda_.2} parent=1 // loop_pre_header
      _
    $region3: #{_lambda_.2} parent=1 // loop_header
      %s16 = sphi 0, %s20
      %p17 = scmp.ge.s32.totalorder %s16, 4
      %s23 = sphi 0, %s35
      %s24 = sphi 0, %s31
      %s25 = sphi 0, %s23
      %s26 = sphi 0, %s24
      %s27 = sphi 0, %s25
      %s28 = sphi 0, %s26
      %s38 = sphi 0, %s40
      %s41 = sphi 0, %s38
      %s42 = sphi 0, %s41
      %s58 = sphi 0, %s42
      %s62 = sphi 0, %s62
      %s64 = sphi 0, %s62
      %s65 = sphi 0, %s64
      %s79 = sphi 0, %s65
      %s83 = sphi 0, %s83
      %s85 = sphi 0, %s83
      %s86 = sphi 0, %s85
      %s100 = sphi 0, %s86
      %s108 = sphi 0, %s110
      %s111 = sphi 0, %s108
      %s112 = sphi 0, %s111
      %s128 = sphi 0, %s112
    $region4: #{_lambda_.2} parent=1 // loop_header_branch
      %19 = sbr.rel (%p17) target = $region8
    $region5: #{_lambda_.2} parent=1 // loop_body
      %s21 = ssub.s32 %s16, 1
      %s22 = ssub.s32 %s16, 2
      %s29 = sadd.s32 1, %s24
      %p30 = scmp.ge.s32.totalorder %s29, 1
      %s31 = scalar_select %p30, 0, %s29
      %s32 = sadd.s32 1, %s23
      %s33 = scalar_select %p30, %s32, %s23
      %p34 = scmp.ge.s32.totalorder %s33, 2
      %s35 = scalar_select %p34, 0, %s33
      %s36 = ssub.s32 %s23, %s35
      %p37 = scmp.eq.s32.totalorder %s36, 0
      %s39 = sadd.s32 %s38, 1
      %s40 = scalar_select %p37, %s38, %s39
      %p43 = pneg %p37
      %p44 = scmp.eq.s32.totalorder %s16, 1
      %p45 = por %p43, %p44
      %p46 = scmp.ne.s32.totalorder %s38, %s41
      %p47 = scmp.eq.s32.totalorder %s16, 0
      %p48 = por %p46, %p47
      %p49 = scmp.ne.s32.totalorder %s38, %s41
      %p50 = scmp.eq.s32.totalorder %s21, 1
      %p51 = por %p49, %p50
      %p52 = scmp.ne.s32.totalorder %s41, %s42
      %p53 = scmp.eq.s32.totalorder %s21, 0
      %p54 = por %p52, %p53
      %p55 = scmp.ne.s32.totalorder %s41, %s42
      %p56 = scmp.eq.s32.totalorder %s22, 1
      %p57 = por %p55, %p56
      %p59 = scmp.ne.s32.totalorder %s42, %s58
      %p60 = scmp.eq.s32.totalorder %s22, 0
      %p61 = por %p59, %p60
      %s63 = sadd.s32 %s62, 1
      %p66 = scmp.eq.s32.totalorder %s16, 1
      %p67 = scmp.ne.s32.totalorder %s62, %s64
      %p68 = scmp.eq.s32.totalorder %s16, 0
      %p69 = por %p67, %p68
      %p70 = scmp.ne.s32.totalorder %s62, %s64
      %p71 = scmp.eq.s32.totalorder %s21, 1
      %p72 = por %p70, %p71
      %p73 = scmp.ne.s32.totalorder %s64, %s65
      %p74 = scmp.eq.s32.totalorder %s21, 0
      %p75 = por %p73, %p74
      %p76 = scmp.ne.s32.totalorder %s64, %s65
      %p77 = scmp.eq.s32.totalorder %s22, 1
      %p78 = por %p76, %p77
      %p80 = scmp.ne.s32.totalorder %s65, %s79
      %p81 = scmp.eq.s32.totalorder %s22, 0
      %p82 = por %p80, %p81
      %s84 = sadd.s32 %s83, 1
      %p87 = scmp.eq.s32.totalorder %s16, 1
      %p88 = scmp.ne.s32.totalorder %s83, %s85
      %p89 = scmp.eq.s32.totalorder %s16, 0
      %p90 = por %p88, %p89
      %p91 = scmp.ne.s32.totalorder %s83, %s85
      %p92 = scmp.eq.s32.totalorder %s21, 1
      %p93 = por %p91, %p92
      %p94 = scmp.ne.s32.totalorder %s85, %s86
      %p95 = scmp.eq.s32.totalorder %s21, 0
      %p96 = por %p94, %p95
      %p97 = scmp.ne.s32.totalorder %s85, %s86
      %p98 = scmp.eq.s32.totalorder %s22, 1
      %p99 = por %p97, %p98
      %p101 = scmp.ne.s32.totalorder %s86, %s100
      %p102 = scmp.eq.s32.totalorder %s22, 0
      %p103 = por %p101, %p102
      %s104 = ssub.s32 %s23, %s35
      %s105 = ssub.s32 %s24, %s31
      %s106 = sor.u32 %s104, %s105
      %p107 = scmp.eq.s32.totalorder %s106, 0
      %s109 = sadd.s32 %s108, 1
      %s110 = scalar_select %p107, %s108, %s109
      %p113 = pneg %p107
      %p114 = scmp.eq.s32.totalorder %s16, 1
      %p115 = por %p113, %p114
      %p116 = scmp.ne.s32.totalorder %s108, %s111
      %p117 = scmp.eq.s32.totalorder %s16, 0
      %p118 = por %p116, %p117
      %p119 = scmp.ne.s32.totalorder %s108, %s111
      %p120 = scmp.eq.s32.totalorder %s21, 1
      %p121 = por %p119, %p120
      %p122 = scmp.ne.s32.totalorder %s111, %s112
      %p123 = scmp.eq.s32.totalorder %s21, 0
      %p124 = por %p122, %p123
      %p125 = scmp.ne.s32.totalorder %s111, %s112
      %p126 = scmp.eq.s32.totalorder %s22, 1
      %p127 = por %p125, %p126
      %p129 = scmp.ne.s32.totalorder %s112, %s128
      %p130 = scmp.eq.s32.totalorder %s22, 0
      %p131 = por %p129, %p130
      %p132 = scmp.le.s32.totalorder 1, %s16
      %p133 = scmp.lt.s32.totalorder %s16, 3
      %p134 = pnand %p132, %p133
      %p135 = pneg %p134
      // Predicated region
      $region9: #{_lambda_.2} parent=5 // pred_check
        _
      $region10: #{_lambda_.2} parent=5 // pred_check_branch
        %137 = sbr.rel (%p134) target = $region12
      $region11: #{_lambda_.2} parent=5 // pred_region
        %s138 = ssub.s32 %s16, 1
        // Predicated region
        $region13: #{_lambda_.2} parent=11 // pred_check
          %p139 = pneg %p75
        $region14: #{_lambda_.2} parent=11 // pred_check_branch
          %141 = sbr.rel (%p139) target = $region16
        $region15: #{_lambda_.2} parent=11 // pred_region
          %s143 = ssub.s32 576, 576
          %144 = vsyncadd [#allocation6], %s143
          %s145 = sshll.u32 [#allocation5], 4
          %s146 = int_to_ptr.vmem [resolvable:$true] %s145
          %151 = dma.hbm_to_vmem [thread:$0]  %s1, 576, %s146, [#allocation6], 64, 64, 4
        $region16: #{_lambda_.2} parent=11 // pred_fallthru
          _
        // Predicated region
        $region17: #{_lambda_.2} parent=11 // pred_check
          %p152 = pneg %p96
        $region18: #{_lambda_.2} parent=11 // pred_check_branch
          %154 = sbr.rel (%p152) target = $region20
        $region19: #{_lambda_.2} parent=11 // pred_region
          %s156 = ssub.s32 16, 16
          %157 = vsyncadd [#allocation6], %s156
          %s159 = sshll.u32 [#allocation7], 4
          %s160 = int_to_ptr.vmem [resolvable:$true] %s159
          %162 = dma.hbm_to_vmem [thread:$0]  %s2, 16, %s160, [#allocation6]
        $region20: #{_lambda_.2} parent=11 // pred_fallthru
          _
      $region12: #{_lambda_.2} parent=5 // pred_fallthru
        _
      %p163 = scmp.lt.s32.totalorder %s16, 2
      // Predicated region
      $region21: #{_lambda_.2} parent=5 // pred_check
        %p164 = pneg %p163
      $region22: #{_lambda_.2} parent=5 // pred_check_branch
        %166 = sbr.rel (%p164) target = $region24
      $region23: #{_lambda_.2} parent=5 // pred_region
        // Predicated region
        $region25: #{_lambda_.2} parent=23 // pred_check
          %p167 = pneg %p48
        $region26: #{_lambda_.2} parent=23 // pred_check_branch
          %169 = sbr.rel (%p167) target = $region28
        $region27: #{_lambda_.2} parent=23 // pred_region
          %s170 = sand.u32 %s38, 1
          %s171 = scalar_lea.sflag [#allocation3], %s170
          %s172 = sand.u32 %s38, 1
          %s173 = smul.addr %s172, 288
          %s174 = scalar_lea.vmem [#allocation2], %s173
          %s175 = smul.u32 4, %s23
          %s177 = ssub.s32 4608, 4608
          %178 = vsyncadd %s171, %s177
          %s179 = smul.addr %s175, 18
          %s180 = smul.addr %s179, 64
          %s181 = scalar_lea.hbm %s0, %s180
          %s182 = sshll.u32 %s174, 4
          %s183 = int_to_ptr.vmem [resolvable:$true] %s182
          %188 = dma.hbm_to_vmem [thread:$0]  %s181, 4608, %s183, %s171, 64, 64, 4
        $region28: #{_lambda_.2} parent=23 // pred_fallthru
          _
      $region24: #{_lambda_.2} parent=5 // pred_fallthru
        _
      %p189 = scmp.le.s32.totalorder 1, %s16
      %p190 = scmp.lt.s32.totalorder %s16, 3
      %p191 = pnand %p189, %p190
      %p192 = pneg %p191
      // Predicated region
      $region29: #{_lambda_.2} parent=5 // pred_check
        _
      $region30: #{_lambda_.2} parent=5 // pred_check_branch
        %194 = sbr.rel (%p191) target = $region32
      $region31: #{_lambda_.2} parent=5 // pred_region
        %s195 = ssub.s32 %s16, 1
        %s196 = sand.u32 %s41, 1
        %s197 = scalar_lea.sflag [#allocation3], %s196
        %s198 = sand.u32 %s41, 1
        %s199 = smul.addr %s198, 288
        %s200 = scalar_lea.vmem [#allocation2], %s199
        // Predicated region
        $region33: #{_lambda_.2} parent=31 // pred_check
          %p201 = pneg %p54
        $region34: #{_lambda_.2} parent=31 // pred_check_branch
          %203 = sbr.rel (%p201) target = $region36
        $region35: #{_lambda_.2} parent=31 // pred_region
          %204 = dma.done %s197, 4608
        $region36: #{_lambda_.2} parent=31 // pred_fallthru
          _
        // Predicated region
        $region37: #{_lambda_.2} parent=31 // pred_check
          %p205 = pneg %p75
        $region38: #{_lambda_.2} parent=31 // pred_check_branch
          %207 = sbr.rel (%p205) target = $region40
        $region39: #{_lambda_.2} parent=31 // pred_region
          %208 = dma.done [#allocation6], 576
        $region40: #{_lambda_.2} parent=31 // pred_fallthru
          _
        // Predicated region
        $region41: #{_lambda_.2} parent=31 // pred_check
          %p209 = pneg %p96
        $region42: #{_lambda_.2} parent=31 // pred_check_branch
          %211 = sbr.rel (%p209) target = $region44
        $region43: #{_lambda_.2} parent=31 // pred_region
          %212 = dma.done [#allocation6], 16
        $region44: #{_lambda_.2} parent=31 // pred_fallthru
          _
        %s213 = sand.u32 %s41, 1
        %s214 = scalar_lea.sflag [#allocation3], %s213
        %s215 = sand.u32 %s41, 1
        %s216 = smul.addr %s215, 288
        %s217 = scalar_lea.vmem [#allocation2], %s216
        %p218 = pneg %p54
        %p219 = pneg %p51
        %p220 = pneg %p75
        %p221 = pneg %p72
        %p222 = pneg %p96
        %p223 = pneg %p93
        %p224 = pneg %p124
        %p225 = pneg %p121
        %s226 = sand.u32 %s111, 1
        %s227 = scalar_lea.sflag [#allocation4], %s226
        %s228 = sand.u32 %s111, 1
        %s229 = smul.addr %s228, 32
        %s230 = scalar_lea.vmem [#allocation8], %s229
        %s231 = smul.u32 4, %s25
        %s232 = smul.u32 8, %s26
        %s234 = smul.u32 %s26, 8
        %s235 = smul.u32 %s234, 2
        %s236 = smul.addr %s235, 4
        %s237 = scalar_lea.vmem %s200, %s236 [#allocation2]
        %v238 = vld [vmem:[%s237] sm:$0xf]
        %v239 = vld [vmem:[%s237 + $0x8] sm:$0xf]
        %v240 = vld [vmem:[%s237 + $0x10] sm:$0xf]
        %v241 = vld [vmem:[%s237 + $0x18] sm:$0xf]
        %v242 = vld [vmem:[%s237 + $0x20] sm:$0xf]
        %v243 = vld [vmem:[%s237 + $0x28] sm:$0xf]
        %v244 = vld [vmem:[%s237 + $0x30] sm:$0xf]
        %v245 = vld [vmem:[%s237 + $0x38] sm:$0xf]
        %v246 = vld [vmem:[#allocation5] sm:$0xf]
        %s247 = sadd.s32 %s235, 18
        %s248 = smul.addr %s247, 4
        %s249 = scalar_lea.vmem %s200, %s248 [#allocation2]
        %v250 = vld [vmem:[%s249] sm:$0xf]
        %v251 = vld [vmem:[%s249 + $0x8] sm:$0xf]
        %v252 = vld [vmem:[%s249 + $0x10] sm:$0xf]
        %v253 = vld [vmem:[%s249 + $0x18] sm:$0xf]
        %v254 = vld [vmem:[%s249 + $0x20] sm:$0xf]
        %v255 = vld [vmem:[%s249 + $0x28] sm:$0xf]
        %v256 = vld [vmem:[%s249 + $0x30] sm:$0xf]
        %v257 = vld [vmem:[%s249 + $0x38] sm:$0xf]
        %s258 = scalar_lea.vmem [#allocation5], 4
        %v259 = vld [vmem:[%s258] sm:$0xf]
        %v268 = vunpack.c.l.b16 %v250
        %v269 = vunpack.c.l.b16 %v251
        %v270 = vunpack.c.l.b16 %v252
        %v271 = vunpack.c.l.b16 %v253
        %v272 = vunpack.c.l.b16 %v254
        %v273 = vunpack.c.l.b16 %v255
        %v274 = vunpack.c.l.b16 %v256
        %v275 = vunpack.c.l.b16 %v257
        %v276 = vpack.c.b16 %v269, %v268
        %v277 = vpack.c.b16 %v271, %v270
        %v278 = vpack.c.b16 %v273, %v272
        %v279 = vpack.c.b16 %v275, %v274
        %vm280 = vcmask 64512
        %v282 = vsel %vm280, %v276, 0
        %v285 = vsel %vm280, %v277, 0
        %v288 = vsel %vm280, %v278, 0
        %v291 = vsel %vm280, %v279, 0
        %vm293 = vcmask 1043456
        %v295 = vsel %vm293, %v259, 0
        %297 = vmatprep.subr.bf16.mxu0 0
        %298 = vmatpush1.bf16.msra.mxu0 %v295
        %299 = vmatprep.subr.bf16.mxu0 0
        %300 = vmatpush1.bf16.msra.mxu0 0
        %301 = vmatprep.subr.bf16.mxu0 0
        %302 = vmatpush1.bf16.msra.mxu0 0
        %303 = vmatprep.subr.bf16.mxu0 0
        %304 = vmatpush1.bf16.msra.mxu0 0
        %305 = vmatprep.subr.bf16.mxu0 0
        %306 = vmatpush1.bf16.msra.mxu0 0
        %307 = vmatprep.subr.bf16.mxu0 0
        %308 = vmatpush1.bf16.msra.mxu0 0
        %309 = vmatprep.subr.bf16.mxu0 0
        %310 = vmatpush1.bf16.msra.mxu0 0
        %311 = vmatprep.subr.bf16.mxu0 0
        %312 = vmatpush1.bf16.msra.mxu0 0
        %313 = vmatprep.subr.bf16.mxu0 0
        %314 = vmatpush1.bf16.msra.mxu0 0
        %315 = vmatprep.subr.bf16.mxu0 0
        %316 = vmatpush1.bf16.msra.mxu0 0
        %317 = vmatprep.subr.bf16.mxu0 0
        %318 = vmatpush1.bf16.msra.mxu0 0
        %319 = vmatprep.subr.bf16.mxu0 0
        %320 = vmatpush1.bf16.msra.mxu0 0
        %321 = vmatprep.subr.bf16.mxu0 0
        %322 = vmatpush1.bf16.msra.mxu0 0
        %323 = vmatprep.subr.bf16.mxu0 0
        %324 = vmatpush1.bf16.msra.mxu0 0
        %325 = vmatprep.subr.bf16.mxu0 0
        %326 = vmatpush1.bf16.msra.mxu0 0
        %327 = vmatprep.subr.bf16.mxu0 0
        %328 = vmatpush1.bf16.msra.mxu0 0
        %329 = vmatprep.mubr.bf16.mxu0 0
        %330 = vmatmul.mubr.bf16.gmra.mrb[0].mxu0 %v282
        %v331 = vpop.f32.mrb[0].mxu0
        %v332 = vadd.f32 0.0, %v331
        %v333 = vpop.f32.mrb[0].mxu0
        %v334 = vpop.f32.mrb[0].mxu0
        %v335 = vadd.f32 0.0, %v334
        %v336 = vpop.f32.mrb[0].mxu0
        %337 = vmatprep.mubr.bf16.mxu0 0
        %338 = vmatmul.mubr.bf16.gmra.mrb[0].mxu0 %v285
        %v339 = vpop.f32.mrb[0].mxu0
        %v340 = vadd.f32 0.0, %v339
        %v341 = vpop.f32.mrb[0].mxu0
        %v342 = vpop.f32.mrb[0].mxu0
        %v343 = vadd.f32 0.0, %v342
        %v344 = vpop.f32.mrb[0].mxu0
        %345 = vmatprep.mubr.bf16.mxu0 0
        %346 = vmatmul.mubr.bf16.gmra.mrb[0].mxu0 %v288
        %v347 = vpop.f32.mrb[0].mxu0
        %v348 = vadd.f32 0.0, %v347
        %v349 = vpop.f32.mrb[0].mxu0
        %v350 = vpop.f32.mrb[0].mxu0
        %v351 = vadd.f32 0.0, %v350
        %v352 = vpop.f32.mrb[0].mxu0
        %353 = vmatprep.mubr.bf16.mxu0 0
        %354 = vmatmul.mubr.bf16.gmra.mrb[0].mxu0 %v291
        %v355 = vpop.f32.mrb[0].mxu0
        %v356 = vadd.f32 0.0, %v355
        %v357 = vpop.f32.mrb[0].mxu0
        %v358 = vpop.f32.mrb[0].mxu0
        %v359 = vadd.f32 0.0, %v358
        %v360 = vpop.f32.mrb[0].mxu0
        %361 = vdwg.mxu0
        %v370 = vunpack.c.l.b16 %v238
        %v371 = vunpack.c.l.b16 %v239
        %v372 = vunpack.c.l.b16 %v240
        %v373 = vunpack.c.l.b16 %v241
        %v374 = vunpack.c.l.b16 %v242
        %v375 = vunpack.c.l.b16 %v243
        %v376 = vunpack.c.l.b16 %v244
        %v377 = vunpack.c.l.b16 %v245
        %v378 = vpack.c.b16 %v371, %v370
        %v379 = vpack.c.b16 %v373, %v372
        %v380 = vpack.c.b16 %v375, %v374
        %v381 = vpack.c.b16 %v377, %v376
        %v383 = vsel %vm280, %v378, 0
        %v386 = vsel %vm280, %v379, 0
        %v389 = vsel %vm280, %v380, 0
        %v392 = vsel %vm280, %v381, 0
        %v395 = vsel %vm293, %v246, 0
        %397 = vmatprep.subr.bf16.mxu0 0
        %398 = vmatpush1.bf16.msra.mxu0 %v395
        %399 = vmatprep.subr.bf16.mxu0 0
        %400 = vmatpush1.bf16.msra.mxu0 0
        %401 = vmatprep.subr.bf16.mxu0 0
        %402 = vmatpush1.bf16.msra.mxu0 0
        %403 = vmatprep.subr.bf16.mxu0 0
        %404 = vmatpush1.bf16.msra.mxu0 0
        %405 = vmatprep.subr.bf16.mxu0 0
        %406 = vmatpush1.bf16.msra.mxu0 0
        %407 = vmatprep.subr.bf16.mxu0 0
        %408 = vmatpush1.bf16.msra.mxu0 0
        %409 = vmatprep.subr.bf16.mxu0 0
        %410 = vmatpush1.bf16.msra.mxu0 0
        %411 = vmatprep.subr.bf16.mxu0 0
        %412 = vmatpush1.bf16.msra.mxu0 0
        %413 = vmatprep.subr.bf16.mxu0 0
        %414 = vmatpush1.bf16.msra.mxu0 0
        %415 = vmatprep.subr.bf16.mxu0 0
        %416 = vmatpush1.bf16.msra.mxu0 0
        %417 = vmatprep.subr.bf16.mxu0 0
        %418 = vmatpush1.bf16.msra.mxu0 0
        %419 = vmatprep.subr.bf16.mxu0 0
        %420 = vmatpush1.bf16.msra.mxu0 0
        %421 = vmatprep.subr.bf16.mxu0 0
        %422 = vmatpush1.bf16.msra.mxu0 0
        %423 = vmatprep.subr.bf16.mxu0 0
        %424 = vmatpush1.bf16.msra.mxu0 0
        %425 = vmatprep.subr.bf16.mxu0 0
        %426 = vmatpush1.bf16.msra.mxu0 0
        %427 = vmatprep.subr.bf16.mxu0 0
        %428 = vmatpush1.bf16.msra.mxu0 0
        %429 = vmatprep.mubr.bf16.mxu0 0
        %430 = vmatmul.mubr.bf16.gmra.mrb[0].mxu0 %v383
        %v431 = vpop.f32.mrb[0].mxu0
        %v432 = vadd.f32 %v332, %v431
        %v433 = vpop.f32.mrb[0].mxu0
        %v434 = vpop.f32.mrb[0].mxu0
        %v435 = vadd.f32 %v335, %v434
        %v436 = vpop.f32.mrb[0].mxu0
        %437 = vmatprep.mubr.bf16.mxu0 0
        %438 = vmatmul.mubr.bf16.gmra.mrb[0].mxu0 %v386
        %v439 = vpop.f32.mrb[0].mxu0
        %v440 = vadd.f32 %v340, %v439
        %v441 = vpop.f32.mrb[0].mxu0
        %v442 = vpop.f32.mrb[0].mxu0
        %v443 = vadd.f32 %v343, %v442
        %v444 = vpop.f32.mrb[0].mxu0
        %445 = vmatprep.mubr.bf16.mxu0 0
        %446 = vmatmul.mubr.bf16.gmra.mrb[0].mxu0 %v389
        %v447 = vpop.f32.mrb[0].mxu0
        %v448 = vadd.f32 %v348, %v447
        %v449 = vpop.f32.mrb[0].mxu0
        %v450 = vpop.f32.mrb[0].mxu0
        %v451 = vadd.f32 %v351, %v450
        %v452 = vpop.f32.mrb[0].mxu0
        %453 = vmatprep.mubr.bf16.mxu0 0
        %454 = vmatmul.mubr.bf16.gmra.mrb[0].mxu0 %v392
        %v455 = vpop.f32.mrb[0].mxu0
        %v456 = vadd.f32 %v356, %v455
        %v457 = vpop.f32.mrb[0].mxu0
        %v458 = vpop.f32.mrb[0].mxu0
        %v459 = vadd.f32 %v359, %v458
        %v460 = vpop.f32.mrb[0].mxu0
        %461 = vdwg.mxu0
        %v462 = vld [vmem:[%s237] sm:$0xf]
        %v463 = vld [vmem:[%s237 + $0x4] sm:$0x1]
        %v464 = vld [vmem:[%s237 + $0x8] sm:$0xf]
        %v465 = vld [vmem:[%s237 + $0xc] sm:$0x1]
        %v466 = vld [vmem:[%s237 + $0x10] sm:$0xf]
        %v467 = vld [vmem:[%s237 + $0x14] sm:$0x1]
        %v468 = vld [vmem:[%s237 + $0x18] sm:$0xf]
        %v469 = vld [vmem:[%s237 + $0x1c] sm:$0x1]
        %v470 = vld [vmem:[%s237 + $0x20] sm:$0xf]
        %v471 = vld [vmem:[%s237 + $0x24] sm:$0x1]
        %v472 = vld [vmem:[%s237 + $0x28] sm:$0xf]
        %v473 = vld [vmem:[%s237 + $0x2c] sm:$0x1]
        %v474 = vld [vmem:[%s237 + $0x30] sm:$0xf]
        %v475 = vld [vmem:[%s237 + $0x34] sm:$0x1]
        %v476 = vld [vmem:[%s237 + $0x38] sm:$0xf]
        %v477 = vld [vmem:[%s237 + $0x3c] sm:$0x1]
        %vm478 = vsmask.f32 3328
        %vm479 = vsmask.f32 7440
        %vm480 = vmor %vm478, %vm479
        %v482 = vshrl.u32 %v462, 16
        %v484 = vrot.slane %v482, 4
        %v485 = vshll.u32 %v462, 16
        %v487 = vrot.slane %v485, 5
        %v488 = vor.u32 %v484, %v487
        %v489 = vrot.slane %v488, 4
        %v491 = vshll.u32 %v463, 16
        %v493 = vrot.slane %v491, 5
        %v494 = vsel %vm480, %v489, %v493
        %v496 = vshrl.u32 %v464, 16
        %v498 = vrot.slane %v496, 4
        %v499 = vshll.u32 %v464, 16
        %v501 = vrot.slane %v499, 5
        %v502 = vor.u32 %v498, %v501
        %v503 = vrot.slane %v502, 4
        %v505 = vshll.u32 %v465, 16
        %v507 = vrot.slane %v505, 5
        %v508 = vsel %vm480, %v503, %v507
        %v510 = vshrl.u32 %v466, 16
        %v512 = vrot.slane %v510, 4
        %v513 = vshll.u32 %v466, 16
        %v515 = vrot.slane %v513, 5
        %v516 = vor.u32 %v512, %v515
        %v517 = vrot.slane %v516, 4
        %v519 = vshll.u32 %v467, 16
        %v521 = vrot.slane %v519, 5
        %v522 = vsel %vm480, %v517, %v521
        %v524 = vshrl.u32 %v468, 16
        %v526 = vrot.slane %v524, 4
        %v527 = vshll.u32 %v468, 16
        %v529 = vrot.slane %v527, 5
        %v530 = vor.u32 %v526, %v529
        %v531 = vrot.slane %v530, 4
        %v533 = vshll.u32 %v469, 16
        %v535 = vrot.slane %v533, 5
        %v536 = vsel %vm480, %v531, %v535
        %v538 = vshrl.u32 %v470, 16
        %v540 = vrot.slane %v538, 4
        %v541 = vshll.u32 %v470, 16
        %v543 = vrot.slane %v541, 5
        %v544 = vor.u32 %v540, %v543
        %v545 = vrot.slane %v544, 4
        %v547 = vshll.u32 %v471, 16
        %v549 = vrot.slane %v547, 5
        %v550 = vsel %vm480, %v545, %v549
        %v552 = vshrl.u32 %v472, 16
        %v554 = vrot.slane %v552, 4
        %v555 = vshll.u32 %v472, 16
        %v557 = vrot.slane %v555, 5
        %v558 = vor.u32 %v554, %v557
        %v559 = vrot.slane %v558, 4
        %v561 = vshll.u32 %v473, 16
        %v563 = vrot.slane %v561, 5
        %v564 = vsel %vm480, %v559, %v563
        %v566 = vshrl.u32 %v474, 16
        %v568 = vrot.slane %v566, 4
        %v569 = vshll.u32 %v474, 16
        %v571 = vrot.slane %v569, 5
        %v572 = vor.u32 %v568, %v571
        %v573 = vrot.slane %v572, 4
        %v575 = vshll.u32 %v475, 16
        %v577 = vrot.slane %v575, 5
        %v578 = vsel %vm480, %v573, %v577
        %v580 = vshrl.u32 %v476, 16
        %v582 = vrot.slane %v580, 4
        %v583 = vshll.u32 %v476, 16
        %v585 = vrot.slane %v583, 5
        %v586 = vor.u32 %v582, %v585
        %v587 = vrot.slane %v586, 4
        %v589 = vshll.u32 %v477, 16
        %v591 = vrot.slane %v589, 5
        %v592 = vsel %vm480, %v587, %v591
        %s593 = scalar_lea.vmem [#allocation5], 8
        %v594 = vld [vmem:[%s593] sm:$0xf]
        %v595 = vunpack.c.l.b16 %v494
        %v596 = vunpack.c.l.b16 %v508
        %v597 = vunpack.c.l.b16 %v522
        %v598 = vunpack.c.l.b16 %v536
        %v599 = vunpack.c.l.b16 %v550
        %v600 = vunpack.c.l.b16 %v564
        %v601 = vunpack.c.l.b16 %v578
        %v602 = vunpack.c.l.b16 %v592
        %v603 = vpack.c.b16 %v596, %v595
        %v604 = vpack.c.b16 %v598, %v597
        %v605 = vpack.c.b16 %v600, %v599
        %v606 = vpack.c.b16 %v602, %v601
        %v608 = vsel %vm280, %v603, 0
        %v611 = vsel %vm280, %v604, 0
        %v614 = vsel %vm280, %v605, 0
        %v617 = vsel %vm280, %v606, 0
        %v620 = vsel %vm293, %v594, 0
        %622 = vmatprep.subr.bf16.mxu0 0
        %623 = vmatpush1.bf16.msra.mxu0 %v620
        %624 = vmatprep.subr.bf16.mxu0 0
        %625 = vmatpush1.bf16.msra.mxu0 0
        %626 = vmatprep.subr.bf16.mxu0 0
        %627 = vmatpush1.bf16.msra.mxu0 0
        %628 = vmatprep.subr.bf16.mxu0 0
        %629 = vmatpush1.bf16.msra.mxu0 0
        %630 = vmatprep.subr.bf16.mxu0 0
        %631 = vmatpush1.bf16.msra.mxu0 0
        %632 = vmatprep.subr.bf16.mxu0 0
        %633 = vmatpush1.bf16.msra.mxu0 0
        %634 = vmatprep.subr.bf16.mxu0 0
        %635 = vmatpush1.bf16.msra.mxu0 0
        %636 = vmatprep.subr.bf16.mxu0 0
        %637 = vmatpush1.bf16.msra.mxu0 0
        %638 = vmatprep.subr.bf16.mxu0 0
        %639 = vmatpush1.bf16.msra.mxu0 0
        %640 = vmatprep.subr.bf16.mxu0 0
        %641 = vmatpush1.bf16.msra.mxu0 0
        %642 = vmatprep.subr.bf16.mxu0 0
        %643 = vmatpush1.bf16.msra.mxu0 0
        %644 = vmatprep.subr.bf16.mxu0 0
        %645 = vmatpush1.bf16.msra.mxu0 0
        %646 = vmatprep.subr.bf16.mxu0 0
        %647 = vmatpush1.bf16.msra.mxu0 0
        %648 = vmatprep.subr.bf16.mxu0 0
        %649 = vmatpush1.bf16.msra.mxu0 0
        %650 = vmatprep.subr.bf16.mxu0 0
        %651 = vmatpush1.bf16.msra.mxu0 0
        %652 = vmatprep.subr.bf16.mxu0 0
        %653 = vmatpush1.bf16.msra.mxu0 0
        %654 = vmatprep.mubr.bf16.mxu0 0
        %655 = vmatmul.mubr.bf16.gmra.mrb[0].mxu0 %v608
        %v656 = vpop.f32.mrb[0].mxu0
        %v657 = vadd.f32 0.0, %v656
        %v658 = vpop.f32.mrb[0].mxu0
        %v659 = vpop.f32.mrb[0].mxu0
        %v660 = vadd.f32 0.0, %v659
        %v661 = vpop.f32.mrb[0].mxu0
        %662 = vmatprep.mubr.bf16.mxu0 0
        %663 = vmatmul.mubr.bf16.gmra.mrb[0].mxu0 %v611
        %v664 = vpop.f32.mrb[0].mxu0
        %v665 = vadd.f32 0.0, %v664
        %v666 = vpop.f32.mrb[0].mxu0
        %v667 = vpop.f32.mrb[0].mxu0
        %v668 = vadd.f32 0.0, %v667
        %v669 = vpop.f32.mrb[0].mxu0
        %670 = vmatprep.mubr.bf16.mxu0 0
        %671 = vmatmul.mubr.bf16.gmra.mrb[0].mxu0 %v614
        %v672 = vpop.f32.mrb[0].mxu0
        %v673 = vadd.f32 0.0, %v672
        %v674 = vpop.f32.mrb[0].mxu0
        %v675 = vpop.f32.mrb[0].mxu0
        %v676 = vadd.f32 0.0, %v675
        %v677 = vpop.f32.mrb[0].mxu0
        %678 = vmatprep.mubr.bf16.mxu0 0
        %679 = vmatmul.mubr.bf16.gmra.mrb[0].mxu0 %v617
        %v680 = vpop.f32.mrb[0].mxu0
        %v681 = vadd.f32 0.0, %v680
        %v682 = vpop.f32.mrb[0].mxu0
        %v683 = vpop.f32.mrb[0].mxu0
        %v684 = vadd.f32 0.0, %v683
        %v685 = vpop.f32.mrb[0].mxu0
        %686 = vdwg.mxu0
        %v687 = vadd.f32 %v432, %v657
        %v688 = vadd.f32 %v435, %v660
        %v689 = vadd.f32 %v440, %v665
        %v690 = vadd.f32 %v443, %v668
        %v691 = vadd.f32 %v448, %v673
        %v692 = vadd.f32 %v451, %v676
        %v693 = vadd.f32 %v456, %v681
        %v694 = vadd.f32 %v459, %v684
        %s695 = sadd.s32 %s235, 36
        %s696 = smul.addr %s695, 4
        %s697 = scalar_lea.vmem %s200, %s696 [#allocation2]
        %v698 = vld [vmem:[%s697] sm:$0xf]
        %v699 = vld [vmem:[%s697 + $0x8] sm:$0xf]
        %v700 = vld [vmem:[%s697 + $0x10] sm:$0xf]
        %v701 = vld [vmem:[%s697 + $0x18] sm:$0xf]
        %v702 = vld [vmem:[%s697 + $0x20] sm:$0xf]
        %v703 = vld [vmem:[%s697 + $0x28] sm:$0xf]
        %v704 = vld [vmem:[%s697 + $0x30] sm:$0xf]
        %v705 = vld [vmem:[%s697 + $0x38] sm:$0xf]
        %s706 = scalar_lea.vmem [#allocation5], 12
        %v707 = vld [vmem:[%s706] sm:$0xf]
        %v716 = vunpack.c.l.b16 %v698
        %v717 = vunpack.c.l.b16 %v699
        %v718 = vunpack.c.l.b16 %v700
        %v719 = vunpack.c.l.b16 %v701
        %v720 = vunpack.c.l.b16 %v702
        %v721 = vunpack.c.l.b16 %v703
        %v722 = vunpack.c.l.b16 %v704
        %v723 = vunpack.c.l.b16 %v705
        %v724 = vpack.c.b16 %v717, %v716
        %v725 = vpack.c.b16 %v719, %v718
        %v726 = vpack.c.b16 %v721, %v720
        %v727 = vpack.c.b16 %v723, %v722
        %v729 = vsel %vm280, %v724, 0
        %v732 = vsel %vm280, %v725, 0
        %v735 = vsel %vm280, %v726, 0
        %v738 = vsel %vm280, %v727, 0
        %v741 = vsel %vm293, %v707, 0
        %743 = vmatprep.subr.bf16.mxu0 0
        %744 = vmatpush1.bf16.msra.mxu0 %v741
        %745 = vmatprep.subr.bf16.mxu0 0
        %746 = vmatpush1.bf16.msra.mxu0 0
        %747 = vmatprep.subr.bf16.mxu0 0
        %748 = vmatpush1.bf16.msra.mxu0 0
        %749 = vmatprep.subr.bf16.mxu0 0
        %750 = vmatpush1.bf16.msra.mxu0 0
        %751 = vmatprep.subr.bf16.mxu0 0
        %752 = vmatpush1.bf16.msra.mxu0 0
        %753 = vmatprep.subr.bf16.mxu0 0
        %754 = vmatpush1.bf16.msra.mxu0 0
        %755 = vmatprep.subr.bf16.mxu0 0
        %756 = vmatpush1.bf16.msra.mxu0 0
        %757 = vmatprep.subr.bf16.mxu0 0
        %758 = vmatpush1.bf16.msra.mxu0 0
        %759 = vmatprep.subr.bf16.mxu0 0
        %760 = vmatpush1.bf16.msra.mxu0 0
        %761 = vmatprep.subr.bf16.mxu0 0
        %762 = vmatpush1.bf16.msra.mxu0 0
        %763 = vmatprep.subr.bf16.mxu0 0
        %764 = vmatpush1.bf16.msra.mxu0 0
        %765 = vmatprep.subr.bf16.mxu0 0
        %766 = vmatpush1.bf16.msra.mxu0 0
        %767 = vmatprep.subr.bf16.mxu0 0
        %768 = vmatpush1.bf16.msra.mxu0 0
        %769 = vmatprep.subr.bf16.mxu0 0
        %770 = vmatpush1.bf16.msra.mxu0 0
        %771 = vmatprep.subr.bf16.mxu0 0
        %772 = vmatpush1.bf16.msra.mxu0 0
        %773 = vmatprep.subr.bf16.mxu0 0
        %774 = vmatpush1.bf16.msra.mxu0 0
        %775 = vmatprep.mubr.bf16.mxu0 0
        %776 = vmatmul.mubr.bf16.gmra.mrb[0].mxu0 %v729
        %v777 = vpop.f32.mrb[0].mxu0
        %v778 = vadd.f32 0.0, %v777
        %v779 = vpop.f32.mrb[0].mxu0
        %v780 = vpop.f32.mrb[0].mxu0
        %v781 = vadd.f32 0.0, %v780
        %v782 = vpop.f32.mrb[0].mxu0
        %783 = vmatprep.mubr.bf16.mxu0 0
        %784 = vmatmul.mubr.bf16.gmra.mrb[0].mxu0 %v732
        %v785 = vpop.f32.mrb[0].mxu0
        %v786 = vadd.f32 0.0, %v785
        %v787 = vpop.f32.mrb[0].mxu0
        %v788 = vpop.f32.mrb[0].mxu0
        %v789 = vadd.f32 0.0, %v788
        %v790 = vpop.f32.mrb[0].mxu0
        %791 = vmatprep.mubr.bf16.mxu0 0
        %792 = vmatmul.mubr.bf16.gmra.mrb[0].mxu0 %v735
        %v793 = vpop.f32.mrb[0].mxu0
        %v794 = vadd.f32 0.0, %v793
        %v795 = vpop.f32.mrb[0].mxu0
        %v796 = vpop.f32.mrb[0].mxu0
        %v797 = vadd.f32 0.0, %v796
        %v798 = vpop.f32.mrb[0].mxu0
        %799 = vmatprep.mubr.bf16.mxu0 0
        %800 = vmatmul.mubr.bf16.gmra.mrb[0].mxu0 %v738
        %v801 = vpop.f32.mrb[0].mxu0
        %v802 = vadd.f32 0.0, %v801
        %v803 = vpop.f32.mrb[0].mxu0
        %v804 = vpop.f32.mrb[0].mxu0
        %v805 = vadd.f32 0.0, %v804
        %v806 = vpop.f32.mrb[0].mxu0
        %807 = vdwg.mxu0
        %v808 = vadd.f32 %v687, %v778
        %v809 = vadd.f32 %v688, %v781
        %v810 = vadd.f32 %v689, %v786
        %v811 = vadd.f32 %v690, %v789
        %v812 = vadd.f32 %v691, %v794
        %v813 = vadd.f32 %v692, %v797
        %v814 = vadd.f32 %v693, %v802
        %v815 = vadd.f32 %v694, %v805
        %s816 = sadd.s32 %s235, 54
        %s817 = smul.addr %s816, 4
        %s818 = scalar_lea.vmem %s200, %s817 [#allocation2]
        %v819 = vld [vmem:[%s818] sm:$0xf]
        %v820 = vld [vmem:[%s818 + $0x8] sm:$0xf]
        %v821 = vld [vmem:[%s818 + $0x10] sm:$0xf]
        %v822 = vld [vmem:[%s818 + $0x18] sm:$0xf]
        %v823 = vld [vmem:[%s818 + $0x20] sm:$0xf]
        %v824 = vld [vmem:[%s818 + $0x28] sm:$0xf]
        %v825 = vld [vmem:[%s818 + $0x30] sm:$0xf]
        %v826 = vld [vmem:[%s818 + $0x38] sm:$0xf]
        %s827 = scalar_lea.vmem [#allocation5], 16
        %v828 = vld [vmem:[%s827] sm:$0xf]
        %v837 = vunpack.c.l.b16 %v819
        %v838 = vunpack.c.l.b16 %v820
        %v839 = vunpack.c.l.b16 %v821
        %v840 = vunpack.c.l.b16 %v822
        %v841 = vunpack.c.l.b16 %v823
        %v842 = vunpack.c.l.b16 %v824
        %v843 = vunpack.c.l.b16 %v825
        %v844 = vunpack.c.l.b16 %v826
        %v845 = vpack.c.b16 %v838, %v837
        %v846 = vpack.c.b16 %v840, %v839
        %v847 = vpack.c.b16 %v842, %v841
        %v848 = vpack.c.b16 %v844, %v843
        %v850 = vsel %vm280, %v845, 0
        %v853 = vsel %vm280, %v846, 0
        %v856 = vsel %vm280, %v847, 0
        %v859 = vsel %vm280, %v848, 0
        %v862 = vsel %vm293, %v828, 0
        %864 = vmatprep.subr.bf16.mxu0 0
        %865 = vmatpush1.bf16.msra.mxu0 %v862
        %866 = vmatprep.subr.bf16.mxu0 0
        %867 = vmatpush1.bf16.msra.mxu0 0
        %868 = vmatprep.subr.bf16.mxu0 0
        %869 = vmatpush1.bf16.msra.mxu0 0
        %870 = vmatprep.subr.bf16.mxu0 0
        %871 = vmatpush1.bf16.msra.mxu0 0
        %872 = vmatprep.subr.bf16.mxu0 0
        %873 = vmatpush1.bf16.msra.mxu0 0
        %874 = vmatprep.subr.bf16.mxu0 0
        %875 = vmatpush1.bf16.msra.mxu0 0
        %876 = vmatprep.subr.bf16.mxu0 0
        %877 = vmatpush1.bf16.msra.mxu0 0
        %878 = vmatprep.subr.bf16.mxu0 0
        %879 = vmatpush1.bf16.msra.mxu0 0
        %880 = vmatprep.subr.bf16.mxu0 0
        %881 = vmatpush1.bf16.msra.mxu0 0
        %882 = vmatprep.subr.bf16.mxu0 0
        %883 = vmatpush1.bf16.msra.mxu0 0
        %884 = vmatprep.subr.bf16.mxu0 0
        %885 = vmatpush1.bf16.msra.mxu0 0
        %886 = vmatprep.subr.bf16.mxu0 0
        %887 = vmatpush1.bf16.msra.mxu0 0
        %888 = vmatprep.subr.bf16.mxu0 0
        %889 = vmatpush1.bf16.msra.mxu0 0
        %890 = vmatprep.subr.bf16.mxu0 0
        %891 = vmatpush1.bf16.msra.mxu0 0
        %892 = vmatprep.subr.bf16.mxu0 0
        %893 = vmatpush1.bf16.msra.mxu0 0
        %894 = vmatprep.subr.bf16.mxu0 0
        %895 = vmatpush1.bf16.msra.mxu0 0
        %896 = vmatprep.mubr.bf16.mxu0 0
        %897 = vmatmul.mubr.bf16.gmra.mrb[0].mxu0 %v850
        %v898 = vpop.f32.mrb[0].mxu0
        %v899 = vadd.f32 0.0, %v898
        %v900 = vpop.f32.mrb[0].mxu0
        %v901 = vpop.f32.mrb[0].mxu0
        %v902 = vadd.f32 0.0, %v901
        %v903 = vpop.f32.mrb[0].mxu0
        %904 = vmatprep.mubr.bf16.mxu0 0
        %905 = vmatmul.mubr.bf16.gmra.mrb[0].mxu0 %v853
        %v906 = vpop.f32.mrb[0].mxu0
        %v907 = vadd.f32 0.0, %v906
        %v908 = vpop.f32.mrb[0].mxu0
        %v909 = vpop.f32.mrb[0].mxu0
        %v910 = vadd.f32 0.0, %v909
        %v911 = vpop.f32.mrb[0].mxu0
        %912 = vmatprep.mubr.bf16.mxu0 0
        %913 = vmatmul.mubr.bf16.gmra.mrb[0].mxu0 %v856
        %v914 = vpop.f32.mrb[0].mxu0
        %v915 = vadd.f32 0.0, %v914
        %v916 = vpop.f32.mrb[0].mxu0
        %v917 = vpop.f32.mrb[0].mxu0
        %v918 = vadd.f32 0.0, %v917
        %v919 = vpop.f32.mrb[0].mxu0
        %920 = vmatprep.mubr.bf16.mxu0 0
        %921 = vmatmul.mubr.bf16.gmra.mrb[0].mxu0 %v859
        %v922 = vpop.f32.mrb[0].mxu0
        %v923 = vadd.f32 0.0, %v922
        %v924 = vpop.f32.mrb[0].mxu0
        %v925 = vpop.f32.mrb[0].mxu0
        %v926 = vadd.f32 0.0, %v925
        %v927 = vpop.f32.mrb[0].mxu0
        %928 = vdwg.mxu0
        %v929 = vadd.f32 %v808, %v899
        %v930 = vadd.f32 %v809, %v902
        %v931 = vadd.f32 %v810, %v907
        %v932 = vadd.f32 %v811, %v910
        %v933 = vadd.f32 %v812, %v915
        %v934 = vadd.f32 %v813, %v918
        %v935 = vadd.f32 %v814, %v923
        %v936 = vadd.f32 %v815, %v926
        %v937 = vld [vmem:[%s697] sm:$0xf]
        %v938 = vld [vmem:[%s697 + $0x4] sm:$0x1]
        %v939 = vld [vmem:[%s697 + $0x8] sm:$0xf]
        %v940 = vld [vmem:[%s697 + $0xc] sm:$0x1]
        %v941 = vld [vmem:[%s697 + $0x10] sm:$0xf]
        %v942 = vld [vmem:[%s697 + $0x14] sm:$0x1]
        %v943 = vld [vmem:[%s697 + $0x18] sm:$0xf]
        %v944 = vld [vmem:[%s697 + $0x1c] sm:$0x1]
        %v945 = vld [vmem:[%s697 + $0x20] sm:$0xf]
        %v946 = vld [vmem:[%s697 + $0x24] sm:$0x1]
        %v947 = vld [vmem:[%s697 + $0x28] sm:$0xf]
        %v948 = vld [vmem:[%s697 + $0x2c] sm:$0x1]
        %v949 = vld [vmem:[%s697 + $0x30] sm:$0xf]
        %v950 = vld [vmem:[%s697 + $0x34] sm:$0x1]
        %v951 = vld [vmem:[%s697 + $0x38] sm:$0xf]
        %v952 = vld [vmem:[%s697 + $0x3c] sm:$0x1]
        %v954 = vshrl.u32 %v937, 16
        %v956 = vrot.slane %v954, 4
        %v957 = vshll.u32 %v937, 16
        %v959 = vrot.slane %v957, 5
        %v960 = vor.u32 %v956, %v959
        %v961 = vrot.slane %v960, 4
        %v963 = vshll.u32 %v938, 16
        %v965 = vrot.slane %v963, 5
        %v966 = vsel %vm480, %v961, %v965
        %v968 = vshrl.u32 %v939, 16
        %v970 = vrot.slane %v968, 4
        %v971 = vshll.u32 %v939, 16
        %v973 = vrot.slane %v971, 5
        %v974 = vor.u32 %v970, %v973
        %v975 = vrot.slane %v974, 4
        %v977 = vshll.u32 %v940, 16
        %v979 = vrot.slane %v977, 5
        %v980 = vsel %vm480, %v975, %v979
        %v982 = vshrl.u32 %v941, 16
        %v984 = vrot.slane %v982, 4
        %v985 = vshll.u32 %v941, 16
        %v987 = vrot.slane %v985, 5
        %v988 = vor.u32 %v984, %v987
        %v989 = vrot.slane %v988, 4
        %v991 = vshll.u32 %v942, 16
        %v993 = vrot.slane %v991, 5
        %v994 = vsel %vm480, %v989, %v993
        %v996 = vshrl.u32 %v943, 16
        %v998 = vrot.slane %v996, 4
        %v999 = vshll.u32 %v943, 16
        %v1001 = vrot.slane %v999, 5
        %v1002 = vor.u32 %v998, %v1001
        %v1003 = vrot.slane %v1002, 4
        %v1005 = vshll.u32 %v944, 16
        %v1007 = vrot.slane %v1005, 5
        %v1008 = vsel %vm480, %v1003, %v1007
        %v1010 = vshrl.u32 %v945, 16
        %v1012 = vrot.slane %v1010, 4
        %v1013 = vshll.u32 %v945, 16
        %v1015 = vrot.slane %v1013, 5
        %v1016 = vor.u32 %v1012, %v1015
        %v1017 = vrot.slane %v1016, 4
        %v1019 = vshll.u32 %v946, 16
        %v1021 = vrot.slane %v1019, 5
        %v1022 = vsel %vm480, %v1017, %v1021
        %v1024 = vshrl.u32 %v947, 16
        %v1026 = vrot.slane %v1024, 4
        %v1027 = vshll.u32 %v947, 16
        %v1029 = vrot.slane %v1027, 5
        %v1030 = vor.u32 %v1026, %v1029
        %v1031 = vrot.slane %v1030, 4
        %v1033 = vshll.u32 %v948, 16
        %v1035 = vrot.slane %v1033, 5
        %v1036 = vsel %vm480, %v1031, %v1035
        %v1038 = vshrl.u32 %v949, 16
        %v1040 = vrot.slane %v1038, 4
        %v1041 = vshll.u32 %v949, 16
        %v1043 = vrot.slane %v1041, 5
        %v1044 = vor.u32 %v1040, %v1043
        %v1045 = vrot.slane %v1044, 4
        %v1047 = vshll.u32 %v950, 16
        %v1049 = vrot.slane %v1047, 5
        %v1050 = vsel %vm480, %v1045, %v1049
        %v1052 = vshrl.u32 %v951, 16
        %v1054 = vrot.slane %v1052, 4
        %v1055 = vshll.u32 %v951, 16
        %v1057 = vrot.slane %v1055, 5
        %v1058 = vor.u32 %v1054, %v1057
        %v1059 = vrot.slane %v1058, 4
        %v1061 = vshll.u32 %v952, 16
        %v1063 = vrot.slane %v1061, 5
        %v1064 = vsel %vm480, %v1059, %v1063
        %s1065 = scalar_lea.vmem [#allocation5], 20
        %v1066 = vld [vmem:[%s1065] sm:$0xf]
        %v1067 = vunpack.c.l.b16 %v966
        %v1068 = vunpack.c.l.b16 %v980
        %v1069 = vunpack.c.l.b16 %v994
        %v1070 = vunpack.c.l.b16 %v1008
        %v1071 = vunpack.c.l.b16 %v1022
        %v1072 = vunpack.c.l.b16 %v1036
        %v1073 = vunpack.c.l.b16 %v1050
        %v1074 = vunpack.c.l.b16 %v1064
        %v1075 = vpack.c.b16 %v1068, %v1067
        %v1076 = vpack.c.b16 %v1070, %v1069
        %v1077 = vpack.c.b16 %v1072, %v1071
        %v1078 = vpack.c.b16 %v1074, %v1073
        %v1080 = vsel %vm280, %v1075, 0
        %v1083 = vsel %vm280, %v1076, 0
        %v1086 = vsel %vm280, %v1077, 0
        %v1089 = vsel %vm280, %v1078, 0
        %v1092 = vsel %vm293, %v1066, 0
        %1094 = vmatprep.subr.bf16.mxu0 0
        %1095 = vmatpush1.bf16.msra.mxu0 %v1092
        %1096 = vmatprep.subr.bf16.mxu0 0
        %1097 = vmatpush1.bf16.msra.mxu0 0
        %1098 = vmatprep.subr.bf16.mxu0 0
        %1099 = vmatpush1.bf16.msra.mxu0 0
        %1100 = vmatprep.subr.bf16.mxu0 0
        %1101 = vmatpush1.bf16.msra.mxu0 0
        %1102 = vmatprep.subr.bf16.mxu0 0
        %1103 = vmatpush1.bf16.msra.mxu0 0
        %1104 = vmatprep.subr.bf16.mxu0 0
        %1105 = vmatpush1.bf16.msra.mxu0 0
        %1106 = vmatprep.subr.bf16.mxu0 0
        %1107 = vmatpush1.bf16.msra.mxu0 0
        %1108 = vmatprep.subr.bf16.mxu0 0
        %1109 = vmatpush1.bf16.msra.mxu0 0
        %1110 = vmatprep.subr.bf16.mxu0 0
        %1111 = vmatpush1.bf16.msra.mxu0 0
        %1112 = vmatprep.subr.bf16.mxu0 0
        %1113 = vmatpush1.bf16.msra.mxu0 0
        %1114 = vmatprep.subr.bf16.mxu0 0
        %1115 = vmatpush1.bf16.msra.mxu0 0
        %1116 = vmatprep.subr.bf16.mxu0 0
        %1117 = vmatpush1.bf16.msra.mxu0 0
        %1118 = vmatprep.subr.bf16.mxu0 0
        %1119 = vmatpush1.bf16.msra.mxu0 0
        %1120 = vmatprep.subr.bf16.mxu0 0
        %1121 = vmatpush1.bf16.msra.mxu0 0
        %1122 = vmatprep.subr.bf16.mxu0 0
        %1123 = vmatpush1.bf16.msra.mxu0 0
        %1124 = vmatprep.subr.bf16.mxu0 0
        %1125 = vmatpush1.bf16.msra.mxu0 0
        %1126 = vmatprep.mubr.bf16.mxu0 0
        %1127 = vmatmul.mubr.bf16.gmra.mrb[0].mxu0 %v1080
        %v1128 = vpop.f32.mrb[0].mxu0
        %v1129 = vadd.f32 0.0, %v1128
        %v1130 = vpop.f32.mrb[0].mxu0
        %v1131 = vpop.f32.mrb[0].mxu0
        %v1132 = vadd.f32 0.0, %v1131
        %v1133 = vpop.f32.mrb[0].mxu0
        %1134 = vmatprep.mubr.bf16.mxu0 0
        %1135 = vmatmul.mubr.bf16.gmra.mrb[0].mxu0 %v1083
        %v1136 = vpop.f32.mrb[0].mxu0
        %v1137 = vadd.f32 0.0, %v1136
        %v1138 = vpop.f32.mrb[0].mxu0
        %v1139 = vpop.f32.mrb[0].mxu0
        %v1140 = vadd.f32 0.0, %v1139
        %v1141 = vpop.f32.mrb[0].mxu0
        %1142 = vmatprep.mubr.bf16.mxu0 0
        %1143 = vmatmul.mubr.bf16.gmra.mrb[0].mxu0 %v1086
        %v1144 = vpop.f32.mrb[0].mxu0
        %v1145 = vadd.f32 0.0, %v1144
        %v1146 = vpop.f32.mrb[0].mxu0
        %v1147 = vpop.f32.mrb[0].mxu0
        %v1148 = vadd.f32 0.0, %v1147
        %v1149 = vpop.f32.mrb[0].mxu0
        %1150 = vmatprep.mubr.bf16.mxu0 0
        %1151 = vmatmul.mubr.bf16.gmra.mrb[0].mxu0 %v1089
        %v1152 = vpop.f32.mrb[0].mxu0
        %v1153 = vadd.f32 0.0, %v1152
        %v1154 = vpop.f32.mrb[0].mxu0
        %v1155 = vpop.f32.mrb[0].mxu0
        %v1156 = vadd.f32 0.0, %v1155
        %v1157 = vpop.f32.mrb[0].mxu0
        %1158 = vdwg.mxu0
        %v1159 = vadd.f32 %v929, %v1129
        %v1160 = vadd.f32 %v930, %v1132
        %v1161 = vadd.f32 %v931, %v1137
        %v1162 = vadd.f32 %v932, %v1140
        %v1163 = vadd.f32 %v933, %v1145
        %v1164 = vadd.f32 %v934, %v1148
        %v1165 = vadd.f32 %v935, %v1153
        %v1166 = vadd.f32 %v936, %v1156
        %s1167 = sadd.s32 %s234, 1
        %s1168 = smul.u32 %s1167, 2
        %s1169 = smul.addr %s1168, 4
        %s1170 = scalar_lea.vmem %s200, %s1169 [#allocation2]
        %v1171 = vld [vmem:[%s1170] sm:$0xf]
        %v1172 = vld [vmem:[%s1170 + $0x8] sm:$0xf]
        %v1173 = vld [vmem:[%s1170 + $0x10] sm:$0xf]
        %v1174 = vld [vmem:[%s1170 + $0x18] sm:$0xf]
        %v1175 = vld [vmem:[%s1170 + $0x20] sm:$0xf]
        %v1176 = vld [vmem:[%s1170 + $0x28] sm:$0xf]
        %v1177 = vld [vmem:[%s1170 + $0x30] sm:$0xf]
        %v1178 = vld [vmem:[%s1170 + $0x38] sm:$0xf]
        %s1179 = scalar_lea.vmem [#allocation5], 24
        %v1180 = vld [vmem:[%s1179] sm:$0xf]
        %v1189 = vunpack.c.l.b16 %v1171
        %v1190 = vunpack.c.l.b16 %v1172
        %v1191 = vunpack.c.l.b16 %v1173
        %v1192 = vunpack.c.l.b16 %v1174
        %v1193 = vunpack.c.l.b16 %v1175
        %v1194 = vunpack.c.l.b16 %v1176
        %v1195 = vunpack.c.l.b16 %v1177
        %v1196 = vunpack.c.l.b16 %v1178
        %v1197 = vpack.c.b16 %v1190, %v1189
        %v1198 = vpack.c.b16 %v1192, %v1191
        %v1199 = vpack.c.b16 %v1194, %v1193
        %v1200 = vpack.c.b16 %v1196, %v1195
        %v1202 = vsel %vm280, %v1197, 0
        %v1205 = vsel %vm280, %v1198, 0
        %v1208 = vsel %vm280, %v1199, 0
        %v1211 = vsel %vm280, %v1200, 0
        %v1214 = vsel %vm293, %v1180, 0
        %1216 = vmatprep.subr.bf16.mxu0 0
        %1217 = vmatpush1.bf16.msra.mxu0 %v1214
        %1218 = vmatprep.subr.bf16.mxu0 0
        %1219 = vmatpush1.bf16.msra.mxu0 0
        %1220 = vmatprep.subr.bf16.mxu0 0
        %1221 = vmatpush1.bf16.msra.mxu0 0
        %1222 = vmatprep.subr.bf16.mxu0 0
        %1223 = vmatpush1.bf16.msra.mxu0 0
        %1224 = vmatprep.subr.bf16.mxu0 0
        %1225 = vmatpush1.bf16.msra.mxu0 0
        %1226 = vmatprep.subr.bf16.mxu0 0
        %1227 = vmatpush1.bf16.msra.mxu0 0
        %1228 = vmatprep.subr.bf16.mxu0 0
        %1229 = vmatpush1.bf16.msra.mxu0 0
        %1230 = vmatprep.subr.bf16.mxu0 0
        %1231 = vmatpush1.bf16.msra.mxu0 0
        %1232 = vmatprep.subr.bf16.mxu0 0
        %1233 = vmatpush1.bf16.msra.mxu0 0
        %1234 = vmatprep.subr.bf16.mxu0 0
        %1235 = vmatpush1.bf16.msra.mxu0 0
        %1236 = vmatprep.subr.bf16.mxu0 0
        %1237 = vmatpush1.bf16.msra.mxu0 0
        %1238 = vmatprep.subr.bf16.mxu0 0
        %1239 = vmatpush1.bf16.msra.mxu0 0
        %1240 = vmatprep.subr.bf16.mxu0 0
        %1241 = vmatpush1.bf16.msra.mxu0 0
        %1242 = vmatprep.subr.bf16.mxu0 0
        %1243 = vmatpush1.bf16.msra.mxu0 0
        %1244 = vmatprep.subr.bf16.mxu0 0
        %1245 = vmatpush1.bf16.msra.mxu0 0
        %1246 = vmatprep.subr.bf16.mxu0 0
        %1247 = vmatpush1.bf16.msra.mxu0 0
        %1248 = vmatprep.mubr.bf16.mxu0 0
        %1249 = vmatmul.mubr.bf16.gmra.mrb[0].mxu0 %v1202
        %v1250 = vpop.f32.mrb[0].mxu0
        %v1251 = vadd.f32 0.0, %v1250
        %v1252 = vpop.f32.mrb[0].mxu0
        %v1253 = vpop.f32.mrb[0].mxu0
        %v1254 = vadd.f32 0.0, %v1253
        %v1255 = vpop.f32.mrb[0].mxu0
        %1256 = vmatprep.mubr.bf16.mxu0 0
        %1257 = vmatmul.mubr.bf16.gmra.mrb[0].mxu0 %v1205
        %v1258 = vpop.f32.mrb[0].mxu0
        %v1259 = vadd.f32 0.0, %v1258
        %v1260 = vpop.f32.mrb[0].mxu0
        %v1261 = vpop.f32.mrb[0].mxu0
        %v1262 = vadd.f32 0.0, %v1261
        %v1263 = vpop.f32.mrb[0].mxu0
        %1264 = vmatprep.mubr.bf16.mxu0 0
        %1265 = vmatmul.mubr.bf16.gmra.mrb[0].mxu0 %v1208
        %v1266 = vpop.f32.mrb[0].mxu0
        %v1267 = vadd.f32 0.0, %v1266
        %v1268 = vpop.f32.mrb[0].mxu0
        %v1269 = vpop.f32.mrb[0].mxu0
        %v1270 = vadd.f32 0.0, %v1269
        %v1271 = vpop.f32.mrb[0].mxu0
        %1272 = vmatprep.mubr.bf16.mxu0 0
        %1273 = vmatmul.mubr.bf16.gmra.mrb[0].mxu0 %v1211
        %v1274 = vpop.f32.mrb[0].mxu0
        %v1275 = vadd.f32 0.0, %v1274
        %v1276 = vpop.f32.mrb[0].mxu0
        %v1277 = vpop.f32.mrb[0].mxu0
        %v1278 = vadd.f32 0.0, %v1277
        %v1279 = vpop.f32.mrb[0].mxu0
        %1280 = vdwg.mxu0
        %v1281 = vadd.f32 %v1159, %v1251
        %v1282 = vadd.f32 %v1160, %v1254
        %v1283 = vadd.f32 %v1161, %v1259
        %v1284 = vadd.f32 %v1162, %v1262
        %v1285 = vadd.f32 %v1163, %v1267
        %v1286 = vadd.f32 %v1164, %v1270
        %v1287 = vadd.f32 %v1165, %v1275
        %v1288 = vadd.f32 %v1166, %v1278
        %s1289 = sadd.s32 %s1168, 18
        %s1290 = smul.addr %s1289, 4
        %s1291 = scalar_lea.vmem %s200, %s1290 [#allocation2]
        %v1292 = vld [vmem:[%s1291] sm:$0xf]
        %v1293 = vld [vmem:[%s1291 + $0x8] sm:$0xf]
        %v1294 = vld [vmem:[%s1291 + $0x10] sm:$0xf]
        %v1295 = vld [vmem:[%s1291 + $0x18] sm:$0xf]
        %v1296 = vld [vmem:[%s1291 + $0x20] sm:$0xf]
        %v1297 = vld [vmem:[%s1291 + $0x28] sm:$0xf]
        %v1298 = vld [vmem:[%s1291 + $0x30] sm:$0xf]
        %v1299 = vld [vmem:[%s1291 + $0x38] sm:$0xf]
        %s1300 = scalar_lea.vmem [#allocation5], 28
        %v1301 = vld [vmem:[%s1300] sm:$0xf]
        %v1310 = vunpack.c.l.b16 %v1292
        %v1311 = vunpack.c.l.b16 %v1293
        %v1312 = vunpack.c.l.b16 %v1294
        %v1313 = vunpack.c.l.b16 %v1295
        %v1314 = vunpack.c.l.b16 %v1296
        %v1315 = vunpack.c.l.b16 %v1297
        %v1316 = vunpack.c.l.b16 %v1298
        %v1317 = vunpack.c.l.b16 %v1299
        %v1318 = vpack.c.b16 %v1311, %v1310
        %v1319 = vpack.c.b16 %v1313, %v1312
        %v1320 = vpack.c.b16 %v1315, %v1314
        %v1321 = vpack.c.b16 %v1317, %v1316
        %v1323 = vsel %vm280, %v1318, 0
        %v1326 = vsel %vm280, %v1319, 0
        %v1329 = vsel %vm280, %v1320, 0
        %v1332 = vsel %vm280, %v1321, 0
        %v1335 = vsel %vm293, %v1301, 0
        %1337 = vmatprep.subr.bf16.mxu0 0
        %1338 = vmatpush1.bf16.msra.mxu0 %v1335
        %1339 = vmatprep.subr.bf16.mxu0 0
        %1340 = vmatpush1.bf16.msra.mxu0 0
        %1341 = vmatprep.subr.bf16.mxu0 0
        %1342 = vmatpush1.bf16.msra.mxu0 0
        %1343 = vmatprep.subr.bf16.mxu0 0
        %1344 = vmatpush1.bf16.msra.mxu0 0
        %1345 = vmatprep.subr.bf16.mxu0 0
        %1346 = vmatpush1.bf16.msra.mxu0 0
        %1347 = vmatprep.subr.bf16.mxu0 0
        %1348 = vmatpush1.bf16.msra.mxu0 0
        %1349 = vmatprep.subr.bf16.mxu0 0
        %1350 = vmatpush1.bf16.msra.mxu0 0
        %1351 = vmatprep.subr.bf16.mxu0 0
        %1352 = vmatpush1.bf16.msra.mxu0 0
        %1353 = vmatprep.subr.bf16.mxu0 0
        %1354 = vmatpush1.bf16.msra.mxu0 0
        %1355 = vmatprep.subr.bf16.mxu0 0
        %1356 = vmatpush1.bf16.msra.mxu0 0
        %1357 = vmatprep.subr.bf16.mxu0 0
        %1358 = vmatpush1.bf16.msra.mxu0 0
        %1359 = vmatprep.subr.bf16.mxu0 0
        %1360 = vmatpush1.bf16.msra.mxu0 0
        %1361 = vmatprep.subr.bf16.mxu0 0
        %1362 = vmatpush1.bf16.msra.mxu0 0
        %1363 = vmatprep.subr.bf16.mxu0 0
        %1364 = vmatpush1.bf16.msra.mxu0 0
        %1365 = vmatprep.subr.bf16.mxu0 0
        %1366 = vmatpush1.bf16.msra.mxu0 0
        %1367 = vmatprep.subr.bf16.mxu0 0
        %1368 = vmatpush1.bf16.msra.mxu0 0
        %1369 = vmatprep.mubr.bf16.mxu0 0
        %1370 = vmatmul.mubr.bf16.gmra.mrb[0].mxu0 %v1323
        %v1371 = vpop.f32.mrb[0].mxu0
        %v1372 = vadd.f32 0.0, %v1371
        %v1373 = vpop.f32.mrb[0].mxu0
        %v1374 = vpop.f32.mrb[0].mxu0
        %v1375 = vadd.f32 0.0, %v1374
        %v1376 = vpop.f32.mrb[0].mxu0
        %1377 = vmatprep.mubr.bf16.mxu0 0
        %1378 = vmatmul.mubr.bf16.gmra.mrb[0].mxu0 %v1326
        %v1379 = vpop.f32.mrb[0].mxu0
        %v1380 = vadd.f32 0.0, %v1379
        %v1381 = vpop.f32.mrb[0].mxu0
        %v1382 = vpop.f32.mrb[0].mxu0
        %v1383 = vadd.f32 0.0, %v1382
        %v1384 = vpop.f32.mrb[0].mxu0
        %1385 = vmatprep.mubr.bf16.mxu0 0
        %1386 = vmatmul.mubr.bf16.gmra.mrb[0].mxu0 %v1329
        %v1387 = vpop.f32.mrb[0].mxu0
        %v1388 = vadd.f32 0.0, %v1387
        %v1389 = vpop.f32.mrb[0].mxu0
        %v1390 = vpop.f32.mrb[0].mxu0
        %v1391 = vadd.f32 0.0, %v1390
        %v1392 = vpop.f32.mrb[0].mxu0
        %1393 = vmatprep.mubr.bf16.mxu0 0
        %1394 = vmatmul.mubr.bf16.gmra.mrb[0].mxu0 %v1332
        %v1395 = vpop.f32.mrb[0].mxu0
        %v1396 = vadd.f32 0.0, %v1395
        %v1397 = vpop.f32.mrb[0].mxu0
        %v1398 = vpop.f32.mrb[0].mxu0
        %v1399 = vadd.f32 0.0, %v1398
        %v1400 = vpop.f32.mrb[0].mxu0
        %1401 = vdwg.mxu0
        %v1402 = vadd.f32 %v1281, %v1372
        %v1403 = vadd.f32 %v1282, %v1375
        %v1404 = vadd.f32 %v1283, %v1380
        %v1405 = vadd.f32 %v1284, %v1383
        %v1406 = vadd.f32 %v1285, %v1388
        %v1407 = vadd.f32 %v1286, %v1391
        %v1408 = vadd.f32 %v1287, %v1396
        %v1409 = vadd.f32 %v1288, %v1399
        %v1410 = vld [vmem:[%s1170] sm:$0xf]
        %v1411 = vld [vmem:[%s1170 + $0x4] sm:$0x1]
        %v1412 = vld [vmem:[%s1170 + $0x8] sm:$0xf]
        %v1413 = vld [vmem:[%s1170 + $0xc] sm:$0x1]
        %v1414 = vld [vmem:[%s1170 + $0x10] sm:$0xf]
        %v1415 = vld [vmem:[%s1170 + $0x14] sm:$0x1]
        %v1416 = vld [vmem:[%s1170 + $0x18] sm:$0xf]
        %v1417 = vld [vmem:[%s1170 + $0x1c] sm:$0x1]
        %v1418 = vld [vmem:[%s1170 + $0x20] sm:$0xf]
        %v1419 = vld [vmem:[%s1170 + $0x24] sm:$0x1]
        %v1420 = vld [vmem:[%s1170 + $0x28] sm:$0xf]
        %v1421 = vld [vmem:[%s1170 + $0x2c] sm:$0x1]
        %v1422 = vld [vmem:[%s1170 + $0x30] sm:$0xf]
        %v1423 = vld [vmem:[%s1170 + $0x34] sm:$0x1]
        %v1424 = vld [vmem:[%s1170 + $0x38] sm:$0xf]
        %v1425 = vld [vmem:[%s1170 + $0x3c] sm:$0x1]
        %v1427 = vshrl.u32 %v1410, 16
        %v1429 = vrot.slane %v1427, 4
        %v1430 = vshll.u32 %v1410, 16
        %v1432 = vrot.slane %v1430, 5
        %v1433 = vor.u32 %v1429, %v1432
        %v1434 = vrot.slane %v1433, 4
        %v1436 = vshll.u32 %v1411, 16
        %v1438 = vrot.slane %v1436, 5
        %v1439 = vsel %vm480, %v1434, %v1438
        %v1441 = vshrl.u32 %v1412, 16
        %v1443 = vrot.slane %v1441, 4
        %v1444 = vshll.u32 %v1412, 16
        %v1446 = vrot.slane %v1444, 5
        %v1447 = vor.u32 %v1443, %v1446
        %v1448 = vrot.slane %v1447, 4
        %v1450 = vshll.u32 %v1413, 16
        %v1452 = vrot.slane %v1450, 5
        %v1453 = vsel %vm480, %v1448, %v1452
        %v1455 = vshrl.u32 %v1414, 16
        %v1457 = vrot.slane %v1455, 4
        %v1458 = vshll.u32 %v1414, 16
        %v1460 = vrot.slane %v1458, 5
        %v1461 = vor.u32 %v1457, %v1460
        %v1462 = vrot.slane %v1461, 4
        %v1464 = vshll.u32 %v1415, 16
        %v1466 = vrot.slane %v1464, 5
        %v1467 = vsel %vm480, %v1462, %v1466
        %v1469 = vshrl.u32 %v1416, 16
        %v1471 = vrot.slane %v1469, 4
        %v1472 = vshll.u32 %v1416, 16
        %v1474 = vrot.slane %v1472, 5
        %v1475 = vor.u32 %v1471, %v1474
        %v1476 = vrot.slane %v1475, 4
        %v1478 = vshll.u32 %v1417, 16
        %v1480 = vrot.slane %v1478, 5
        %v1481 = vsel %vm480, %v1476, %v1480
        %v1483 = vshrl.u32 %v1418, 16
        %v1485 = vrot.slane %v1483, 4
        %v1486 = vshll.u32 %v1418, 16
        %v1488 = vrot.slane %v1486, 5
        %v1489 = vor.u32 %v1485, %v1488
        %v1490 = vrot.slane %v1489, 4
        %v1492 = vshll.u32 %v1419, 16
        %v1494 = vrot.slane %v1492, 5
        %v1495 = vsel %vm480, %v1490, %v1494
        %v1497 = vshrl.u32 %v1420, 16
        %v1499 = vrot.slane %v1497, 4
        %v1500 = vshll.u32 %v1420, 16
        %v1502 = vrot.slane %v1500, 5
        %v1503 = vor.u32 %v1499, %v1502
        %v1504 = vrot.slane %v1503, 4
        %v1506 = vshll.u32 %v1421, 16
        %v1508 = vrot.slane %v1506, 5
        %v1509 = vsel %vm480, %v1504, %v1508
        %v1511 = vshrl.u32 %v1422, 16
        %v1513 = vrot.slane %v1511, 4
        %v1514 = vshll.u32 %v1422, 16
        %v1516 = vrot.slane %v1514, 5
        %v1517 = vor.u32 %v1513, %v1516
        %v1518 = vrot.slane %v1517, 4
        %v1520 = vshll.u32 %v1423, 16
        %v1522 = vrot.slane %v1520, 5
        %v1523 = vsel %vm480, %v1518, %v1522
        %v1525 = vshrl.u32 %v1424, 16
        %v1527 = vrot.slane %v1525, 4
        %v1528 = vshll.u32 %v1424, 16
        %v1530 = vrot.slane %v1528, 5
        %v1531 = vor.u32 %v1527, %v1530
        %v1532 = vrot.slane %v1531, 4
        %v1534 = vshll.u32 %v1425, 16
        %v1536 = vrot.slane %v1534, 5
        %v1537 = vsel %vm480, %v1532, %v1536
        %s1538 = scalar_lea.vmem [#allocation5], 32
        %v1539 = vld [vmem:[%s1538] sm:$0xf]
        %v1540 = vunpack.c.l.b16 %v1439
        %v1541 = vunpack.c.l.b16 %v1453
        %v1542 = vunpack.c.l.b16 %v1467
        %v1543 = vunpack.c.l.b16 %v1481
        %v1544 = vunpack.c.l.b16 %v1495
        %v1545 = vunpack.c.l.b16 %v1509
        %v1546 = vunpack.c.l.b16 %v1523
        %v1547 = vunpack.c.l.b16 %v1537
        %v1548 = vpack.c.b16 %v1541, %v1540
        %v1549 = vpack.c.b16 %v1543, %v1542
        %v1550 = vpack.c.b16 %v1545, %v1544
        %v1551 = vpack.c.b16 %v1547, %v1546
        %v1553 = vsel %vm280, %v1548, 0
        %v1556 = vsel %vm280, %v1549, 0
        %v1559 = vsel %vm280, %v1550, 0
        %v1562 = vsel %vm280, %v1551, 0
        %v1565 = vsel %vm293, %v1539, 0
        %1567 = vmatprep.subr.bf16.mxu0 0
        %1568 = vmatpush1.bf16.msra.mxu0 %v1565
        %1569 = vmatprep.subr.bf16.mxu0 0
        %1570 = vmatpush1.bf16.msra.mxu0 0
        %1571 = vmatprep.subr.bf16.mxu0 0
        %1572 = vmatpush1.bf16.msra.mxu0 0
        %1573 = vmatprep.subr.bf16.mxu0 0
        %1574 = vmatpush1.bf16.msra.mxu0 0
        %1575 = vmatprep.subr.bf16.mxu0 0
        %1576 = vmatpush1.bf16.msra.mxu0 0
        %1577 = vmatprep.subr.bf16.mxu0 0
        %1578 = vmatpush1.bf16.msra.mxu0 0
        %1579 = vmatprep.subr.bf16.mxu0 0
        %1580 = vmatpush1.bf16.msra.mxu0 0
        %1581 = vmatprep.subr.bf16.mxu0 0
        %1582 = vmatpush1.bf16.msra.mxu0 0
        %1583 = vmatprep.subr.bf16.mxu0 0
        %1584 = vmatpush1.bf16.msra.mxu0 0
        %1585 = vmatprep.subr.bf16.mxu0 0
        %1586 = vmatpush1.bf16.msra.mxu0 0
        %1587 = vmatprep.subr.bf16.mxu0 0
        %1588 = vmatpush1.bf16.msra.mxu0 0
        %1589 = vmatprep.subr.bf16.mxu0 0
        %1590 = vmatpush1.bf16.msra.mxu0 0
        %1591 = vmatprep.subr.bf16.mxu0 0
        %1592 = vmatpush1.bf16.msra.mxu0 0
        %1593 = vmatprep.subr.bf16.mxu0 0
        %1594 = vmatpush1.bf16.msra.mxu0 0
        %1595 = vmatprep.subr.bf16.mxu0 0
        %1596 = vmatpush1.bf16.msra.mxu0 0
        %1597 = vmatprep.subr.bf16.mxu0 0
        %1598 = vmatpush1.bf16.msra.mxu0 0
        %1599 = vmatprep.mubr.bf16.mxu0 0
        %1600 = vmatmul.mubr.bf16.gmra.mrb[0].mxu0 %v1553
        %v1601 = vpop.f32.mrb[0].mxu0
        %v1602 = vadd.f32 0.0, %v1601
        %v1603 = vpop.f32.mrb[0].mxu0
        %v1604 = vpop.f32.mrb[0].mxu0
        %v1605 = vadd.f32 0.0, %v1604
        %v1606 = vpop.f32.mrb[0].mxu0
        %1607 = vmatprep.mubr.bf16.mxu0 0
        %1608 = vmatmul.mubr.bf16.gmra.mrb[0].mxu0 %v1556
        %v1609 = vpop.f32.mrb[0].mxu0
        %v1610 = vadd.f32 0.0, %v1609
        %v1611 = vpop.f32.mrb[0].mxu0
        %v1612 = vpop.f32.mrb[0].mxu0
        %v1613 = vadd.f32 0.0, %v1612
        %v1614 = vpop.f32.mrb[0].mxu0
        %1615 = vmatprep.mubr.bf16.mxu0 0
        %1616 = vmatmul.mubr.bf16.gmra.mrb[0].mxu0 %v1559
        %v1617 = vpop.f32.mrb[0].mxu0
        %v1618 = vadd.f32 0.0, %v1617
        %v1619 = vpop.f32.mrb[0].mxu0
        %v1620 = vpop.f32.mrb[0].mxu0
        %v1621 = vadd.f32 0.0, %v1620
        %v1622 = vpop.f32.mrb[0].mxu0
        %1623 = vmatprep.mubr.bf16.mxu0 0
        %1624 = vmatmul.mubr.bf16.gmra.mrb[0].mxu0 %v1562
        %v1625 = vpop.f32.mrb[0].mxu0
        %v1626 = vadd.f32 0.0, %v1625
        %v1627 = vpop.f32.mrb[0].mxu0
        %v1628 = vpop.f32.mrb[0].mxu0
        %v1629 = vadd.f32 0.0, %v1628
        %v1630 = vpop.f32.mrb[0].mxu0
        %1631 = vdwg.mxu0
        %v1632 = vadd.f32 %v1402, %v1602
        %v1633 = vadd.f32 %v1403, %v1605
        %v1634 = vadd.f32 %v1404, %v1610
        %v1635 = vadd.f32 %v1405, %v1613
        %v1636 = vadd.f32 %v1406, %v1618
        %v1637 = vadd.f32 %v1407, %v1621
        %v1638 = vadd.f32 %v1408, %v1626
        %v1639 = vadd.f32 %v1409, %v1629
        %v1640 = vld [vmem:[#allocation7] sm:$0x1]
        %v1642 = vlaneseq
        %v1643 = vshrl.u32 %v1642, 7
        %v1644 = vsub.s32 0, %v1643
        %v1645 = vrot.slane %v1640, %v1644
        %v1647 = vadd.f32 %v1632, %v1645
        %v1648 = vadd.f32 %v1633, %v1645
        %v1649 = vadd.f32 %v1634, %v1645
        %v1650 = vadd.f32 %v1635, %v1645
        %v1651 = vadd.f32 %v1636, %v1645
        %v1652 = vadd.f32 %v1637, %v1645
        %v1653 = vadd.f32 %v1638, %v1645
        %v1654 = vadd.f32 %v1639, %v1645
        %v1655 = vmax.f32 %v1647, 0.0
        %v1656 = vmax.f32 %v1648, 0.0
        %v1657 = vmax.f32 %v1649, 0.0
        %v1658 = vmax.f32 %v1650, 0.0
        %v1659 = vmax.f32 %v1651, 0.0
        %v1660 = vmax.f32 %v1652, 0.0
        %v1661 = vmax.f32 %v1653, 0.0
        %v1662 = vmax.f32 %v1654, 0.0
        %v1663 = vpack.c.bf16 %v1655, %v1655
        %v1664 = vpack.c.bf16 %v1656, %v1656
        %v1665 = vpack.c.bf16 %v1657, %v1657
        %v1666 = vpack.c.bf16 %v1658, %v1658
        %v1667 = vpack.c.bf16 %v1659, %v1659
        %v1668 = vpack.c.bf16 %v1660, %v1660
        %v1669 = vpack.c.bf16 %v1661, %v1661
        %v1670 = vpack.c.bf16 %v1662, %v1662
        %vm1671 = vcmask 60416
        %1672 = vst.msk [vmem:[%s230] sm:$0xf] %vm1671, %v1663
        %1673 = vst.msk [vmem:[%s230 + $0x4] sm:$0xf] %vm1671, %v1664
        %1674 = vst.msk [vmem:[%s230 + $0x8] sm:$0xf] %vm1671, %v1665
        %1675 = vst.msk [vmem:[%s230 + $0xc] sm:$0xf] %vm1671, %v1666
        %1676 = vst.msk [vmem:[%s230 + $0x10] sm:$0xf] %vm1671, %v1667
        %1677 = vst.msk [vmem:[%s230 + $0x14] sm:$0xf] %vm1671, %v1668
        %1678 = vst.msk [vmem:[%s230 + $0x18] sm:$0xf] %vm1671, %v1669
        %1679 = vst.msk [vmem:[%s230 + $0x1c] sm:$0xf] %vm1671, %v1670
        %s1680 = sand.u32 %s111, 1
        %s1681 = scalar_lea.sflag [#allocation4], %s1680
        %s1682 = sand.u32 %s111, 1
        %s1683 = smul.addr %s1682, 32
        %s1684 = scalar_lea.vmem [#allocation8], %s1683
        // Predicated region
        $region45: #{_lambda_.2} parent=31 // pred_check
          %p1685 = pneg %p121
        $region46: #{_lambda_.2} parent=31 // pred_check_branch
          %1687 = sbr.rel (%p1685) target = $region48
        $region47: #{_lambda_.2} parent=31 // pred_region
          %s1688 = smul.u32 8, %s26
          %s1690 = ssub.s32 512, 512
          %1691 = vsyncadd %s1681, %s1690
          %s1692 = smul.addr %s25, 8
          %s1693 = sadd.s32 %s1688, %s1692
          %s1694 = smul.addr %s1693, 64
          %s1695 = scalar_lea.hbm %s3, %s1694
          %s1696 = sshll.u32 %s1684, 4
          %s1697 = int_to_ptr.vmem [resolvable:$true] %s1696
          %1702 = dma.vmem_to_hbm [thread:$0]  %s1697, 512, %s1695, %s1681, 64, 64, 4
        $region48: #{_lambda_.2} parent=31 // pred_fallthru
          _
      $region32: #{_lambda_.2} parent=5 // pred_fallthru
        _
      %p1703 = scmp.le.s32.totalorder 2, %s16
      // Predicated region
      $region49: #{_lambda_.2} parent=5 // pred_check
        %p1704 = pneg %p1703
      $region50: #{_lambda_.2} parent=5 // pred_check_branch
        %1706 = sbr.rel (%p1704) target = $region52
      $region51: #{_lambda_.2} parent=5 // pred_region
        %s1707 = ssub.s32 %s16, 2
        // Predicated region
        $region53: #{_lambda_.2} parent=51 // pred_check
          %p1708 = pneg %p127
        $region54: #{_lambda_.2} parent=51 // pred_check_branch
          %1710 = sbr.rel (%p1708) target = $region56
        $region55: #{_lambda_.2} parent=51 // pred_region
          %s1711 = sand.u32 %s112, 1
          %s1712 = scalar_lea.sflag [#allocation4], %s1711
          %s1713 = sand.u32 %s112, 1
          %s1714 = smul.addr %s1713, 32
          %s1715 = scalar_lea.vmem [#allocation8], %s1714
          %1716 = dma.done %s1712, 512
        $region56: #{_lambda_.2} parent=51 // pred_fallthru
          _
      $region52: #{_lambda_.2} parent=5 // pred_fallthru
        _
    $region6: #{_lambda_.2} parent=1 // loop_footer
      %s20 = sadd.s32 1, %s16
    $region7: #{_lambda_.2} parent=1 // loop_footer_branch
      %15 = sbr.rel target = $region3
    $region8: #{_lambda_.2} parent=1 // loop_exit
      _
    %1717 = vsyncpa [#allocation3], 1
    %s1718 = scalar_lea.sflag [#allocation3], 1
    %1719 = vsyncpa %s1718, 1
    %1720 = vsyncpa [#allocation6], 1
    %1721 = vsyncpa [#allocation4], 1
    %s1722 = scalar_lea.sflag [#allocation4], 1
    %1723 = vsyncpa %s1722, 1

// kernel: _lambda_.3
$region0: #{_lambda_.3}
  #allocation0 [shape = 'u32[]', space=smem, size = 0x4, offset = 0x4, fixed_abs, tag = 'smem constant byte address 0x4 - core index']
  #allocation1 [shape = 'u32[144,128]{1,0:T(1,128)}', space=vmem, size = 0x12000, scoped, tag = 'internal scratch']
  %s0 = inlined_call_operand.hbm [shape: bf16[2,10,10,8], index: 0, kind: input, shape index: {}]
  %s1 = inlined_call_operand.hbm [shape: bf16[3,3,8,8], index: 1, kind: input, shape index: {}]
  %s2 = inlined_call_operand.hbm [shape: f32[1,8], index: 2, kind: input, shape index: {}]
  %s3 = inlined_call_operand.hbm [shape: bf16[2,8,8,8], index: 3, kind: input, shape index: {}]
  %s4 = inlined_call_operand.hbm [shape: bf16[8,8], index: 4, kind: input, shape index: {}]
  %s5 = inlined_call_operand.hbm [shape: f32[1,8], index: 5, kind: input, shape index: {}]
  %s6 = inlined_call_operand.hbm [shape: f32[2,8,8,8], index: 6, kind: output, shape index: {}]
  %s7 = sld [smem:[#allocation0]]
  $region81: #{_lambda_.3} parent=0
    _
  %s9 = ssub.s32 1, %s7
  %s10 = scalar_select 0, %s9, %s7
  $region1: #{_lambda_.3} parent=0
    #allocation2 [shape = 'u8[81920]{0}', space=vmem, size = 0x14000, scoped, tag = 'input window, operand 0']
    #allocation3 [shape = 's32[2]{0}', space=sflag, size = 0x8, scoped, tag = 'scoped memory for _lambda_.3']
    #allocation4 [shape = 's32[2]{0}', space=sflag, size = 0x8, scoped, tag = 'scoped memory for _lambda_.3']
    #allocation5 [shape = 'u8[18432]{0}', space=vmem, size = 0x4800, scoped, tag = 'input window, operand 1, single buffered']
    #allocation6 [shape = 's32[1]{0}', space=sflag, size = 0x4, scoped, tag = 'scoped memory for _lambda_.3']
    #allocation7 [shape = 'u8[512]{0}', space=vmem, size = 0x400, scoped, tag = 'input window, operand 2, single buffered']
    #allocation8 [shape = 'u8[32768]{0}', space=vmem, size = 0x8000, scoped, tag = 'input window, operand 3']
    #allocation9 [shape = 's32[2]{0}', space=sflag, size = 0x8, scoped, tag = 'scoped memory for _lambda_.3']
    #allocation10 [shape = 'u8[2048]{0}', space=vmem, size = 0x800, scoped, tag = 'input window, operand 4, single buffered']
    #allocation11 [shape = 'u8[512]{0}', space=vmem, size = 0x400, scoped, tag = 'input window, operand 5, single buffered']
    #allocation12 [shape = 's32[1]{0}', space=sflag, size = 0x4, scoped, tag = 'scoped memory for _lambda_.3']
    #allocation13 [shape = 'u8[65536]{0}', space=vmem, size = 0x10000, scoped, tag = 'output window, operand 0']
    %11 = vsyncpa [#allocation3], 0
    %s12 = scalar_lea.sflag [#allocation3], 1
    %13 = vsyncpa %s12, 0
    %14 = vsyncpa [#allocation6], 0
    %15 = vsyncpa [#allocation9], 0
    %s16 = scalar_lea.sflag [#allocation9], 1
    %17 = vsyncpa %s16, 0
    %18 = vsyncpa [#allocation12], 0
    %19 = vsyncpa [#allocation4], 0
    %s20 = scalar_lea.sflag [#allocation4], 1
    %21 = vsyncpa %s20, 0
    loop: start=0, step=1, limit=4
    $region2: #{_lambda_.3} parent=1 // loop_pre_header
      _
    $region3: #{_lambda_.3} parent=1 // loop_header
      %s23 = sphi 0, %s27
      %p24 = scmp.ge.s32.totalorder %s23, 4
      %s30 = sphi 0, %s42
      %s31 = sphi 0, %s38
      %s32 = sphi 0, %s30
      %s33 = sphi 0, %s31
      %s34 = sphi 0, %s32
      %s35 = sphi 0, %s33
      %s45 = sphi 0, %s47
      %s48 = sphi 0, %s45
      %s49 = sphi 0, %s48
      %s65 = sphi 0, %s49
      %s69 = sphi 0, %s69
      %s71 = sphi 0, %s69
      %s72 = sphi 0, %s71
      %s86 = sphi 0, %s72
      %s90 = sphi 0, %s90
      %s92 = sphi 0, %s90
      %s93 = sphi 0, %s92
      %s107 = sphi 0, %s93
      %s115 = sphi 0, %s117
      %s118 = sphi 0, %s115
      %s119 = sphi 0, %s118
      %s135 = sphi 0, %s119
      %s139 = sphi 0, %s139
      %s141 = sphi 0, %s139
      %s142 = sphi 0, %s141
      %s156 = sphi 0, %s142
      %s160 = sphi 0, %s160
      %s162 = sphi 0, %s160
      %s163 = sphi 0, %s162
      %s177 = sphi 0, %s163
      %s185 = sphi 0, %s187
      %s188 = sphi 0, %s185
      %s189 = sphi 0, %s188
      %s205 = sphi 0, %s189
    $region4: #{_lambda_.3} parent=1 // loop_header_branch
      %26 = sbr.rel (%p24) target = $region8
    $region5: #{_lambda_.3} parent=1 // loop_body
      %s28 = ssub.s32 %s23, 1
      %s29 = ssub.s32 %s23, 2
      %s36 = sadd.s32 1, %s31
      %p37 = scmp.ge.s32.totalorder %s36, 1
      %s38 = scalar_select %p37, 0, %s36
      %s39 = sadd.s32 1, %s30
      %s40 = scalar_select %p37, %s39, %s30
      %p41 = scmp.ge.s32.totalorder %s40, 2
      %s42 = scalar_select %p41, 0, %s40
      %s43 = ssub.s32 %s30, %s42
      %p44 = scmp.eq.s32.totalorder %s43, 0
      %s46 = sadd.s32 %s45, 1
      %s47 = scalar_select %p44, %s45, %s46
      %p50 = pneg %p44
      %p51 = scmp.eq.s32.totalorder %s23, 1
      %p52 = por %p50, %p51
      %p53 = scmp.ne.s32.totalorder %s45, %s48
      %p54 = scmp.eq.s32.totalorder %s23, 0
      %p55 = por %p53, %p54
      %p56 = scmp.ne.s32.totalorder %s45, %s48
      %p57 = scmp.eq.s32.totalorder %s28, 1
      %p58 = por %p56, %p57
      %p59 = scmp.ne.s32.totalorder %s48, %s49
      %p60 = scmp.eq.s32.totalorder %s28, 0
      %p61 = por %p59, %p60
      %p62 = scmp.ne.s32.totalorder %s48, %s49
      %p63 = scmp.eq.s32.totalorder %s29, 1
      %p64 = por %p62, %p63
      %p66 = scmp.ne.s32.totalorder %s49, %s65
      %p67 = scmp.eq.s32.totalorder %s29, 0
      %p68 = por %p66, %p67
      %s70 = sadd.s32 %s69, 1
      %p73 = scmp.eq.s32.totalorder %s23, 1
      %p74 = scmp.ne.s32.totalorder %s69, %s71
      %p75 = scmp.eq.s32.totalorder %s23, 0
      %p76 = por %p74, %p75
      %p77 = scmp.ne.s32.totalorder %s69, %s71
      %p78 = scmp.eq.s32.totalorder %s28, 1
      %p79 = por %p77, %p78
      %p80 = scmp.ne.s32.totalorder %s71, %s72
      %p81 = scmp.eq.s32.totalorder %s28, 0
      %p82 = por %p80, %p81
      %p83 = scmp.ne.s32.totalorder %s71, %s72
      %p84 = scmp.eq.s32.totalorder %s29, 1
      %p85 = por %p83, %p84
      %p87 = scmp.ne.s32.totalorder %s72, %s86
      %p88 = scmp.eq.s32.totalorder %s29, 0
      %p89 = por %p87, %p88
      %s91 = sadd.s32 %s90, 1
      %p94 = scmp.eq.s32.totalorder %s23, 1
      %p95 = scmp.ne.s32.totalorder %s90, %s92
      %p96 = scmp.eq.s32.totalorder %s23, 0
      %p97 = por %p95, %p96
      %p98 = scmp.ne.s32.totalorder %s90, %s92
      %p99 = scmp.eq.s32.totalorder %s28, 1
      %p100 = por %p98, %p99
      %p101 = scmp.ne.s32.totalorder %s92, %s93
      %p102 = scmp.eq.s32.totalorder %s28, 0
      %p103 = por %p101, %p102
      %p104 = scmp.ne.s32.totalorder %s92, %s93
      %p105 = scmp.eq.s32.totalorder %s29, 1
      %p106 = por %p104, %p105
      %p108 = scmp.ne.s32.totalorder %s93, %s107
      %p109 = scmp.eq.s32.totalorder %s29, 0
      %p110 = por %p108, %p109
      %s111 = ssub.s32 %s30, %s42
      %s112 = ssub.s32 %s31, %s38
      %s113 = sor.u32 %s111, %s112
      %p114 = scmp.eq.s32.totalorder %s113, 0
      %s116 = sadd.s32 %s115, 1
      %s117 = scalar_select %p114, %s115, %s116
      %p120 = pneg %p114
      %p121 = scmp.eq.s32.totalorder %s23, 1
      %p122 = por %p120, %p121
      %p123 = scmp.ne.s32.totalorder %s115, %s118
      %p124 = scmp.eq.s32.totalorder %s23, 0
      %p125 = por %p123, %p124
      %p126 = scmp.ne.s32.totalorder %s115, %s118
      %p127 = scmp.eq.s32.totalorder %s28, 1
      %p128 = por %p126, %p127
      %p129 = scmp.ne.s32.totalorder %s118, %s119
      %p130 = scmp.eq.s32.totalorder %s28, 0
      %p131 = por %p129, %p130
      %p132 = scmp.ne.s32.totalorder %s118, %s119
      %p133 = scmp.eq.s32.totalorder %s29, 1
      %p134 = por %p132, %p133
      %p136 = scmp.ne.s32.totalorder %s119, %s135
      %p137 = scmp.eq.s32.totalorder %s29, 0
      %p138 = por %p136, %p137
      %s140 = sadd.s32 %s139, 1
      %p143 = scmp.eq.s32.totalorder %s23, 1
      %p144 = scmp.ne.s32.totalorder %s139, %s141
      %p145 = scmp.eq.s32.totalorder %s23, 0
      %p146 = por %p144, %p145
      %p147 = scmp.ne.s32.totalorder %s139, %s141
      %p148 = scmp.eq.s32.totalorder %s28, 1
      %p149 = por %p147, %p148
      %p150 = scmp.ne.s32.totalorder %s141, %s142
      %p151 = scmp.eq.s32.totalorder %s28, 0
      %p152 = por %p150, %p151
      %p153 = scmp.ne.s32.totalorder %s141, %s142
      %p154 = scmp.eq.s32.totalorder %s29, 1
      %p155 = por %p153, %p154
      %p157 = scmp.ne.s32.totalorder %s142, %s156
      %p158 = scmp.eq.s32.totalorder %s29, 0
      %p159 = por %p157, %p158
      %s161 = sadd.s32 %s160, 1
      %p164 = scmp.eq.s32.totalorder %s23, 1
      %p165 = scmp.ne.s32.totalorder %s160, %s162
      %p166 = scmp.eq.s32.totalorder %s23, 0
      %p167 = por %p165, %p166
      %p168 = scmp.ne.s32.totalorder %s160, %s162
      %p169 = scmp.eq.s32.totalorder %s28, 1
      %p170 = por %p168, %p169
      %p171 = scmp.ne.s32.totalorder %s162, %s163
      %p172 = scmp.eq.s32.totalorder %s28, 0
      %p173 = por %p171, %p172
      %p174 = scmp.ne.s32.totalorder %s162, %s163
      %p175 = scmp.eq.s32.totalorder %s29, 1
      %p176 = por %p174, %p175
      %p178 = scmp.ne.s32.totalorder %s163, %s177
      %p179 = scmp.eq.s32.totalorder %s29, 0
      %p180 = por %p178, %p179
      %s181 = ssub.s32 %s30, %s42
      %s182 = ssub.s32 %s31, %s38
      %s183 = sor.u32 %s181, %s182
      %p184 = scmp.eq.s32.totalorder %s183, 0
      %s186 = sadd.s32 %s185, 1
      %s187 = scalar_select %p184, %s185, %s186
      %p190 = pneg %p184
      %p191 = scmp.eq.s32.totalorder %s23, 1
      %p192 = por %p190, %p191
      %p193 = scmp.ne.s32.totalorder %s185, %s188
      %p194 = scmp.eq.s32.totalorder %s23, 0
      %p195 = por %p193, %p194
      %p196 = scmp.ne.s32.totalorder %s185, %s188
      %p197 = scmp.eq.s32.totalorder %s28, 1
      %p198 = por %p196, %p197
      %p199 = scmp.ne.s32.totalorder %s188, %s189
      %p200 = scmp.eq.s32.totalorder %s28, 0
      %p201 = por %p199, %p200
      %p202 = scmp.ne.s32.totalorder %s188, %s189
      %p203 = scmp.eq.s32.totalorder %s29, 1
      %p204 = por %p202, %p203
      %p206 = scmp.ne.s32.totalorder %s189, %s205
      %p207 = scmp.eq.s32.totalorder %s29, 0
      %p208 = por %p206, %p207
      %p209 = scmp.le.s32.totalorder 1, %s23
      %p210 = scmp.lt.s32.totalorder %s23, 3
      %p211 = pnand %p209, %p210
      %p212 = pneg %p211
      // Predicated region
      $region9: #{_lambda_.3} parent=5 // pred_check
        _
      $region10: #{_lambda_.3} parent=5 // pred_check_branch
        %214 = sbr.rel (%p211) target = $region12
      $region11: #{_lambda_.3} parent=5 // pred_region
        %s215 = ssub.s32 %s23, 1
        // Predicated region
        $region13: #{_lambda_.3} parent=11 // pred_check
          %p216 = pneg %p82
        $region14: #{_lambda_.3} parent=11 // pred_check_branch
          %218 = sbr.rel (%p216) target = $region16
        $region15: #{_lambda_.3} parent=11 // pred_region
          %s220 = ssub.s32 576, 576
          %221 = vsyncadd [#allocation6], %s220
          %s222 = sshll.u32 [#allocation5], 4
          %s223 = int_to_ptr.vmem [resolvable:$true] %s222
          %228 = dma.hbm_to_vmem [thread:$0]  %s1, 576, %s223, [#allocation6], 64, 64, 4
        $region16: #{_lambda_.3} parent=11 // pred_fallthru
          _
        // Predicated region
        $region17: #{_lambda_.3} parent=11 // pred_check
          %p229 = pneg %p103
        $region18: #{_lambda_.3} parent=11 // pred_check_branch
          %231 = sbr.rel (%p229) target = $region20
        $region19: #{_lambda_.3} parent=11 // pred_region
          %s233 = ssub.s32 16, 16
          %234 = vsyncadd [#allocation6], %s233
          %s236 = sshll.u32 [#allocation7], 4
          %s237 = int_to_ptr.vmem [resolvable:$true] %s236
          %239 = dma.hbm_to_vmem [thread:$0]  %s2, 16, %s237, [#allocation6]
        $region20: #{_lambda_.3} parent=11 // pred_fallthru
          _
        // Predicated region
        $region21: #{_lambda_.3} parent=11 // pred_check
          %p240 = pneg %p152
        $region22: #{_lambda_.3} parent=11 // pred_check_branch
          %242 = sbr.rel (%p240) target = $region24
        $region23: #{_lambda_.3} parent=11 // pred_region
          %s244 = ssub.s32 64, 64
          %245 = vsyncadd [#allocation9], %s244
          %s247 = sshll.u32 [#allocation10], 4
          %s248 = int_to_ptr.vmem [resolvable:$true] %s247
          %250 = dma.hbm_to_vmem [thread:$0]  %s4, 64, %s248, [#allocation9]
        $region24: #{_lambda_.3} parent=11 // pred_fallthru
          _
        // Predicated region
        $region25: #{_lambda_.3} parent=11 // pred_check
          %p251 = pneg %p173
        $region26: #{_lambda_.3} parent=11 // pred_check_branch
          %253 = sbr.rel (%p251) target = $region28
        $region27: #{_lambda_.3} parent=11 // pred_region
          %s255 = ssub.s32 16, 16
          %256 = vsyncadd [#allocation12], %s255
          %s258 = sshll.u32 [#allocation11], 4
          %s259 = int_to_ptr.vmem [resolvable:$true] %s258
          %261 = dma.hbm_to_vmem [thread:$0]  %s5, 16, %s259, [#allocation12]
        $region28: #{_lambda_.3} parent=11 // pred_fallthru
          _
      $region12: #{_lambda_.3} parent=5 // pred_fallthru
        _
      %p262 = scmp.lt.s32.totalorder %s23, 2
      // Predicated region
      $region29: #{_lambda_.3} parent=5 // pred_check
        %p263 = pneg %p262
      $region30: #{_lambda_.3} parent=5 // pred_check_branch
        %265 = sbr.rel (%p263) target = $region32
      $region31: #{_lambda_.3} parent=5 // pred_region
        // Predicated region
        $region33: #{_lambda_.3} parent=31 // pred_check
          %p266 = pneg %p55
        $region34: #{_lambda_.3} parent=31 // pred_check_branch
          %268 = sbr.rel (%p266) target = $region36
        $region35: #{_lambda_.3} parent=31 // pred_region
          %s269 = sand.u32 %s45, 1
          %s270 = scalar_lea.sflag [#allocation3], %s269
          %s271 = sand.u32 %s45, 1
          %s272 = smul.addr %s271, 80
          %s273 = scalar_lea.vmem [#allocation2], %s272
          %s275 = ssub.s32 1280, 1280
          %276 = vsyncadd %s270, %s275
          %s277 = smul.addr %s30, 20
          %s278 = smul.addr %s277, 64
          %s279 = scalar_lea.hbm %s0, %s278
          %s280 = sshll.u32 %s273, 4
          %s281 = int_to_ptr.vmem [resolvable:$true] %s280
          %286 = dma.hbm_to_vmem [thread:$0]  %s279, 1280, %s281, %s270, 64, 64, 4
        $region36: #{_lambda_.3} parent=31 // pred_fallthru
          _
        // Predicated region
        $region37: #{_lambda_.3} parent=31 // pred_check
          %p287 = pneg %p125
        $region38: #{_lambda_.3} parent=31 // pred_check_branch
          %289 = sbr.rel (%p287) target = $region40
        $region39: #{_lambda_.3} parent=31 // pred_region
          %s290 = sand.u32 %s23, 1
          %s291 = scalar_lea.sflag [#allocation9], %s290
          %s292 = sand.u32 %s115, 1
          %s293 = smul.addr %s292, 32
          %s294 = scalar_lea.vmem [#allocation8], %s293
          %s295 = smul.u32 8, %s31
          %s297 = ssub.s32 512, 512
          %298 = vsyncadd %s291, %s297
          %s299 = smul.addr %s30, 8
          %s300 = sadd.s32 %s295, %s299
          %s301 = smul.addr %s300, 64
          %s302 = scalar_lea.hbm %s3, %s301
          %s303 = sshll.u32 %s294, 4
          %s304 = int_to_ptr.vmem [resolvable:$true] %s303
          %309 = dma.hbm_to_vmem [thread:$0]  %s302, 512, %s304, %s291, 64, 64, 4
        $region40: #{_lambda_.3} parent=31 // pred_fallthru
          _
      $region32: #{_lambda_.3} parent=5 // pred_fallthru
        _
      %p310 = scmp.le.s32.totalorder 1, %s23
      %p311 = scmp.lt.s32.totalorder %s23, 3
      %p312 = pnand %p310, %p311
      %p313 = pneg %p312
      // Predicated region
      $region41: #{_lambda_.3} parent=5 // pred_check
        _
      $region42: #{_lambda_.3} parent=5 // pred_check_branch
        %315 = sbr.rel (%p312) target = $region44
      $region43: #{_lambda_.3} parent=5 // pred_region
        %s316 = ssub.s32 %s23, 1
        %s317 = sand.u32 %s48, 1
        %s318 = scalar_lea.sflag [#allocation3], %s317
        %s319 = sand.u32 %s48, 1
        %s320 = smul.addr %s319, 80
        %s321 = scalar_lea.vmem [#allocation2], %s320
        // Predicated region
        $region45: #{_lambda_.3} parent=43 // pred_check
          %p322 = pneg %p61
        $region46: #{_lambda_.3} parent=43 // pred_check_branch
          %324 = sbr.rel (%p322) target = $region48
        $region47: #{_lambda_.3} parent=43 // pred_region
          %325 = dma.done %s318, 1280
        $region48: #{_lambda_.3} parent=43 // pred_fallthru
          _
        // Predicated region
        $region49: #{_lambda_.3} parent=43 // pred_check
          %p326 = pneg %p82
        $region50: #{_lambda_.3} parent=43 // pred_check_branch
          %328 = sbr.rel (%p326) target = $region52
        $region51: #{_lambda_.3} parent=43 // pred_region
          %329 = dma.done [#allocation6], 576
        $region52: #{_lambda_.3} parent=43 // pred_fallthru
          _
        // Predicated region
        $region53: #{_lambda_.3} parent=43 // pred_check
          %p330 = pneg %p103
        $region54: #{_lambda_.3} parent=43 // pred_check_branch
          %332 = sbr.rel (%p330) target = $region56
        $region55: #{_lambda_.3} parent=43 // pred_region
          %333 = dma.done [#allocation6], 16
        $region56: #{_lambda_.3} parent=43 // pred_fallthru
          _
        %s334 = sand.u32 %s28, 1
        %s335 = scalar_lea.sflag [#allocation9], %s334
        %s336 = sand.u32 %s118, 1
        %s337 = smul.addr %s336, 32
        %s338 = scalar_lea.vmem [#allocation8], %s337
        // Predicated region
        $region57: #{_lambda_.3} parent=43 // pred_check
          %p339 = pneg %p131
        $region58: #{_lambda_.3} parent=43 // pred_check_branch
          %341 = sbr.rel (%p339) target = $region60
        $region59: #{_lambda_.3} parent=43 // pred_region
          %342 = dma.done %s335, 512
        $region60: #{_lambda_.3} parent=43 // pred_fallthru
          _
        // Predicated region
        $region61: #{_lambda_.3} parent=43 // pred_check
          %p343 = pneg %p152
        $region62: #{_lambda_.3} parent=43 // pred_check_branch
          %345 = sbr.rel (%p343) target = $region64
        $region63: #{_lambda_.3} parent=43 // pred_region
          %346 = dma.done [#allocation9], 64
        $region64: #{_lambda_.3} parent=43 // pred_fallthru
          _
        // Predicated region
        $region65: #{_lambda_.3} parent=43 // pred_check
          %p347 = pneg %p173
        $region66: #{_lambda_.3} parent=43 // pred_check_branch
          %349 = sbr.rel (%p347) target = $region68
        $region67: #{_lambda_.3} parent=43 // pred_region
          %350 = dma.done [#allocation12], 16
        $region68: #{_lambda_.3} parent=43 // pred_fallthru
          _
        %s351 = sand.u32 %s48, 1
        %s352 = scalar_lea.sflag [#allocation3], %s351
        %s353 = sand.u32 %s48, 1
        %s354 = smul.addr %s353, 80
        %s355 = scalar_lea.vmem [#allocation2], %s354
        %p356 = pneg %p61
        %p357 = pneg %p58
        %p358 = pneg %p82
        %p359 = pneg %p79
        %p360 = pneg %p103
        %p361 = pneg %p100
        %s362 = sand.u32 %s28, 1
        %s363 = scalar_lea.sflag [#allocation9], %s362
        %s364 = sand.u32 %s118, 1
        %s365 = smul.addr %s364, 32
        %s366 = scalar_lea.vmem [#allocation8], %s365
        %p367 = pneg %p131
        %p368 = pneg %p128
        %p369 = pneg %p152
        %p370 = pneg %p149
        %p371 = pneg %p173
        %p372 = pneg %p170
        %p373 = pneg %p201
        %p374 = pneg %p198
        %s375 = sand.u32 %s188, 1
        %s376 = scalar_lea.sflag [#allocation4], %s375
        %s377 = sand.u32 %s188, 1
        %s378 = smul.addr %s377, 64
        %s379 = scalar_lea.vmem [#allocation13], %s378
        %s380 = smul.u32 8, %s33
        %s381 = smul.u32 8, %s33
        %s383 = smul.u32 %s33, 8
        %s384 = smul.u32 %s383, 2
        %s385 = smul.addr %s384, 4
        %s386 = scalar_lea.vmem %s321, %s385 [#allocation2]
        %v387 = vld [vmem:[%s386] sm:$0xf]
        %v388 = vld [vmem:[%s386 + $0x8] sm:$0xf]
        %v389 = vld [vmem:[%s386 + $0x10] sm:$0xf]
        %v390 = vld [vmem:[%s386 + $0x18] sm:$0xf]
        %v391 = vld [vmem:[%s386 + $0x20] sm:$0xf]
        %v392 = vld [vmem:[%s386 + $0x28] sm:$0xf]
        %v393 = vld [vmem:[%s386 + $0x30] sm:$0xf]
        %v394 = vld [vmem:[%s386 + $0x38] sm:$0xf]
        %v395 = vld [vmem:[#allocation5] sm:$0xf]
        %v396 = vld [vmem:[%s386 + $0x4] sm:$0x1]
        %v397 = vld [vmem:[%s386 + $0xc] sm:$0x1]
        %v398 = vld [vmem:[%s386 + $0x14] sm:$0x1]
        %v399 = vld [vmem:[%s386 + $0x1c] sm:$0x1]
        %v400 = vld [vmem:[%s386 + $0x24] sm:$0x1]
        %v401 = vld [vmem:[%s386 + $0x2c] sm:$0x1]
        %v402 = vld [vmem:[%s386 + $0x34] sm:$0x1]
        %v403 = vld [vmem:[%s386 + $0x3c] sm:$0x1]
        %vm404 = vsmask.f32 3328
        %vm405 = vsmask.f32 7440
        %vm406 = vmor %vm404, %vm405
        %v408 = vshrl.u32 %v387, 16
        %v410 = vrot.slane %v408, 4
        %v411 = vshll.u32 %v387, 16
        %v413 = vrot.slane %v411, 5
        %v414 = vor.u32 %v410, %v413
        %v415 = vrot.slane %v414, 4
        %v417 = vshll.u32 %v396, 16
        %v419 = vrot.slane %v417, 5
        %v420 = vsel %vm406, %v415, %v419
        %v422 = vshrl.u32 %v388, 16
        %v424 = vrot.slane %v422, 4
        %v425 = vshll.u32 %v388, 16
        %v427 = vrot.slane %v425, 5
        %v428 = vor.u32 %v424, %v427
        %v429 = vrot.slane %v428, 4
        %v431 = vshll.u32 %v397, 16
        %v433 = vrot.slane %v431, 5
        %v434 = vsel %vm406, %v429, %v433
        %v436 = vshrl.u32 %v389, 16
        %v438 = vrot.slane %v436, 4
        %v439 = vshll.u32 %v389, 16
        %v441 = vrot.slane %v439, 5
        %v442 = vor.u32 %v438, %v441
        %v443 = vrot.slane %v442, 4
        %v445 = vshll.u32 %v398, 16
        %v447 = vrot.slane %v445, 5
        %v448 = vsel %vm406, %v443, %v447
        %v450 = vshrl.u32 %v390, 16
        %v452 = vrot.slane %v450, 4
        %v453 = vshll.u32 %v390, 16
        %v455 = vrot.slane %v453, 5
        %v456 = vor.u32 %v452, %v455
        %v457 = vrot.slane %v456, 4
        %v459 = vshll.u32 %v399, 16
        %v461 = vrot.slane %v459, 5
        %v462 = vsel %vm406, %v457, %v461
        %v464 = vshrl.u32 %v391, 16
        %v466 = vrot.slane %v464, 4
        %v467 = vshll.u32 %v391, 16
        %v469 = vrot.slane %v467, 5
        %v470 = vor.u32 %v466, %v469
        %v471 = vrot.slane %v470, 4
        %v473 = vshll.u32 %v400, 16
        %v475 = vrot.slane %v473, 5
        %v476 = vsel %vm406, %v471, %v475
        %v478 = vshrl.u32 %v392, 16
        %v480 = vrot.slane %v478, 4
        %v481 = vshll.u32 %v392, 16
        %v483 = vrot.slane %v481, 5
        %v484 = vor.u32 %v480, %v483
        %v485 = vrot.slane %v484, 4
        %v487 = vshll.u32 %v401, 16
        %v489 = vrot.slane %v487, 5
        %v490 = vsel %vm406, %v485, %v489
        %v492 = vshrl.u32 %v393, 16
        %v494 = vrot.slane %v492, 4
        %v495 = vshll.u32 %v393, 16
        %v497 = vrot.slane %v495, 5
        %v498 = vor.u32 %v494, %v497
        %v499 = vrot.slane %v498, 4
        %v501 = vshll.u32 %v402, 16
        %v503 = vrot.slane %v501, 5
        %v504 = vsel %vm406, %v499, %v503
        %v506 = vshrl.u32 %v394, 16
        %v508 = vrot.slane %v506, 4
        %v509 = vshll.u32 %v394, 16
        %v511 = vrot.slane %v509, 5
        %v512 = vor.u32 %v508, %v511
        %v513 = vrot.slane %v512, 4
        %v515 = vshll.u32 %v403, 16
        %v517 = vrot.slane %v515, 5
        %v518 = vsel %vm406, %v513, %v517
        %s519 = scalar_lea.vmem [#allocation5], 4
        %v520 = vld [vmem:[%s519] sm:$0xf]
        %v521 = vunpack.c.l.b16 %v420
        %v522 = vunpack.c.l.b16 %v434
        %v523 = vunpack.c.l.b16 %v448
        %v524 = vunpack.c.l.b16 %v462
        %v525 = vunpack.c.l.b16 %v476
        %v526 = vunpack.c.l.b16 %v490
        %v527 = vunpack.c.l.b16 %v504
        %v528 = vunpack.c.l.b16 %v518
        %v529 = vpack.c.b16 %v522, %v521
        %v530 = vpack.c.b16 %v524, %v523
        %v531 = vpack.c.b16 %v526, %v525
        %v532 = vpack.c.b16 %v528, %v527
        %vm533 = vcmask 64512
        %v535 = vsel %vm533, %v529, 0
        %v538 = vsel %vm533, %v530, 0
        %v541 = vsel %vm533, %v531, 0
        %v544 = vsel %vm533, %v532, 0
        %vm546 = vcmask 1043456
        %v548 = vsel %vm546, %v520, 0
        %550 = vmatprep.subr.bf16.mxu0 0
        %551 = vmatpush1.bf16.msra.mxu0 %v548
        %552 = vmatprep.subr.bf16.mxu0 0
        %553 = vmatpush1.bf16.msra.mxu0 0
        %554 = vmatprep.subr.bf16.mxu0 0
        %555 = vmatpush1.bf16.msra.mxu0 0
        %556 = vmatprep.subr.bf16.mxu0 0
        %557 = vmatpush1.bf16.msra.mxu0 0
        %558 = vmatprep.subr.bf16.mxu0 0
        %559 = vmatpush1.bf16.msra.mxu0 0
        %560 = vmatprep.subr.bf16.mxu0 0
        %561 = vmatpush1.bf16.msra.mxu0 0
        %562 = vmatprep.subr.bf16.mxu0 0
        %563 = vmatpush1.bf16.msra.mxu0 0
        %564 = vmatprep.subr.bf16.mxu0 0
        %565 = vmatpush1.bf16.msra.mxu0 0
        %566 = vmatprep.subr.bf16.mxu0 0
        %567 = vmatpush1.bf16.msra.mxu0 0
        %568 = vmatprep.subr.bf16.mxu0 0
        %569 = vmatpush1.bf16.msra.mxu0 0
        %570 = vmatprep.subr.bf16.mxu0 0
        %571 = vmatpush1.bf16.msra.mxu0 0
        %572 = vmatprep.subr.bf16.mxu0 0
        %573 = vmatpush1.bf16.msra.mxu0 0
        %574 = vmatprep.subr.bf16.mxu0 0
        %575 = vmatpush1.bf16.msra.mxu0 0
        %576 = vmatprep.subr.bf16.mxu0 0
        %577 = vmatpush1.bf16.msra.mxu0 0
        %578 = vmatprep.subr.bf16.mxu0 0
        %579 = vmatpush1.bf16.msra.mxu0 0
        %580 = vmatprep.subr.bf16.mxu0 0
        %581 = vmatpush1.bf16.msra.mxu0 0
        %582 = vmatprep.mubr.bf16.mxu0 0
        %583 = vmatmul.mubr.bf16.gmra.mrb[0].mxu0 %v535
        %v584 = vpop.f32.mrb[0].mxu0
        %v585 = vadd.f32 0.0, %v584
        %v586 = vpop.f32.mrb[0].mxu0
        %v587 = vpop.f32.mrb[0].mxu0
        %v588 = vadd.f32 0.0, %v587
        %v589 = vpop.f32.mrb[0].mxu0
        %590 = vmatprep.mubr.bf16.mxu0 0
        %591 = vmatmul.mubr.bf16.gmra.mrb[0].mxu0 %v538
        %v592 = vpop.f32.mrb[0].mxu0
        %v593 = vadd.f32 0.0, %v592
        %v594 = vpop.f32.mrb[0].mxu0
        %v595 = vpop.f32.mrb[0].mxu0
        %v596 = vadd.f32 0.0, %v595
        %v597 = vpop.f32.mrb[0].mxu0
        %598 = vmatprep.mubr.bf16.mxu0 0
        %599 = vmatmul.mubr.bf16.gmra.mrb[0].mxu0 %v541
        %v600 = vpop.f32.mrb[0].mxu0
        %v601 = vadd.f32 0.0, %v600
        %v602 = vpop.f32.mrb[0].mxu0
        %v603 = vpop.f32.mrb[0].mxu0
        %v604 = vadd.f32 0.0, %v603
        %v605 = vpop.f32.mrb[0].mxu0
        %606 = vmatprep.mubr.bf16.mxu0 0
        %607 = vmatmul.mubr.bf16.gmra.mrb[0].mxu0 %v544
        %v608 = vpop.f32.mrb[0].mxu0
        %v609 = vadd.f32 0.0, %v608
        %v610 = vpop.f32.mrb[0].mxu0
        %v611 = vpop.f32.mrb[0].mxu0
        %v612 = vadd.f32 0.0, %v611
        %v613 = vpop.f32.mrb[0].mxu0
        %614 = vdwg.mxu0
        %v623 = vunpack.c.l.b16 %v387
        %v624 = vunpack.c.l.b16 %v388
        %v625 = vunpack.c.l.b16 %v389
        %v626 = vunpack.c.l.b16 %v390
        %v627 = vunpack.c.l.b16 %v391
        %v628 = vunpack.c.l.b16 %v392
        %v629 = vunpack.c.l.b16 %v393
        %v630 = vunpack.c.l.b16 %v394
        %v631 = vpack.c.b16 %v624, %v623
        %v632 = vpack.c.b16 %v626, %v625
        %v633 = vpack.c.b16 %v628, %v627
        %v634 = vpack.c.b16 %v630, %v629
        %v636 = vsel %vm533, %v631, 0
        %v639 = vsel %vm533, %v632, 0
        %v642 = vsel %vm533, %v633, 0
        %v645 = vsel %vm533, %v634, 0
        %v648 = vsel %vm546, %v395, 0
        %650 = vmatprep.subr.bf16.mxu0 0
        %651 = vmatpush1.bf16.msra.mxu0 %v648
        %652 = vmatprep.subr.bf16.mxu0 0
        %653 = vmatpush1.bf16.msra.mxu0 0
        %654 = vmatprep.subr.bf16.mxu0 0
        %655 = vmatpush1.bf16.msra.mxu0 0
        %656 = vmatprep.subr.bf16.mxu0 0
        %657 = vmatpush1.bf16.msra.mxu0 0
        %658 = vmatprep.subr.bf16.mxu0 0
        %659 = vmatpush1.bf16.msra.mxu0 0
        %660 = vmatprep.subr.bf16.mxu0 0
        %661 = vmatpush1.bf16.msra.mxu0 0
        %662 = vmatprep.subr.bf16.mxu0 0
        %663 = vmatpush1.bf16.msra.mxu0 0
        %664 = vmatprep.subr.bf16.mxu0 0
        %665 = vmatpush1.bf16.msra.mxu0 0
        %666 = vmatprep.subr.bf16.mxu0 0
        %667 = vmatpush1.bf16.msra.mxu0 0
        %668 = vmatprep.subr.bf16.mxu0 0
        %669 = vmatpush1.bf16.msra.mxu0 0
        %670 = vmatprep.subr.bf16.mxu0 0
        %671 = vmatpush1.bf16.msra.mxu0 0
        %672 = vmatprep.subr.bf16.mxu0 0
        %673 = vmatpush1.bf16.msra.mxu0 0
        %674 = vmatprep.subr.bf16.mxu0 0
        %675 = vmatpush1.bf16.msra.mxu0 0
        %676 = vmatprep.subr.bf16.mxu0 0
        %677 = vmatpush1.bf16.msra.mxu0 0
        %678 = vmatprep.subr.bf16.mxu0 0
        %679 = vmatpush1.bf16.msra.mxu0 0
        %680 = vmatprep.subr.bf16.mxu0 0
        %681 = vmatpush1.bf16.msra.mxu0 0
        %682 = vmatprep.mubr.bf16.mxu0 0
        %683 = vmatmul.mubr.bf16.gmra.mrb[0].mxu0 %v636
        %v684 = vpop.f32.mrb[0].mxu0
        %v685 = vadd.f32 %v585, %v684
        %v686 = vpop.f32.mrb[0].mxu0
        %v687 = vpop.f32.mrb[0].mxu0
        %v688 = vadd.f32 %v588, %v687
        %v689 = vpop.f32.mrb[0].mxu0
        %690 = vmatprep.mubr.bf16.mxu0 0
        %691 = vmatmul.mubr.bf16.gmra.mrb[0].mxu0 %v639
        %v692 = vpop.f32.mrb[0].mxu0
        %v693 = vadd.f32 %v593, %v692
        %v694 = vpop.f32.mrb[0].mxu0
        %v695 = vpop.f32.mrb[0].mxu0
        %v696 = vadd.f32 %v596, %v695
        %v697 = vpop.f32.mrb[0].mxu0
        %698 = vmatprep.mubr.bf16.mxu0 0
        %699 = vmatmul.mubr.bf16.gmra.mrb[0].mxu0 %v642
        %v700 = vpop.f32.mrb[0].mxu0
        %v701 = vadd.f32 %v601, %v700
        %v702 = vpop.f32.mrb[0].mxu0
        %v703 = vpop.f32.mrb[0].mxu0
        %v704 = vadd.f32 %v604, %v703
        %v705 = vpop.f32.mrb[0].mxu0
        %706 = vmatprep.mubr.bf16.mxu0 0
        %707 = vmatmul.mubr.bf16.gmra.mrb[0].mxu0 %v645
        %v708 = vpop.f32.mrb[0].mxu0
        %v709 = vadd.f32 %v609, %v708
        %v710 = vpop.f32.mrb[0].mxu0
        %v711 = vpop.f32.mrb[0].mxu0
        %v712 = vadd.f32 %v612, %v711
        %v713 = vpop.f32.mrb[0].mxu0
        %714 = vdwg.mxu0
        %v715 = vld [vmem:[%s386] sm:$0xe]
        %v716 = vld [vmem:[%s386 + $0x8] sm:$0xe]
        %v717 = vld [vmem:[%s386 + $0x10] sm:$0xe]
        %v718 = vld [vmem:[%s386 + $0x18] sm:$0xe]
        %v719 = vld [vmem:[%s386 + $0x20] sm:$0xe]
        %v720 = vld [vmem:[%s386 + $0x28] sm:$0xe]
        %v721 = vld [vmem:[%s386 + $0x30] sm:$0xe]
        %v722 = vld [vmem:[%s386 + $0x38] sm:$0xe]
        %vm739 = vcmask 1042432
        %vm740 = vcmask 1046532
        %vm741 = vmor %vm739, %vm740
        %v742 = vrot.slane %v715, 5
        %v743 = vrot.slane %v742, 4
        %v744 = vrot.slane %v396, 5
        %v745 = vsel %vm741, %v743, %v744
        %v746 = vrot.slane %v716, 5
        %v747 = vrot.slane %v746, 4
        %v748 = vrot.slane %v397, 5
        %v749 = vsel %vm741, %v747, %v748
        %v750 = vrot.slane %v717, 5
        %v751 = vrot.slane %v750, 4
        %v752 = vrot.slane %v398, 5
        %v753 = vsel %vm741, %v751, %v752
        %v754 = vrot.slane %v718, 5
        %v755 = vrot.slane %v754, 4
        %v756 = vrot.slane %v399, 5
        %v757 = vsel %vm741, %v755, %v756
        %v758 = vrot.slane %v719, 5
        %v759 = vrot.slane %v758, 4
        %v760 = vrot.slane %v400, 5
        %v761 = vsel %vm741, %v759, %v760
        %v762 = vrot.slane %v720, 5
        %v763 = vrot.slane %v762, 4
        %v764 = vrot.slane %v401, 5
        %v765 = vsel %vm741, %v763, %v764
        %v766 = vrot.slane %v721, 5
        %v767 = vrot.slane %v766, 4
        %v768 = vrot.slane %v402, 5
        %v769 = vsel %vm741, %v767, %v768
        %v770 = vrot.slane %v722, 5
        %v771 = vrot.slane %v770, 4
        %v772 = vrot.slane %v403, 5
        %v773 = vsel %vm741, %v771, %v772
        %s774 = scalar_lea.vmem [#allocation5], 8
        %v775 = vld [vmem:[%s774] sm:$0xf]
        %v776 = vunpack.c.l.b16 %v745
        %v777 = vunpack.c.l.b16 %v749
        %v778 = vunpack.c.l.b16 %v753
        %v779 = vunpack.c.l.b16 %v757
        %v780 = vunpack.c.l.b16 %v761
        %v781 = vunpack.c.l.b16 %v765
        %v782 = vunpack.c.l.b16 %v769
        %v783 = vunpack.c.l.b16 %v773
        %v784 = vpack.c.b16 %v777, %v776
        %v785 = vpack.c.b16 %v779, %v778
        %v786 = vpack.c.b16 %v781, %v780
        %v787 = vpack.c.b16 %v783, %v782
        %v789 = vsel %vm533, %v784, 0
        %v792 = vsel %vm533, %v785, 0
        %v795 = vsel %vm533, %v786, 0
        %v798 = vsel %vm533, %v787, 0
        %v801 = vsel %vm546, %v775, 0
        %803 = vmatprep.subr.bf16.mxu0 0
        %804 = vmatpush1.bf16.msra.mxu0 %v801
        %805 = vmatprep.subr.bf16.mxu0 0
        %806 = vmatpush1.bf16.msra.mxu0 0
        %807 = vmatprep.subr.bf16.mxu0 0
        %808 = vmatpush1.bf16.msra.mxu0 0
        %809 = vmatprep.subr.bf16.mxu0 0
        %810 = vmatpush1.bf16.msra.mxu0 0
        %811 = vmatprep.subr.bf16.mxu0 0
        %812 = vmatpush1.bf16.msra.mxu0 0
        %813 = vmatprep.subr.bf16.mxu0 0
        %814 = vmatpush1.bf16.msra.mxu0 0
        %815 = vmatprep.subr.bf16.mxu0 0
        %816 = vmatpush1.bf16.msra.mxu0 0
        %817 = vmatprep.subr.bf16.mxu0 0
        %818 = vmatpush1.bf16.msra.mxu0 0
        %819 = vmatprep.subr.bf16.mxu0 0
        %820 = vmatpush1.bf16.msra.mxu0 0
        %821 = vmatprep.subr.bf16.mxu0 0
        %822 = vmatpush1.bf16.msra.mxu0 0
        %823 = vmatprep.subr.bf16.mxu0 0
        %824 = vmatpush1.bf16.msra.mxu0 0
        %825 = vmatprep.subr.bf16.mxu0 0
        %826 = vmatpush1.bf16.msra.mxu0 0
        %827 = vmatprep.subr.bf16.mxu0 0
        %828 = vmatpush1.bf16.msra.mxu0 0
        %829 = vmatprep.subr.bf16.mxu0 0
        %830 = vmatpush1.bf16.msra.mxu0 0
        %831 = vmatprep.subr.bf16.mxu0 0
        %832 = vmatpush1.bf16.msra.mxu0 0
        %833 = vmatprep.subr.bf16.mxu0 0
        %834 = vmatpush1.bf16.msra.mxu0 0
        %835 = vmatprep.mubr.bf16.mxu0 0
        %836 = vmatmul.mubr.bf16.gmra.mrb[0].mxu0 %v789
        %v837 = vpop.f32.mrb[0].mxu0
        %v838 = vadd.f32 0.0, %v837
        %v839 = vpop.f32.mrb[0].mxu0
        %v840 = vpop.f32.mrb[0].mxu0
        %v841 = vadd.f32 0.0, %v840
        %v842 = vpop.f32.mrb[0].mxu0
        %843 = vmatprep.mubr.bf16.mxu0 0
        %844 = vmatmul.mubr.bf16.gmra.mrb[0].mxu0 %v792
        %v845 = vpop.f32.mrb[0].mxu0
        %v846 = vadd.f32 0.0, %v845
        %v847 = vpop.f32.mrb[0].mxu0
        %v848 = vpop.f32.mrb[0].mxu0
        %v849 = vadd.f32 0.0, %v848
        %v850 = vpop.f32.mrb[0].mxu0
        %851 = vmatprep.mubr.bf16.mxu0 0
        %852 = vmatmul.mubr.bf16.gmra.mrb[0].mxu0 %v795
        %v853 = vpop.f32.mrb[0].mxu0
        %v854 = vadd.f32 0.0, %v853
        %v855 = vpop.f32.mrb[0].mxu0
        %v856 = vpop.f32.mrb[0].mxu0
        %v857 = vadd.f32 0.0, %v856
        %v858 = vpop.f32.mrb[0].mxu0
        %859 = vmatprep.mubr.bf16.mxu0 0
        %860 = vmatmul.mubr.bf16.gmra.mrb[0].mxu0 %v798
        %v861 = vpop.f32.mrb[0].mxu0
        %v862 = vadd.f32 0.0, %v861
        %v863 = vpop.f32.mrb[0].mxu0
        %v864 = vpop.f32.mrb[0].mxu0
        %v865 = vadd.f32 0.0, %v864
        %v866 = vpop.f32.mrb[0].mxu0
        %867 = vdwg.mxu0
        %v868 = vadd.f32 %v685, %v838
        %v869 = vadd.f32 %v688, %v841
        %v870 = vadd.f32 %v693, %v846
        %v871 = vadd.f32 %v696, %v849
        %v872 = vadd.f32 %v701, %v854
        %v873 = vadd.f32 %v704, %v857
        %v874 = vadd.f32 %v709, %v862
        %v875 = vadd.f32 %v712, %v865
        %s876 = sadd.s32 %s383, 1
        %s877 = smul.u32 %s876, 2
        %s878 = smul.addr %s877, 4
        %s879 = scalar_lea.vmem %s321, %s878 [#allocation2]
        %v880 = vld [vmem:[%s879] sm:$0xf]
        %v881 = vld [vmem:[%s879 + $0x8] sm:$0xf]
        %v882 = vld [vmem:[%s879 + $0x10] sm:$0xf]
        %v883 = vld [vmem:[%s879 + $0x18] sm:$0xf]
        %v884 = vld [vmem:[%s879 + $0x20] sm:$0xf]
        %v885 = vld [vmem:[%s879 + $0x28] sm:$0xf]
        %v886 = vld [vmem:[%s879 + $0x30] sm:$0xf]
        %v887 = vld [vmem:[%s879 + $0x38] sm:$0xf]
        %s888 = scalar_lea.vmem [#allocation5], 12
        %v889 = vld [vmem:[%s888] sm:$0xf]
        %v898 = vunpack.c.l.b16 %v880
        %v899 = vunpack.c.l.b16 %v881
        %v900 = vunpack.c.l.b16 %v882
        %v901 = vunpack.c.l.b16 %v883
        %v902 = vunpack.c.l.b16 %v884
        %v903 = vunpack.c.l.b16 %v885
        %v904 = vunpack.c.l.b16 %v886
        %v905 = vunpack.c.l.b16 %v887
        %v906 = vpack.c.b16 %v899, %v898
        %v907 = vpack.c.b16 %v901, %v900
        %v908 = vpack.c.b16 %v903, %v902
        %v909 = vpack.c.b16 %v905, %v904
        %v911 = vsel %vm533, %v906, 0
        %v914 = vsel %vm533, %v907, 0
        %v917 = vsel %vm533, %v908, 0
        %v920 = vsel %vm533, %v909, 0
        %v923 = vsel %vm546, %v889, 0
        %925 = vmatprep.subr.bf16.mxu0 0
        %926 = vmatpush1.bf16.msra.mxu0 %v923
        %927 = vmatprep.subr.bf16.mxu0 0
        %928 = vmatpush1.bf16.msra.mxu0 0
        %929 = vmatprep.subr.bf16.mxu0 0
        %930 = vmatpush1.bf16.msra.mxu0 0
        %931 = vmatprep.subr.bf16.mxu0 0
        %932 = vmatpush1.bf16.msra.mxu0 0
        %933 = vmatprep.subr.bf16.mxu0 0
        %934 = vmatpush1.bf16.msra.mxu0 0
        %935 = vmatprep.subr.bf16.mxu0 0
        %936 = vmatpush1.bf16.msra.mxu0 0
        %937 = vmatprep.subr.bf16.mxu0 0
        %938 = vmatpush1.bf16.msra.mxu0 0
        %939 = vmatprep.subr.bf16.mxu0 0
        %940 = vmatpush1.bf16.msra.mxu0 0
        %941 = vmatprep.subr.bf16.mxu0 0
        %942 = vmatpush1.bf16.msra.mxu0 0
        %943 = vmatprep.subr.bf16.mxu0 0
        %944 = vmatpush1.bf16.msra.mxu0 0
        %945 = vmatprep.subr.bf16.mxu0 0
        %946 = vmatpush1.bf16.msra.mxu0 0
        %947 = vmatprep.subr.bf16.mxu0 0
        %948 = vmatpush1.bf16.msra.mxu0 0
        %949 = vmatprep.subr.bf16.mxu0 0
        %950 = vmatpush1.bf16.msra.mxu0 0
        %951 = vmatprep.subr.bf16.mxu0 0
        %952 = vmatpush1.bf16.msra.mxu0 0
        %953 = vmatprep.subr.bf16.mxu0 0
        %954 = vmatpush1.bf16.msra.mxu0 0
        %955 = vmatprep.subr.bf16.mxu0 0
        %956 = vmatpush1.bf16.msra.mxu0 0
        %957 = vmatprep.mubr.bf16.mxu0 0
        %958 = vmatmul.mubr.bf16.gmra.mrb[0].mxu0 %v911
        %v959 = vpop.f32.mrb[0].mxu0
        %v960 = vadd.f32 0.0, %v959
        %v961 = vpop.f32.mrb[0].mxu0
        %v962 = vpop.f32.mrb[0].mxu0
        %v963 = vadd.f32 0.0, %v962
        %v964 = vpop.f32.mrb[0].mxu0
        %965 = vmatprep.mubr.bf16.mxu0 0
        %966 = vmatmul.mubr.bf16.gmra.mrb[0].mxu0 %v914
        %v967 = vpop.f32.mrb[0].mxu0
        %v968 = vadd.f32 0.0, %v967
        %v969 = vpop.f32.mrb[0].mxu0
        %v970 = vpop.f32.mrb[0].mxu0
        %v971 = vadd.f32 0.0, %v970
        %v972 = vpop.f32.mrb[0].mxu0
        %973 = vmatprep.mubr.bf16.mxu0 0
        %974 = vmatmul.mubr.bf16.gmra.mrb[0].mxu0 %v917
        %v975 = vpop.f32.mrb[0].mxu0
        %v976 = vadd.f32 0.0, %v975
        %v977 = vpop.f32.mrb[0].mxu0
        %v978 = vpop.f32.mrb[0].mxu0
        %v979 = vadd.f32 0.0, %v978
        %v980 = vpop.f32.mrb[0].mxu0
        %981 = vmatprep.mubr.bf16.mxu0 0
        %982 = vmatmul.mubr.bf16.gmra.mrb[0].mxu0 %v920
        %v983 = vpop.f32.mrb[0].mxu0
        %v984 = vadd.f32 0.0, %v983
        %v985 = vpop.f32.mrb[0].mxu0
        %v986 = vpop.f32.mrb[0].mxu0
        %v987 = vadd.f32 0.0, %v986
        %v988 = vpop.f32.mrb[0].mxu0
        %989 = vdwg.mxu0
        %v990 = vadd.f32 %v868, %v960
        %v991 = vadd.f32 %v869, %v963
        %v992 = vadd.f32 %v870, %v968
        %v993 = vadd.f32 %v871, %v971
        %v994 = vadd.f32 %v872, %v976
        %v995 = vadd.f32 %v873, %v979
        %v996 = vadd.f32 %v874, %v984
        %v997 = vadd.f32 %v875, %v987
        %v998 = vld [vmem:[%s879] sm:$0xf]
        %v999 = vld [vmem:[%s879 + $0x4] sm:$0x1]
        %v1000 = vld [vmem:[%s879 + $0x8] sm:$0xf]
        %v1001 = vld [vmem:[%s879 + $0xc] sm:$0x1]
        %v1002 = vld [vmem:[%s879 + $0x10] sm:$0xf]
        %v1003 = vld [vmem:[%s879 + $0x14] sm:$0x1]
        %v1004 = vld [vmem:[%s879 + $0x18] sm:$0xf]
        %v1005 = vld [vmem:[%s879 + $0x1c] sm:$0x1]
        %v1006 = vld [vmem:[%s879 + $0x20] sm:$0xf]
        %v1007 = vld [vmem:[%s879 + $0x24] sm:$0x1]
        %v1008 = vld [vmem:[%s879 + $0x28] sm:$0xf]
        %v1009 = vld [vmem:[%s879 + $0x2c] sm:$0x1]
        %v1010 = vld [vmem:[%s879 + $0x30] sm:$0xf]
        %v1011 = vld [vmem:[%s879 + $0x34] sm:$0x1]
        %v1012 = vld [vmem:[%s879 + $0x38] sm:$0xf]
        %v1013 = vld [vmem:[%s879 + $0x3c] sm:$0x1]
        %v1015 = vshrl.u32 %v998, 16
        %v1017 = vrot.slane %v1015, 4
        %v1018 = vshll.u32 %v998, 16
        %v1020 = vrot.slane %v1018, 5
        %v1021 = vor.u32 %v1017, %v1020
        %v1022 = vrot.slane %v1021, 4
        %v1024 = vshll.u32 %v999, 16
        %v1026 = vrot.slane %v1024, 5
        %v1027 = vsel %vm406, %v1022, %v1026
        %v1029 = vshrl.u32 %v1000, 16
        %v1031 = vrot.slane %v1029, 4
        %v1032 = vshll.u32 %v1000, 16
        %v1034 = vrot.slane %v1032, 5
        %v1035 = vor.u32 %v1031, %v1034
        %v1036 = vrot.slane %v1035, 4
        %v1038 = vshll.u32 %v1001, 16
        %v1040 = vrot.slane %v1038, 5
        %v1041 = vsel %vm406, %v1036, %v1040
        %v1043 = vshrl.u32 %v1002, 16
        %v1045 = vrot.slane %v1043, 4
        %v1046 = vshll.u32 %v1002, 16
        %v1048 = vrot.slane %v1046, 5
        %v1049 = vor.u32 %v1045, %v1048
        %v1050 = vrot.slane %v1049, 4
        %v1052 = vshll.u32 %v1003, 16
        %v1054 = vrot.slane %v1052, 5
        %v1055 = vsel %vm406, %v1050, %v1054
        %v1057 = vshrl.u32 %v1004, 16
        %v1059 = vrot.slane %v1057, 4
        %v1060 = vshll.u32 %v1004, 16
        %v1062 = vrot.slane %v1060, 5
        %v1063 = vor.u32 %v1059, %v1062
        %v1064 = vrot.slane %v1063, 4
        %v1066 = vshll.u32 %v1005, 16
        %v1068 = vrot.slane %v1066, 5
        %v1069 = vsel %vm406, %v1064, %v1068
        %v1071 = vshrl.u32 %v1006, 16
        %v1073 = vrot.slane %v1071, 4
        %v1074 = vshll.u32 %v1006, 16
        %v1076 = vrot.slane %v1074, 5
        %v1077 = vor.u32 %v1073, %v1076
        %v1078 = vrot.slane %v1077, 4
        %v1080 = vshll.u32 %v1007, 16
        %v1082 = vrot.slane %v1080, 5
        %v1083 = vsel %vm406, %v1078, %v1082
        %v1085 = vshrl.u32 %v1008, 16
        %v1087 = vrot.slane %v1085, 4
        %v1088 = vshll.u32 %v1008, 16
        %v1090 = vrot.slane %v1088, 5
        %v1091 = vor.u32 %v1087, %v1090
        %v1092 = vrot.slane %v1091, 4
        %v1094 = vshll.u32 %v1009, 16
        %v1096 = vrot.slane %v1094, 5
        %v1097 = vsel %vm406, %v1092, %v1096
        %v1099 = vshrl.u32 %v1010, 16
        %v1101 = vrot.slane %v1099, 4
        %v1102 = vshll.u32 %v1010, 16
        %v1104 = vrot.slane %v1102, 5
        %v1105 = vor.u32 %v1101, %v1104
        %v1106 = vrot.slane %v1105, 4
        %v1108 = vshll.u32 %v1011, 16
        %v1110 = vrot.slane %v1108, 5
        %v1111 = vsel %vm406, %v1106, %v1110
        %v1113 = vshrl.u32 %v1012, 16
        %v1115 = vrot.slane %v1113, 4
        %v1116 = vshll.u32 %v1012, 16
        %v1118 = vrot.slane %v1116, 5
        %v1119 = vor.u32 %v1115, %v1118
        %v1120 = vrot.slane %v1119, 4
        %v1122 = vshll.u32 %v1013, 16
        %v1124 = vrot.slane %v1122, 5
        %v1125 = vsel %vm406, %v1120, %v1124
        %s1126 = scalar_lea.vmem [#allocation5], 16
        %v1127 = vld [vmem:[%s1126] sm:$0xf]
        %v1128 = vunpack.c.l.b16 %v1027
        %v1129 = vunpack.c.l.b16 %v1041
        %v1130 = vunpack.c.l.b16 %v1055
        %v1131 = vunpack.c.l.b16 %v1069
        %v1132 = vunpack.c.l.b16 %v1083
        %v1133 = vunpack.c.l.b16 %v1097
        %v1134 = vunpack.c.l.b16 %v1111
        %v1135 = vunpack.c.l.b16 %v1125
        %v1136 = vpack.c.b16 %v1129, %v1128
        %v1137 = vpack.c.b16 %v1131, %v1130
        %v1138 = vpack.c.b16 %v1133, %v1132
        %v1139 = vpack.c.b16 %v1135, %v1134
        %v1141 = vsel %vm533, %v1136, 0
        %v1144 = vsel %vm533, %v1137, 0
        %v1147 = vsel %vm533, %v1138, 0
        %v1150 = vsel %vm533, %v1139, 0
        %v1153 = vsel %vm546, %v1127, 0
        %1155 = vmatprep.subr.bf16.mxu0 0
        %1156 = vmatpush1.bf16.msra.mxu0 %v1153
        %1157 = vmatprep.subr.bf16.mxu0 0
        %1158 = vmatpush1.bf16.msra.mxu0 0
        %1159 = vmatprep.subr.bf16.mxu0 0
        %1160 = vmatpush1.bf16.msra.mxu0 0
        %1161 = vmatprep.subr.bf16.mxu0 0
        %1162 = vmatpush1.bf16.msra.mxu0 0
        %1163 = vmatprep.subr.bf16.mxu0 0
        %1164 = vmatpush1.bf16.msra.mxu0 0
        %1165 = vmatprep.subr.bf16.mxu0 0
        %1166 = vmatpush1.bf16.msra.mxu0 0
        %1167 = vmatprep.subr.bf16.mxu0 0
        %1168 = vmatpush1.bf16.msra.mxu0 0
        %1169 = vmatprep.subr.bf16.mxu0 0
        %1170 = vmatpush1.bf16.msra.mxu0 0
        %1171 = vmatprep.subr.bf16.mxu0 0
        %1172 = vmatpush1.bf16.msra.mxu0 0
        %1173 = vmatprep.subr.bf16.mxu0 0
        %1174 = vmatpush1.bf16.msra.mxu0 0
        %1175 = vmatprep.subr.bf16.mxu0 0
        %1176 = vmatpush1.bf16.msra.mxu0 0
        %1177 = vmatprep.subr.bf16.mxu0 0
        %1178 = vmatpush1.bf16.msra.mxu0 0
        %1179 = vmatprep.subr.bf16.mxu0 0
        %1180 = vmatpush1.bf16.msra.mxu0 0
        %1181 = vmatprep.subr.bf16.mxu0 0
        %1182 = vmatpush1.bf16.msra.mxu0 0
        %1183 = vmatprep.subr.bf16.mxu0 0
        %1184 = vmatpush1.bf16.msra.mxu0 0
        %1185 = vmatprep.subr.bf16.mxu0 0
        %1186 = vmatpush1.bf16.msra.mxu0 0
        %1187 = vmatprep.mubr.bf16.mxu0 0
        %1188 = vmatmul.mubr.bf16.gmra.mrb[0].mxu0 %v1141
        %v1189 = vpop.f32.mrb[0].mxu0
        %v1190 = vadd.f32 0.0, %v1189
        %v1191 = vpop.f32.mrb[0].mxu0
        %v1192 = vpop.f32.mrb[0].mxu0
        %v1193 = vadd.f32 0.0, %v1192
        %v1194 = vpop.f32.mrb[0].mxu0
        %1195 = vmatprep.mubr.bf16.mxu0 0
        %1196 = vmatmul.mubr.bf16.gmra.mrb[0].mxu0 %v1144
        %v1197 = vpop.f32.mrb[0].mxu0
        %v1198 = vadd.f32 0.0, %v1197
        %v1199 = vpop.f32.mrb[0].mxu0
        %v1200 = vpop.f32.mrb[0].mxu0
        %v1201 = vadd.f32 0.0, %v1200
        %v1202 = vpop.f32.mrb[0].mxu0
        %1203 = vmatprep.mubr.bf16.mxu0 0
        %1204 = vmatmul.mubr.bf16.gmra.mrb[0].mxu0 %v1147
        %v1205 = vpop.f32.mrb[0].mxu0
        %v1206 = vadd.f32 0.0, %v1205
        %v1207 = vpop.f32.mrb[0].mxu0
        %v1208 = vpop.f32.mrb[0].mxu0
        %v1209 = vadd.f32 0.0, %v1208
        %v1210 = vpop.f32.mrb[0].mxu0
        %1211 = vmatprep.mubr.bf16.mxu0 0
        %1212 = vmatmul.mubr.bf16.gmra.mrb[0].mxu0 %v1150
        %v1213 = vpop.f32.mrb[0].mxu0
        %v1214 = vadd.f32 0.0, %v1213
        %v1215 = vpop.f32.mrb[0].mxu0
        %v1216 = vpop.f32.mrb[0].mxu0
        %v1217 = vadd.f32 0.0, %v1216
        %v1218 = vpop.f32.mrb[0].mxu0
        %1219 = vdwg.mxu0
        %v1220 = vadd.f32 %v990, %v1190
        %v1221 = vadd.f32 %v991, %v1193
        %v1222 = vadd.f32 %v992, %v1198
        %v1223 = vadd.f32 %v993, %v1201
        %v1224 = vadd.f32 %v994, %v1206
        %v1225 = vadd.f32 %v995, %v1209
        %v1226 = vadd.f32 %v996, %v1214
        %v1227 = vadd.f32 %v997, %v1217
        %v1228 = vld [vmem:[%s879] sm:$0xe]
        %v1229 = vld [vmem:[%s879 + $0x8] sm:$0xe]
        %v1230 = vld [vmem:[%s879 + $0x10] sm:$0xe]
        %v1231 = vld [vmem:[%s879 + $0x18] sm:$0xe]
        %v1232 = vld [vmem:[%s879 + $0x20] sm:$0xe]
        %v1233 = vld [vmem:[%s879 + $0x28] sm:$0xe]
        %v1234 = vld [vmem:[%s879 + $0x30] sm:$0xe]
        %v1235 = vld [vmem:[%s879 + $0x38] sm:$0xe]
        %v1252 = vrot.slane %v1228, 5
        %v1253 = vrot.slane %v1252, 4
        %v1254 = vrot.slane %v999, 5
        %v1255 = vsel %vm741, %v1253, %v1254
        %v1256 = vrot.slane %v1229, 5
        %v1257 = vrot.slane %v1256, 4
        %v1258 = vrot.slane %v1001, 5
        %v1259 = vsel %vm741, %v1257, %v1258
        %v1260 = vrot.slane %v1230, 5
        %v1261 = vrot.slane %v1260, 4
        %v1262 = vrot.slane %v1003, 5
        %v1263 = vsel %vm741, %v1261, %v1262
        %v1264 = vrot.slane %v1231, 5
        %v1265 = vrot.slane %v1264, 4
        %v1266 = vrot.slane %v1005, 5
        %v1267 = vsel %vm741, %v1265, %v1266
        %v1268 = vrot.slane %v1232, 5
        %v1269 = vrot.slane %v1268, 4
        %v1270 = vrot.slane %v1007, 5
        %v1271 = vsel %vm741, %v1269, %v1270
        %v1272 = vrot.slane %v1233, 5
        %v1273 = vrot.slane %v1272, 4
        %v1274 = vrot.slane %v1009, 5
        %v1275 = vsel %vm741, %v1273, %v1274
        %v1276 = vrot.slane %v1234, 5
        %v1277 = vrot.slane %v1276, 4
        %v1278 = vrot.slane %v1011, 5
        %v1279 = vsel %vm741, %v1277, %v1278
        %v1280 = vrot.slane %v1235, 5
        %v1281 = vrot.slane %v1280, 4
        %v1282 = vrot.slane %v1013, 5
        %v1283 = vsel %vm741, %v1281, %v1282
        %s1284 = scalar_lea.vmem [#allocation5], 20
        %v1285 = vld [vmem:[%s1284] sm:$0xf]
        %v1286 = vunpack.c.l.b16 %v1255
        %v1287 = vunpack.c.l.b16 %v1259
        %v1288 = vunpack.c.l.b16 %v1263
        %v1289 = vunpack.c.l.b16 %v1267
        %v1290 = vunpack.c.l.b16 %v1271
        %v1291 = vunpack.c.l.b16 %v1275
        %v1292 = vunpack.c.l.b16 %v1279
        %v1293 = vunpack.c.l.b16 %v1283
        %v1294 = vpack.c.b16 %v1287, %v1286
        %v1295 = vpack.c.b16 %v1289, %v1288
        %v1296 = vpack.c.b16 %v1291, %v1290
        %v1297 = vpack.c.b16 %v1293, %v1292
        %v1299 = vsel %vm533, %v1294, 0
        %v1302 = vsel %vm533, %v1295, 0
        %v1305 = vsel %vm533, %v1296, 0
        %v1308 = vsel %vm533, %v1297, 0
        %v1311 = vsel %vm546, %v1285, 0
        %1313 = vmatprep.subr.bf16.mxu0 0
        %1314 = vmatpush1.bf16.msra.mxu0 %v1311
        %1315 = vmatprep.subr.bf16.mxu0 0
        %1316 = vmatpush1.bf16.msra.mxu0 0
        %1317 = vmatprep.subr.bf16.mxu0 0
        %1318 = vmatpush1.bf16.msra.mxu0 0
        %1319 = vmatprep.subr.bf16.mxu0 0
        %1320 = vmatpush1.bf16.msra.mxu0 0
        %1321 = vmatprep.subr.bf16.mxu0 0
        %1322 = vmatpush1.bf16.msra.mxu0 0
        %1323 = vmatprep.subr.bf16.mxu0 0
        %1324 = vmatpush1.bf16.msra.mxu0 0
        %1325 = vmatprep.subr.bf16.mxu0 0
        %1326 = vmatpush1.bf16.msra.mxu0 0
        %1327 = vmatprep.subr.bf16.mxu0 0
        %1328 = vmatpush1.bf16.msra.mxu0 0
        %1329 = vmatprep.subr.bf16.mxu0 0
        %1330 = vmatpush1.bf16.msra.mxu0 0
        %1331 = vmatprep.subr.bf16.mxu0 0
        %1332 = vmatpush1.bf16.msra.mxu0 0
        %1333 = vmatprep.subr.bf16.mxu0 0
        %1334 = vmatpush1.bf16.msra.mxu0 0
        %1335 = vmatprep.subr.bf16.mxu0 0
        %1336 = vmatpush1.bf16.msra.mxu0 0
        %1337 = vmatprep.subr.bf16.mxu0 0
        %1338 = vmatpush1.bf16.msra.mxu0 0
        %1339 = vmatprep.subr.bf16.mxu0 0
        %1340 = vmatpush1.bf16.msra.mxu0 0
        %1341 = vmatprep.subr.bf16.mxu0 0
        %1342 = vmatpush1.bf16.msra.mxu0 0
        %1343 = vmatprep.subr.bf16.mxu0 0
        %1344 = vmatpush1.bf16.msra.mxu0 0
        %1345 = vmatprep.mubr.bf16.mxu0 0
        %1346 = vmatmul.mubr.bf16.gmra.mrb[0].mxu0 %v1299
        %v1347 = vpop.f32.mrb[0].mxu0
        %v1348 = vadd.f32 0.0, %v1347
        %v1349 = vpop.f32.mrb[0].mxu0
        %v1350 = vpop.f32.mrb[0].mxu0
        %v1351 = vadd.f32 0.0, %v1350
        %v1352 = vpop.f32.mrb[0].mxu0
        %1353 = vmatprep.mubr.bf16.mxu0 0
        %1354 = vmatmul.mubr.bf16.gmra.mrb[0].mxu0 %v1302
        %v1355 = vpop.f32.mrb[0].mxu0
        %v1356 = vadd.f32 0.0, %v1355
        %v1357 = vpop.f32.mrb[0].mxu0
        %v1358 = vpop.f32.mrb[0].mxu0
        %v1359 = vadd.f32 0.0, %v1358
        %v1360 = vpop.f32.mrb[0].mxu0
        %1361 = vmatprep.mubr.bf16.mxu0 0
        %1362 = vmatmul.mubr.bf16.gmra.mrb[0].mxu0 %v1305
        %v1363 = vpop.f32.mrb[0].mxu0
        %v1364 = vadd.f32 0.0, %v1363
        %v1365 = vpop.f32.mrb[0].mxu0
        %v1366 = vpop.f32.mrb[0].mxu0
        %v1367 = vadd.f32 0.0, %v1366
        %v1368 = vpop.f32.mrb[0].mxu0
        %1369 = vmatprep.mubr.bf16.mxu0 0
        %1370 = vmatmul.mubr.bf16.gmra.mrb[0].mxu0 %v1308
        %v1371 = vpop.f32.mrb[0].mxu0
        %v1372 = vadd.f32 0.0, %v1371
        %v1373 = vpop.f32.mrb[0].mxu0
        %v1374 = vpop.f32.mrb[0].mxu0
        %v1375 = vadd.f32 0.0, %v1374
        %v1376 = vpop.f32.mrb[0].mxu0
        %1377 = vdwg.mxu0
        %v1378 = vadd.f32 %v1220, %v1348
        %v1379 = vadd.f32 %v1221, %v1351
        %v1380 = vadd.f32 %v1222, %v1356
        %v1381 = vadd.f32 %v1223, %v1359
        %v1382 = vadd.f32 %v1224, %v1364
        %v1383 = vadd.f32 %v1225, %v1367
        %v1384 = vadd.f32 %v1226, %v1372
        %v1385 = vadd.f32 %v1227, %v1375
        %s1386 = sadd.s32 %s383, 2
        %s1387 = smul.u32 %s1386, 2
        %s1388 = smul.addr %s1387, 4
        %s1389 = scalar_lea.vmem %s321, %s1388 [#allocation2]
        %v1390 = vld [vmem:[%s1389] sm:$0xf]
        %v1391 = vld [vmem:[%s1389 + $0x8] sm:$0xf]
        %v1392 = vld [vmem:[%s1389 + $0x10] sm:$0xf]
        %v1393 = vld [vmem:[%s1389 + $0x18] sm:$0xf]
        %v1394 = vld [vmem:[%s1389 + $0x20] sm:$0xf]
        %v1395 = vld [vmem:[%s1389 + $0x28] sm:$0xf]
        %v1396 = vld [vmem:[%s1389 + $0x30] sm:$0xf]
        %v1397 = vld [vmem:[%s1389 + $0x38] sm:$0xf]
        %s1398 = scalar_lea.vmem [#allocation5], 24
        %v1399 = vld [vmem:[%s1398] sm:$0xf]
        %v1408 = vunpack.c.l.b16 %v1390
        %v1409 = vunpack.c.l.b16 %v1391
        %v1410 = vunpack.c.l.b16 %v1392
        %v1411 = vunpack.c.l.b16 %v1393
        %v1412 = vunpack.c.l.b16 %v1394
        %v1413 = vunpack.c.l.b16 %v1395
        %v1414 = vunpack.c.l.b16 %v1396
        %v1415 = vunpack.c.l.b16 %v1397
        %v1416 = vpack.c.b16 %v1409, %v1408
        %v1417 = vpack.c.b16 %v1411, %v1410
        %v1418 = vpack.c.b16 %v1413, %v1412
        %v1419 = vpack.c.b16 %v1415, %v1414
        %v1421 = vsel %vm533, %v1416, 0
        %v1424 = vsel %vm533, %v1417, 0
        %v1427 = vsel %vm533, %v1418, 0
        %v1430 = vsel %vm533, %v1419, 0
        %v1433 = vsel %vm546, %v1399, 0
        %1435 = vmatprep.subr.bf16.mxu0 0
        %1436 = vmatpush1.bf16.msra.mxu0 %v1433
        %1437 = vmatprep.subr.bf16.mxu0 0
        %1438 = vmatpush1.bf16.msra.mxu0 0
        %1439 = vmatprep.subr.bf16.mxu0 0
        %1440 = vmatpush1.bf16.msra.mxu0 0
        %1441 = vmatprep.subr.bf16.mxu0 0
        %1442 = vmatpush1.bf16.msra.mxu0 0
        %1443 = vmatprep.subr.bf16.mxu0 0
        %1444 = vmatpush1.bf16.msra.mxu0 0
        %1445 = vmatprep.subr.bf16.mxu0 0
        %1446 = vmatpush1.bf16.msra.mxu0 0
        %1447 = vmatprep.subr.bf16.mxu0 0
        %1448 = vmatpush1.bf16.msra.mxu0 0
        %1449 = vmatprep.subr.bf16.mxu0 0
        %1450 = vmatpush1.bf16.msra.mxu0 0
        %1451 = vmatprep.subr.bf16.mxu0 0
        %1452 = vmatpush1.bf16.msra.mxu0 0
        %1453 = vmatprep.subr.bf16.mxu0 0
        %1454 = vmatpush1.bf16.msra.mxu0 0
        %1455 = vmatprep.subr.bf16.mxu0 0
        %1456 = vmatpush1.bf16.msra.mxu0 0
        %1457 = vmatprep.subr.bf16.mxu0 0
        %1458 = vmatpush1.bf16.msra.mxu0 0
        %1459 = vmatprep.subr.bf16.mxu0 0
        %1460 = vmatpush1.bf16.msra.mxu0 0
        %1461 = vmatprep.subr.bf16.mxu0 0
        %1462 = vmatpush1.bf16.msra.mxu0 0
        %1463 = vmatprep.subr.bf16.mxu0 0
        %1464 = vmatpush1.bf16.msra.mxu0 0
        %1465 = vmatprep.subr.bf16.mxu0 0
        %1466 = vmatpush1.bf16.msra.mxu0 0
        %1467 = vmatprep.mubr.bf16.mxu0 0
        %1468 = vmatmul.mubr.bf16.gmra.mrb[0].mxu0 %v1421
        %v1469 = vpop.f32.mrb[0].mxu0
        %v1470 = vadd.f32 0.0, %v1469
        %v1471 = vpop.f32.mrb[0].mxu0
        %v1472 = vpop.f32.mrb[0].mxu0
        %v1473 = vadd.f32 0.0, %v1472
        %v1474 = vpop.f32.mrb[0].mxu0
        %1475 = vmatprep.mubr.bf16.mxu0 0
        %1476 = vmatmul.mubr.bf16.gmra.mrb[0].mxu0 %v1424
        %v1477 = vpop.f32.mrb[0].mxu0
        %v1478 = vadd.f32 0.0, %v1477
        %v1479 = vpop.f32.mrb[0].mxu0
        %v1480 = vpop.f32.mrb[0].mxu0
        %v1481 = vadd.f32 0.0, %v1480
        %v1482 = vpop.f32.mrb[0].mxu0
        %1483 = vmatprep.mubr.bf16.mxu0 0
        %1484 = vmatmul.mubr.bf16.gmra.mrb[0].mxu0 %v1427
        %v1485 = vpop.f32.mrb[0].mxu0
        %v1486 = vadd.f32 0.0, %v1485
        %v1487 = vpop.f32.mrb[0].mxu0
        %v1488 = vpop.f32.mrb[0].mxu0
        %v1489 = vadd.f32 0.0, %v1488
        %v1490 = vpop.f32.mrb[0].mxu0
        %1491 = vmatprep.mubr.bf16.mxu0 0
        %1492 = vmatmul.mubr.bf16.gmra.mrb[0].mxu0 %v1430
        %v1493 = vpop.f32.mrb[0].mxu0
        %v1494 = vadd.f32 0.0, %v1493
        %v1495 = vpop.f32.mrb[0].mxu0
        %v1496 = vpop.f32.mrb[0].mxu0
        %v1497 = vadd.f32 0.0, %v1496
        %v1498 = vpop.f32.mrb[0].mxu0
        %1499 = vdwg.mxu0
        %v1500 = vadd.f32 %v1378, %v1470
        %v1501 = vadd.f32 %v1379, %v1473
        %v1502 = vadd.f32 %v1380, %v1478
        %v1503 = vadd.f32 %v1381, %v1481
        %v1504 = vadd.f32 %v1382, %v1486
        %v1505 = vadd.f32 %v1383, %v1489
        %v1506 = vadd.f32 %v1384, %v1494
        %v1507 = vadd.f32 %v1385, %v1497
        %v1508 = vld [vmem:[%s1389] sm:$0xf]
        %v1509 = vld [vmem:[%s1389 + $0x4] sm:$0x1]
        %v1510 = vld [vmem:[%s1389 + $0x8] sm:$0xf]
        %v1511 = vld [vmem:[%s1389 + $0xc] sm:$0x1]
        %v1512 = vld [vmem:[%s1389 + $0x10] sm:$0xf]
        %v1513 = vld [vmem:[%s1389 + $0x14] sm:$0x1]
        %v1514 = vld [vmem:[%s1389 + $0x18] sm:$0xf]
        %v1515 = vld [vmem:[%s1389 + $0x1c] sm:$0x1]
        %v1516 = vld [vmem:[%s1389 + $0x20] sm:$0xf]
        %v1517 = vld [vmem:[%s1389 + $0x24] sm:$0x1]
        %v1518 = vld [vmem:[%s1389 + $0x28] sm:$0xf]
        %v1519 = vld [vmem:[%s1389 + $0x2c] sm:$0x1]
        %v1520 = vld [vmem:[%s1389 + $0x30] sm:$0xf]
        %v1521 = vld [vmem:[%s1389 + $0x34] sm:$0x1]
        %v1522 = vld [vmem:[%s1389 + $0x38] sm:$0xf]
        %v1523 = vld [vmem:[%s1389 + $0x3c] sm:$0x1]
        %v1525 = vshrl.u32 %v1508, 16
        %v1527 = vrot.slane %v1525, 4
        %v1528 = vshll.u32 %v1508, 16
        %v1530 = vrot.slane %v1528, 5
        %v1531 = vor.u32 %v1527, %v1530
        %v1532 = vrot.slane %v1531, 4
        %v1534 = vshll.u32 %v1509, 16
        %v1536 = vrot.slane %v1534, 5
        %v1537 = vsel %vm406, %v1532, %v1536
        %v1539 = vshrl.u32 %v1510, 16
        %v1541 = vrot.slane %v1539, 4
        %v1542 = vshll.u32 %v1510, 16
        %v1544 = vrot.slane %v1542, 5
        %v1545 = vor.u32 %v1541, %v1544
        %v1546 = vrot.slane %v1545, 4
        %v1548 = vshll.u32 %v1511, 16
        %v1550 = vrot.slane %v1548, 5
        %v1551 = vsel %vm406, %v1546, %v1550
        %v1553 = vshrl.u32 %v1512, 16
        %v1555 = vrot.slane %v1553, 4
        %v1556 = vshll.u32 %v1512, 16
        %v1558 = vrot.slane %v1556, 5
        %v1559 = vor.u32 %v1555, %v1558
        %v1560 = vrot.slane %v1559, 4
        %v1562 = vshll.u32 %v1513, 16
        %v1564 = vrot.slane %v1562, 5
        %v1565 = vsel %vm406, %v1560, %v1564
        %v1567 = vshrl.u32 %v1514, 16
        %v1569 = vrot.slane %v1567, 4
        %v1570 = vshll.u32 %v1514, 16
        %v1572 = vrot.slane %v1570, 5
        %v1573 = vor.u32 %v1569, %v1572
        %v1574 = vrot.slane %v1573, 4
        %v1576 = vshll.u32 %v1515, 16
        %v1578 = vrot.slane %v1576, 5
        %v1579 = vsel %vm406, %v1574, %v1578
        %v1581 = vshrl.u32 %v1516, 16
        %v1583 = vrot.slane %v1581, 4
        %v1584 = vshll.u32 %v1516, 16
        %v1586 = vrot.slane %v1584, 5
        %v1587 = vor.u32 %v1583, %v1586
        %v1588 = vrot.slane %v1587, 4
        %v1590 = vshll.u32 %v1517, 16
        %v1592 = vrot.slane %v1590, 5
        %v1593 = vsel %vm406, %v1588, %v1592
        %v1595 = vshrl.u32 %v1518, 16
        %v1597 = vrot.slane %v1595, 4
        %v1598 = vshll.u32 %v1518, 16
        %v1600 = vrot.slane %v1598, 5
        %v1601 = vor.u32 %v1597, %v1600
        %v1602 = vrot.slane %v1601, 4
        %v1604 = vshll.u32 %v1519, 16
        %v1606 = vrot.slane %v1604, 5
        %v1607 = vsel %vm406, %v1602, %v1606
        %v1609 = vshrl.u32 %v1520, 16
        %v1611 = vrot.slane %v1609, 4
        %v1612 = vshll.u32 %v1520, 16
        %v1614 = vrot.slane %v1612, 5
        %v1615 = vor.u32 %v1611, %v1614
        %v1616 = vrot.slane %v1615, 4
        %v1618 = vshll.u32 %v1521, 16
        %v1620 = vrot.slane %v1618, 5
        %v1621 = vsel %vm406, %v1616, %v1620
        %v1623 = vshrl.u32 %v1522, 16
        %v1625 = vrot.slane %v1623, 4
        %v1626 = vshll.u32 %v1522, 16
        %v1628 = vrot.slane %v1626, 5
        %v1629 = vor.u32 %v1625, %v1628
        %v1630 = vrot.slane %v1629, 4
        %v1632 = vshll.u32 %v1523, 16
        %v1634 = vrot.slane %v1632, 5
        %v1635 = vsel %vm406, %v1630, %v1634
        %s1636 = scalar_lea.vmem [#allocation5], 28
        %v1637 = vld [vmem:[%s1636] sm:$0xf]
        %v1638 = vunpack.c.l.b16 %v1537
        %v1639 = vunpack.c.l.b16 %v1551
        %v1640 = vunpack.c.l.b16 %v1565
        %v1641 = vunpack.c.l.b16 %v1579
        %v1642 = vunpack.c.l.b16 %v1593
        %v1643 = vunpack.c.l.b16 %v1607
        %v1644 = vunpack.c.l.b16 %v1621
        %v1645 = vunpack.c.l.b16 %v1635
        %v1646 = vpack.c.b16 %v1639, %v1638
        %v1647 = vpack.c.b16 %v1641, %v1640
        %v1648 = vpack.c.b16 %v1643, %v1642
        %v1649 = vpack.c.b16 %v1645, %v1644
        %v1651 = vsel %vm533, %v1646, 0
        %v1654 = vsel %vm533, %v1647, 0
        %v1657 = vsel %vm533, %v1648, 0
        %v1660 = vsel %vm533, %v1649, 0
        %v1663 = vsel %vm546, %v1637, 0
        %1665 = vmatprep.subr.bf16.mxu0 0
        %1666 = vmatpush1.bf16.msra.mxu0 %v1663
        %1667 = vmatprep.subr.bf16.mxu0 0
        %1668 = vmatpush1.bf16.msra.mxu0 0
        %1669 = vmatprep.subr.bf16.mxu0 0
        %1670 = vmatpush1.bf16.msra.mxu0 0
        %1671 = vmatprep.subr.bf16.mxu0 0
        %1672 = vmatpush1.bf16.msra.mxu0 0
        %1673 = vmatprep.subr.bf16.mxu0 0
        %1674 = vmatpush1.bf16.msra.mxu0 0
        %1675 = vmatprep.subr.bf16.mxu0 0
        %1676 = vmatpush1.bf16.msra.mxu0 0
        %1677 = vmatprep.subr.bf16.mxu0 0
        %1678 = vmatpush1.bf16.msra.mxu0 0
        %1679 = vmatprep.subr.bf16.mxu0 0
        %1680 = vmatpush1.bf16.msra.mxu0 0
        %1681 = vmatprep.subr.bf16.mxu0 0
        %1682 = vmatpush1.bf16.msra.mxu0 0
        %1683 = vmatprep.subr.bf16.mxu0 0
        %1684 = vmatpush1.bf16.msra.mxu0 0
        %1685 = vmatprep.subr.bf16.mxu0 0
        %1686 = vmatpush1.bf16.msra.mxu0 0
        %1687 = vmatprep.subr.bf16.mxu0 0
        %1688 = vmatpush1.bf16.msra.mxu0 0
        %1689 = vmatprep.subr.bf16.mxu0 0
        %1690 = vmatpush1.bf16.msra.mxu0 0
        %1691 = vmatprep.subr.bf16.mxu0 0
        %1692 = vmatpush1.bf16.msra.mxu0 0
        %1693 = vmatprep.subr.bf16.mxu0 0
        %1694 = vmatpush1.bf16.msra.mxu0 0
        %1695 = vmatprep.subr.bf16.mxu0 0
        %1696 = vmatpush1.bf16.msra.mxu0 0
        %1697 = vmatprep.mubr.bf16.mxu0 0
        %1698 = vmatmul.mubr.bf16.gmra.mrb[0].mxu0 %v1651
        %v1699 = vpop.f32.mrb[0].mxu0
        %v1700 = vadd.f32 0.0, %v1699
        %v1701 = vpop.f32.mrb[0].mxu0
        %v1702 = vpop.f32.mrb[0].mxu0
        %v1703 = vadd.f32 0.0, %v1702
        %v1704 = vpop.f32.mrb[0].mxu0
        %1705 = vmatprep.mubr.bf16.mxu0 0
        %1706 = vmatmul.mubr.bf16.gmra.mrb[0].mxu0 %v1654
        %v1707 = vpop.f32.mrb[0].mxu0
        %v1708 = vadd.f32 0.0, %v1707
        %v1709 = vpop.f32.mrb[0].mxu0
        %v1710 = vpop.f32.mrb[0].mxu0
        %v1711 = vadd.f32 0.0, %v1710
        %v1712 = vpop.f32.mrb[0].mxu0
        %1713 = vmatprep.mubr.bf16.mxu0 0
        %1714 = vmatmul.mubr.bf16.gmra.mrb[0].mxu0 %v1657
        %v1715 = vpop.f32.mrb[0].mxu0
        %v1716 = vadd.f32 0.0, %v1715
        %v1717 = vpop.f32.mrb[0].mxu0
        %v1718 = vpop.f32.mrb[0].mxu0
        %v1719 = vadd.f32 0.0, %v1718
        %v1720 = vpop.f32.mrb[0].mxu0
        %1721 = vmatprep.mubr.bf16.mxu0 0
        %1722 = vmatmul.mubr.bf16.gmra.mrb[0].mxu0 %v1660
        %v1723 = vpop.f32.mrb[0].mxu0
        %v1724 = vadd.f32 0.0, %v1723
        %v1725 = vpop.f32.mrb[0].mxu0
        %v1726 = vpop.f32.mrb[0].mxu0
        %v1727 = vadd.f32 0.0, %v1726
        %v1728 = vpop.f32.mrb[0].mxu0
        %1729 = vdwg.mxu0
        %v1730 = vadd.f32 %v1500, %v1700
        %v1731 = vadd.f32 %v1501, %v1703
        %v1732 = vadd.f32 %v1502, %v1708
        %v1733 = vadd.f32 %v1503, %v1711
        %v1734 = vadd.f32 %v1504, %v1716
        %v1735 = vadd.f32 %v1505, %v1719
        %v1736 = vadd.f32 %v1506, %v1724
        %v1737 = vadd.f32 %v1507, %v1727
        %v1738 = vld [vmem:[%s1389] sm:$0xe]
        %v1739 = vld [vmem:[%s1389 + $0x8] sm:$0xe]
        %v1740 = vld [vmem:[%s1389 + $0x10] sm:$0xe]
        %v1741 = vld [vmem:[%s1389 + $0x18] sm:$0xe]
        %v1742 = vld [vmem:[%s1389 + $0x20] sm:$0xe]
        %v1743 = vld [vmem:[%s1389 + $0x28] sm:$0xe]
        %v1744 = vld [vmem:[%s1389 + $0x30] sm:$0xe]
        %v1745 = vld [vmem:[%s1389 + $0x38] sm:$0xe]
        %v1762 = vrot.slane %v1738, 5
        %v1763 = vrot.slane %v1762, 4
        %v1764 = vrot.slane %v1509, 5
        %v1765 = vsel %vm741, %v1763, %v1764
        %v1766 = vrot.slane %v1739, 5
        %v1767 = vrot.slane %v1766, 4
        %v1768 = vrot.slane %v1511, 5
        %v1769 = vsel %vm741, %v1767, %v1768
        %v1770 = vrot.slane %v1740, 5
        %v1771 = vrot.slane %v1770, 4
        %v1772 = vrot.slane %v1513, 5
        %v1773 = vsel %vm741, %v1771, %v1772
        %v1774 = vrot.slane %v1741, 5
        %v1775 = vrot.slane %v1774, 4
        %v1776 = vrot.slane %v1515, 5
        %v1777 = vsel %vm741, %v1775, %v1776
        %v1778 = vrot.slane %v1742, 5
        %v1779 = vrot.slane %v1778, 4
        %v1780 = vrot.slane %v1517, 5
        %v1781 = vsel %vm741, %v1779, %v1780
        %v1782 = vrot.slane %v1743, 5
        %v1783 = vrot.slane %v1782, 4
        %v1784 = vrot.slane %v1519, 5
        %v1785 = vsel %vm741, %v1783, %v1784
        %v1786 = vrot.slane %v1744, 5
        %v1787 = vrot.slane %v1786, 4
        %v1788 = vrot.slane %v1521, 5
        %v1789 = vsel %vm741, %v1787, %v1788
        %v1790 = vrot.slane %v1745, 5
        %v1791 = vrot.slane %v1790, 4
        %v1792 = vrot.slane %v1523, 5
        %v1793 = vsel %vm741, %v1791, %v1792
        %s1794 = scalar_lea.vmem [#allocation5], 32
        %v1795 = vld [vmem:[%s1794] sm:$0xf]
        %v1796 = vunpack.c.l.b16 %v1765
        %v1797 = vunpack.c.l.b16 %v1769
        %v1798 = vunpack.c.l.b16 %v1773
        %v1799 = vunpack.c.l.b16 %v1777
        %v1800 = vunpack.c.l.b16 %v1781
        %v1801 = vunpack.c.l.b16 %v1785
        %v1802 = vunpack.c.l.b16 %v1789
        %v1803 = vunpack.c.l.b16 %v1793
        %v1804 = vpack.c.b16 %v1797, %v1796
        %v1805 = vpack.c.b16 %v1799, %v1798
        %v1806 = vpack.c.b16 %v1801, %v1800
        %v1807 = vpack.c.b16 %v1803, %v1802
        %v1809 = vsel %vm533, %v1804, 0
        %v1812 = vsel %vm533, %v1805, 0
        %v1815 = vsel %vm533, %v1806, 0
        %v1818 = vsel %vm533, %v1807, 0
        %v1821 = vsel %vm546, %v1795, 0
        %1823 = vmatprep.subr.bf16.mxu0 0
        %1824 = vmatpush1.bf16.msra.mxu0 %v1821
        %1825 = vmatprep.subr.bf16.mxu0 0
        %1826 = vmatpush1.bf16.msra.mxu0 0
        %1827 = vmatprep.subr.bf16.mxu0 0
        %1828 = vmatpush1.bf16.msra.mxu0 0
        %1829 = vmatprep.subr.bf16.mxu0 0
        %1830 = vmatpush1.bf16.msra.mxu0 0
        %1831 = vmatprep.subr.bf16.mxu0 0
        %1832 = vmatpush1.bf16.msra.mxu0 0
        %1833 = vmatprep.subr.bf16.mxu0 0
        %1834 = vmatpush1.bf16.msra.mxu0 0
        %1835 = vmatprep.subr.bf16.mxu0 0
        %1836 = vmatpush1.bf16.msra.mxu0 0
        %1837 = vmatprep.subr.bf16.mxu0 0
        %1838 = vmatpush1.bf16.msra.mxu0 0
        %1839 = vmatprep.subr.bf16.mxu0 0
        %1840 = vmatpush1.bf16.msra.mxu0 0
        %1841 = vmatprep.subr.bf16.mxu0 0
        %1842 = vmatpush1.bf16.msra.mxu0 0
        %1843 = vmatprep.subr.bf16.mxu0 0
        %1844 = vmatpush1.bf16.msra.mxu0 0
        %1845 = vmatprep.subr.bf16.mxu0 0
        %1846 = vmatpush1.bf16.msra.mxu0 0
        %1847 = vmatprep.subr.bf16.mxu0 0
        %1848 = vmatpush1.bf16.msra.mxu0 0
        %1849 = vmatprep.subr.bf16.mxu0 0
        %1850 = vmatpush1.bf16.msra.mxu0 0
        %1851 = vmatprep.subr.bf16.mxu0 0
        %1852 = vmatpush1.bf16.msra.mxu0 0
        %1853 = vmatprep.subr.bf16.mxu0 0
        %1854 = vmatpush1.bf16.msra.mxu0 0
        %1855 = vmatprep.mubr.bf16.mxu0 0
        %1856 = vmatmul.mubr.bf16.gmra.mrb[0].mxu0 %v1809
        %v1857 = vpop.f32.mrb[0].mxu0
        %v1858 = vadd.f32 0.0, %v1857
        %v1859 = vpop.f32.mrb[0].mxu0
        %v1860 = vpop.f32.mrb[0].mxu0
        %v1861 = vadd.f32 0.0, %v1860
        %v1862 = vpop.f32.mrb[0].mxu0
        %1863 = vmatprep.mubr.bf16.mxu0 0
        %1864 = vmatmul.mubr.bf16.gmra.mrb[0].mxu0 %v1812
        %v1865 = vpop.f32.mrb[0].mxu0
        %v1866 = vadd.f32 0.0, %v1865
        %v1867 = vpop.f32.mrb[0].mxu0
        %v1868 = vpop.f32.mrb[0].mxu0
        %v1869 = vadd.f32 0.0, %v1868
        %v1870 = vpop.f32.mrb[0].mxu0
        %1871 = vmatprep.mubr.bf16.mxu0 0
        %1872 = vmatmul.mubr.bf16.gmra.mrb[0].mxu0 %v1815
        %v1873 = vpop.f32.mrb[0].mxu0
        %v1874 = vadd.f32 0.0, %v1873
        %v1875 = vpop.f32.mrb[0].mxu0
        %v1876 = vpop.f32.mrb[0].mxu0
        %v1877 = vadd.f32 0.0, %v1876
        %v1878 = vpop.f32.mrb[0].mxu0
        %1879 = vmatprep.mubr.bf16.mxu0 0
        %1880 = vmatmul.mubr.bf16.gmra.mrb[0].mxu0 %v1818
        %v1881 = vpop.f32.mrb[0].mxu0
        %v1882 = vadd.f32 0.0, %v1881
        %v1883 = vpop.f32.mrb[0].mxu0
        %v1884 = vpop.f32.mrb[0].mxu0
        %v1885 = vadd.f32 0.0, %v1884
        %v1886 = vpop.f32.mrb[0].mxu0
        %1887 = vdwg.mxu0
        %v1888 = vadd.f32 %v1730, %v1858
        %v1889 = vadd.f32 %v1731, %v1861
        %v1890 = vadd.f32 %v1732, %v1866
        %v1891 = vadd.f32 %v1733, %v1869
        %v1892 = vadd.f32 %v1734, %v1874
        %v1893 = vadd.f32 %v1735, %v1877
        %v1894 = vadd.f32 %v1736, %v1882
        %v1895 = vadd.f32 %v1737, %v1885
        %v1896 = vld [vmem:[#allocation7] sm:$0x1]
        %v1898 = vlaneseq
        %v1899 = vshrl.u32 %v1898, 7
        %v1900 = vsub.s32 0, %v1899
        %v1901 = vrot.slane %v1896, %v1900
        %v1903 = vadd.f32 %v1888, %v1901
        %v1904 = vadd.f32 %v1889, %v1901
        %v1905 = vadd.f32 %v1890, %v1901
        %v1906 = vadd.f32 %v1891, %v1901
        %v1907 = vadd.f32 %v1892, %v1901
        %v1908 = vadd.f32 %v1893, %v1901
        %v1909 = vadd.f32 %v1894, %v1901
        %v1910 = vadd.f32 %v1895, %v1901
        %v1911 = vld [vmem:[%s338] sm:$0xf]
        %v1912 = vld [vmem:[%s338 + $0x4] sm:$0xf]
        %v1913 = vld [vmem:[%s338 + $0x8] sm:$0xf]
        %v1914 = vld [vmem:[%s338 + $0xc] sm:$0xf]
        %v1915 = vld [vmem:[%s338 + $0x10] sm:$0xf]
        %v1916 = vld [vmem:[%s338 + $0x14] sm:$0xf]
        %v1917 = vld [vmem:[%s338 + $0x18] sm:$0xf]
        %v1918 = vld [vmem:[%s338 + $0x1c] sm:$0xf]
        %v1919 = vld [vmem:[#allocation10] sm:$0xf]
        %v1928 = vunpack.c.l.b16 %v1911
        %v1929 = vunpack.c.l.b16 %v1912
        %v1930 = vunpack.c.l.b16 %v1913
        %v1931 = vunpack.c.l.b16 %v1914
        %v1932 = vunpack.c.l.b16 %v1915
        %v1933 = vunpack.c.l.b16 %v1916
        %v1934 = vunpack.c.l.b16 %v1917
        %v1935 = vunpack.c.l.b16 %v1918
        %v1936 = vpack.c.b16 %v1929, %v1928
        %v1937 = vpack.c.b16 %v1931, %v1930
        %v1938 = vpack.c.b16 %v1933, %v1932
        %v1939 = vpack.c.b16 %v1935, %v1934
        %v1941 = vsel %vm533, %v1936, 0
        %v1944 = vsel %vm533, %v1937, 0
        %v1947 = vsel %vm533, %v1938, 0
        %v1950 = vsel %vm533, %v1939, 0
        %v1953 = vsel %vm546, %v1919, 0
        %1955 = vmatprep.subr.bf16.mxu0 0
        %1956 = vmatpush1.bf16.msra.mxu0 %v1953
        %1957 = vmatprep.subr.bf16.mxu0 0
        %1958 = vmatpush1.bf16.msra.mxu0 0
        %1959 = vmatprep.subr.bf16.mxu0 0
        %1960 = vmatpush1.bf16.msra.mxu0 0
        %1961 = vmatprep.subr.bf16.mxu0 0
        %1962 = vmatpush1.bf16.msra.mxu0 0
        %1963 = vmatprep.subr.bf16.mxu0 0
        %1964 = vmatpush1.bf16.msra.mxu0 0
        %1965 = vmatprep.subr.bf16.mxu0 0
        %1966 = vmatpush1.bf16.msra.mxu0 0
        %1967 = vmatprep.subr.bf16.mxu0 0
        %1968 = vmatpush1.bf16.msra.mxu0 0
        %1969 = vmatprep.subr.bf16.mxu0 0
        %1970 = vmatpush1.bf16.msra.mxu0 0
        %1971 = vmatprep.subr.bf16.mxu0 0
        %1972 = vmatpush1.bf16.msra.mxu0 0
        %1973 = vmatprep.subr.bf16.mxu0 0
        %1974 = vmatpush1.bf16.msra.mxu0 0
        %1975 = vmatprep.subr.bf16.mxu0 0
        %1976 = vmatpush1.bf16.msra.mxu0 0
        %1977 = vmatprep.subr.bf16.mxu0 0
        %1978 = vmatpush1.bf16.msra.mxu0 0
        %1979 = vmatprep.subr.bf16.mxu0 0
        %1980 = vmatpush1.bf16.msra.mxu0 0
        %1981 = vmatprep.subr.bf16.mxu0 0
        %1982 = vmatpush1.bf16.msra.mxu0 0
        %1983 = vmatprep.subr.bf16.mxu0 0
        %1984 = vmatpush1.bf16.msra.mxu0 0
        %1985 = vmatprep.subr.bf16.mxu0 0
        %1986 = vmatpush1.bf16.msra.mxu0 0
        %1987 = vmatprep.mubr.bf16.mxu0 0
        %1988 = vmatmul.mubr.bf16.gmra.mrb[0].mxu0 %v1941
        %v1989 = vpop.f32.mrb[0].mxu0
        %v1990 = vadd.f32 0.0, %v1989
        %v1991 = vpop.f32.mrb[0].mxu0
        %v1992 = vpop.f32.mrb[0].mxu0
        %v1993 = vadd.f32 0.0, %v1992
        %v1994 = vpop.f32.mrb[0].mxu0
        %1995 = vmatprep.mubr.bf16.mxu0 0
        %1996 = vmatmul.mubr.bf16.gmra.mrb[0].mxu0 %v1944
        %v1997 = vpop.f32.mrb[0].mxu0
        %v1998 = vadd.f32 0.0, %v1997
        %v1999 = vpop.f32.mrb[0].mxu0
        %v2000 = vpop.f32.mrb[0].mxu0
        %v2001 = vadd.f32 0.0, %v2000
        %v2002 = vpop.f32.mrb[0].mxu0
        %2003 = vmatprep.mubr.bf16.mxu0 0
        %2004 = vmatmul.mubr.bf16.gmra.mrb[0].mxu0 %v1947
        %v2005 = vpop.f32.mrb[0].mxu0
        %v2006 = vadd.f32 0.0, %v2005
        %v2007 = vpop.f32.mrb[0].mxu0
        %v2008 = vpop.f32.mrb[0].mxu0
        %v2009 = vadd.f32 0.0, %v2008
        %v2010 = vpop.f32.mrb[0].mxu0
        %2011 = vmatprep.mubr.bf16.mxu0 0
        %2012 = vmatmul.mubr.bf16.gmra.mrb[0].mxu0 %v1950
        %v2013 = vpop.f32.mrb[0].mxu0
        %v2014 = vadd.f32 0.0, %v2013
        %v2015 = vpop.f32.mrb[0].mxu0
        %v2016 = vpop.f32.mrb[0].mxu0
        %v2017 = vadd.f32 0.0, %v2016
        %v2018 = vpop.f32.mrb[0].mxu0
        %2019 = vdwg.mxu0
        %v2020 = vadd.f32 %v1903, %v1990
        %v2021 = vadd.f32 %v1904, %v1993
        %v2022 = vadd.f32 %v1905, %v1998
        %v2023 = vadd.f32 %v1906, %v2001
        %v2024 = vadd.f32 %v1907, %v2006
        %v2025 = vadd.f32 %v1908, %v2009
        %v2026 = vadd.f32 %v1909, %v2014
        %v2027 = vadd.f32 %v1910, %v2017
        %v2028 = vld [vmem:[#allocation11] sm:$0x1]
        %v2030 = vlaneseq
        %v2031 = vshrl.u32 %v2030, 7
        %v2032 = vsub.s32 0, %v2031
        %v2033 = vrot.slane %v2028, %v2032
        %v2035 = vadd.f32 %v2020, %v2033
        %v2036 = vadd.f32 %v2021, %v2033
        %v2037 = vadd.f32 %v2022, %v2033
        %v2038 = vadd.f32 %v2023, %v2033
        %v2039 = vadd.f32 %v2024, %v2033
        %v2040 = vadd.f32 %v2025, %v2033
        %v2041 = vadd.f32 %v2026, %v2033
        %v2042 = vadd.f32 %v2027, %v2033
        %v2043 = vmax.f32 %v2035, 0.0
        %v2044 = vmax.f32 %v2036, 0.0
        %v2045 = vmax.f32 %v2037, 0.0
        %v2046 = vmax.f32 %v2038, 0.0
        %v2047 = vmax.f32 %v2039, 0.0
        %v2048 = vmax.f32 %v2040, 0.0
        %v2049 = vmax.f32 %v2041, 0.0
        %v2050 = vmax.f32 %v2042, 0.0
        %2051 = vst.msk [vmem:[%s379] sm:$0xff] %vm533, %v2043
        %2052 = vst.msk [vmem:[%s379 + $0x8] sm:$0xff] %vm533, %v2044
        %2053 = vst.msk [vmem:[%s379 + $0x10] sm:$0xff] %vm533, %v2045
        %2054 = vst.msk [vmem:[%s379 + $0x18] sm:$0xff] %vm533, %v2046
        %2055 = vst.msk [vmem:[%s379 + $0x20] sm:$0xff] %vm533, %v2047
        %2056 = vst.msk [vmem:[%s379 + $0x28] sm:$0xff] %vm533, %v2048
        %2057 = vst.msk [vmem:[%s379 + $0x30] sm:$0xff] %vm533, %v2049
        %2058 = vst.msk [vmem:[%s379 + $0x38] sm:$0xff] %vm533, %v2050
        %s2059 = sand.u32 %s188, 1
        %s2060 = scalar_lea.sflag [#allocation4], %s2059
        %s2061 = sand.u32 %s188, 1
        %s2062 = smul.addr %s2061, 64
        %s2063 = scalar_lea.vmem [#allocation13], %s2062
        // Predicated region
        $region69: #{_lambda_.3} parent=43 // pred_check
          %p2064 = pneg %p198
        $region70: #{_lambda_.3} parent=43 // pred_check_branch
          %2066 = sbr.rel (%p2064) target = $region72
        $region71: #{_lambda_.3} parent=43 // pred_region
          %s2067 = smul.u32 8, %s33
          %s2069 = ssub.s32 1024, 1024
          %2070 = vsyncadd %s2060, %s2069
          %s2071 = smul.addr %s32, 8
          %s2072 = sadd.s32 %s2067, %s2071
          %s2073 = smul.addr %s2072, 128
          %s2074 = scalar_lea.hbm %s6, %s2073
          %s2075 = sshll.u32 %s2063, 4
          %s2076 = int_to_ptr.vmem [resolvable:$true] %s2075
          %2081 = dma.vmem_to_hbm [thread:$0]  %s2076, 1024, %s2074, %s2060, 128, 128, 8
        $region72: #{_lambda_.3} parent=43 // pred_fallthru
          _
      $region44: #{_lambda_.3} parent=5 // pred_fallthru
        _
      %p2082 = scmp.le.s32.totalorder 2, %s23
      // Predicated region
      $region73: #{_lambda_.3} parent=5 // pred_check
        %p2083 = pneg %p2082
      $region74: #{_lambda_.3} parent=5 // pred_check_branch
        %2085 = sbr.rel (%p2083) target = $region76
      $region75: #{_lambda_.3} parent=5 // pred_region
        %s2086 = ssub.s32 %s23, 2
        // Predicated region
        $region77: #{_lambda_.3} parent=75 // pred_check
          %p2087 = pneg %p204
        $region78: #{_lambda_.3} parent=75 // pred_check_branch
          %2089 = sbr.rel (%p2087) target = $region80
        $region79: #{_lambda_.3} parent=75 // pred_region
          %s2090 = sand.u32 %s189, 1
          %s2091 = scalar_lea.sflag [#allocation4], %s2090
          %s2092 = sand.u32 %s189, 1
          %s2093 = smul.addr %s2092, 64
          %s2094 = scalar_lea.vmem [#allocation13], %s2093
          %2095 = dma.done %s2091, 1024
        $region80: #{_lambda_.3} parent=75 // pred_fallthru
          _
      $region76: #{_lambda_.3} parent=5 // pred_fallthru
        _
    $region6: #{_lambda_.3} parent=1 // loop_footer
      %s27 = sadd.s32 1, %s23
    $region7: #{_lambda_.3} parent=1 // loop_footer_branch
      %22 = sbr.rel target = $region3
    $region8: #{_lambda_.3} parent=1 // loop_exit
      _
    %2096 = vsyncpa [#allocation3], 1
    %s2097 = scalar_lea.sflag [#allocation3], 1
    %2098 = vsyncpa %s2097, 1
    %2099 = vsyncpa [#allocation6], 1
    %2100 = vsyncpa [#allocation9], 1
    %s2101 = scalar_lea.sflag [#allocation9], 1
    %2102 = vsyncpa %s2101, 1
    %2103 = vsyncpa [#allocation12], 1
    %2104 = vsyncpa [#allocation4], 1
    %s2105 = scalar_lea.sflag [#allocation4], 1
    %2106 = vsyncpa %s2105, 1

</llo_original>
